<compile_context>
chip_gen: v5e
topology: v5e:2x2
jax: 0.10.0
libtpu: 0.0.40
codegen_flags: <defaults>
</compile_context>

<pallas_src>
import math

import jax
import jax.numpy as jnp
from jax.experimental import pallas as pl
from jax.experimental.pallas import tpu as pltpu

# ----------------------------- config (tiny BERT, matches previous version) --
VOCAB_SIZE = 100
TYPE_VOCAB_SIZE = 2
MAX_POS = 64
HIDDEN = 32          # bert_output_dim
NUM_HEADS = 4
HEAD_DIM = HIDDEN // NUM_HEADS
INTERMEDIATE = 64
NUM_LAYERS = 2
OUTPUT_DIM = 16      # BertEncoder(output_dim=...)
ADD_LINEAR = True    # exercise the pooler + additional_linear path
LN_EPS = 1e-12

# padded (lane-dense) sizes — all multiples of 128
HP = 128             # padded hidden
DP = 128             # padded per-head dim
IP = 128             # padded FFN intermediate
PP = 128             # padded output dim
NHDP = NUM_HEADS * DP  # 512: concatenated per-head lane slab


# ----------------------------- fused encoder kernel --------------------------
def _encoder_kernel(emb_ref, maskb_ref,
                    eln_g_ref, eln_b_ref,
                    w_q_ref, b_q_ref, w_k_ref, b_k_ref, w_v_ref, b_v_ref,
                    w_o_ref, b_o_ref,
                    w_i_ref, b_i_ref, w_f_ref, b_f_ref,
                    ln1_g_ref, ln1_b_ref, ln2_g_ref, ln2_b_ref,
                    pool_w_ref, pool_b_ref, add_w_ref, add_b_ref,
                    hidden_ref, result_ref):
    f32 = jnp.float32
    bf16 = jnp.bfloat16

    # lane mask selecting the real hidden features (hoisted once, reused by LN)
    feat_mask = (jax.lax.broadcasted_iota(jnp.int32, (1, HP), 1) < HIDDEN).astype(f32)
    inv_h = 1.0 / HIDDEN

    def layer_norm(x, g, b):
        # LN statistics over the real HIDDEN lanes only; padded lanes stay 0
        xm = x * feat_mask
        mean = jnp.sum(xm, axis=-1, keepdims=True) * inv_h
        centered = (x - mean) * feat_mask
        var = jnp.sum(centered * centered, axis=-1, keepdims=True) * inv_h
        return centered * jax.lax.rsqrt(var + LN_EPS) * g + b

    def mm(x_f32, w_bf16):                       # bf16 MXU operands, f32 accumulate
        return jnp.dot(x_f32.astype(bf16), w_bf16, preferred_element_type=f32)

    # --- embedding LayerNorm (dropout = identity in eval mode) ---------------
    x = layer_norm(emb_ref[...], eln_g_ref[...], eln_b_ref[...])

    mask_bias = maskb_ref[0]                     # [1, S] additive key mask
    scale = 1.0 / math.sqrt(HEAD_DIM)

    for li in range(NUM_LAYERS):                 # static unroll (NUM_LAYERS = 2)
        x_bf = x.astype(bf16)

        # fused QKV projections: one MXU dot per stream ([S,HP] x [HP,NH*DP])
        q_all = jnp.dot(x_bf, w_q_ref[li], preferred_element_type=f32) + b_q_ref[li]
        k_all = jnp.dot(x_bf, w_k_ref[li], preferred_element_type=f32) + b_k_ref[li]
        v_all = jnp.dot(x_bf, w_v_ref[li], preferred_element_type=f32) + b_v_ref[li]

        ctx = []
        for h in range(NUM_HEADS):               # static unroll (NUM_HEADS = 4)
            c = h * DP                           # lane-aligned per-head slices
            q_h = q_all[:, c:c + DP]
            k_h = k_all[:, c:c + DP]
            v_h = v_all[:, c:c + DP]

            # scores over the zero-padded head dim; softmax in f32
            s = jax.lax.dot_general(
                q_h.astype(bf16), k_h.astype(bf16),
                dimension_numbers=(((1,), (1,)), ((), ())),
                preferred_element_type=f32) * scale + mask_bias
            s_max = jnp.max(s, axis=-1, keepdims=True)
            p = jnp.exp(s - s_max)
            p = p * pl.reciprocal(jnp.sum(p, axis=-1, keepdims=True), approx=True)

            ctx.append(jnp.dot(p.astype(bf16), v_h.astype(bf16),
                               preferred_element_type=f32))

        # fused attention output projection: [S, NH*DP] x [NH*DP, HP]
        ctx_all = jnp.concatenate(ctx, axis=-1)
        attn = mm(ctx_all, w_o_ref[li]) + b_o_ref[li]
        x = layer_norm(attn + x, ln1_g_ref[li], ln1_b_ref[li])

        inter = mm(x, w_i_ref[li]) + b_i_ref[li]
        # TODO(synk): HF BERT 'gelu' is erf-based; tanh approximation used (~1e-3 abs).
        inter = 0.5 * inter * (1.0 + jnp.tanh(0.7978845608028654 *
                                              (inter + 0.044715 * inter * inter * inter)))
        ffn = mm(inter, w_f_ref[li]) + b_f_ref[li]
        x = layer_norm(ffn + x, ln2_g_ref[li], ln2_b_ref[li])

    hidden_ref[...] = x                                          # final hidden states
    pooled = jnp.tanh(mm(x, pool_w_ref[...]) + pool_b_ref[...])  # BertPooler
    # dropout(0.1) before additional_linear is identity in eval mode
    result_ref[...] = mm(pooled, add_w_ref[...]) + add_b_ref[...]


# ----------------------------- parameter init (zero-padded, bf16 weights) ----
def _pad_to(x, shape):
    out = jnp.zeros(shape, x.dtype)
    return out.at[tuple(slice(0, d) for d in x.shape)].set(x)


def init_params(key):
    keys = jax.random.split(key, 5 + NUM_LAYERS)

    def dense(k, fan_in, fan_out):
        return (0.02 * jax.random.normal(k, (fan_in, fan_out), jnp.float32),
                jnp.zeros((fan_out,), jnp.float32))

    params = {
        "word_emb": _pad_to(0.02 * jax.random.normal(keys[0], (VOCAB_SIZE, HIDDEN), jnp.float32),
                            (VOCAB_SIZE, HP)),
        "pos_emb": _pad_to(0.02 * jax.random.normal(keys[1], (MAX_POS, HIDDEN), jnp.float32),
                           (MAX_POS, HP)),
        "type_emb": _pad_to(0.02 * jax.random.normal(keys[2], (TYPE_VOCAB_SIZE, HIDDEN), jnp.float32),
                            (TYPE_VOCAB_SIZE, HP)),
        "emb_ln_g": _pad_to(jnp.ones((1, HIDDEN), jnp.float32), (1, HP)),
        "emb_ln_b": jnp.zeros((1, HP), jnp.float32),
    }

    ones_h = _pad_to(jnp.ones((1, HIDDEN), jnp.float32), (1, HP))
    zeros_h = jnp.zeros((1, HP), jnp.float32)

    def head_cols(W, bvec):
        # [HIDDEN, HIDDEN] -> [HP, NH*DP]: head h's real columns land in lanes
        # [h*DP, h*DP + HEAD_DIM); everything else is exactly zero.
        wblocks = [_pad_to(W[:, h * HEAD_DIM:(h + 1) * HEAD_DIM], (HP, DP))
                   for h in range(NUM_HEADS)]
        bblocks = [_pad_to(bvec[h * HEAD_DIM:(h + 1) * HEAD_DIM], (DP,))
                   for h in range(NUM_HEADS)]
        return jnp.concatenate(wblocks, axis=1), jnp.concatenate(bblocks)[None, :]

    w_q, b_q, w_k, b_k, w_v, b_v = [], [], [], [], [], []
    w_o, b_o, w_i, b_i, w_f, b_f = [], [], [], [], [], []
    ln1_g, ln1_b, ln2_g, ln2_b = [], [], [], []
    for li in range(NUM_LAYERS):
        lk = jax.random.split(keys[3 + li], 6)
        wq, bq = dense(lk[0], HIDDEN, HIDDEN)
        wk, bk = dense(lk[1], HIDDEN, HIDDEN)
        wv, bv = dense(lk[2], HIDDEN, HIDDEN)
        wo, bo = dense(lk[3], HIDDEN, HIDDEN)
        wi, bi = dense(lk[4], HIDDEN, INTERMEDIATE)
        wf, bfv = dense(lk[5], INTERMEDIATE, HIDDEN)

        wqc, bqc = head_cols(wq, bq)
        wkc, bkc = head_cols(wk, bk)
        wvc, bvc = head_cols(wv, bv)
        w_q.append(wqc); b_q.append(bqc)
        w_k.append(wkc); b_k.append(bkc)
        w_v.append(wvc); b_v.append(bvc)

        # output projection stacked over heads along the contraction axis:
        # [NH*DP, HP] so that concat(ctx_h) @ w_o == sum_h ctx_h @ w_o[h]
        w_o.append(jnp.concatenate(
            [_pad_to(wo[h * HEAD_DIM:(h + 1) * HEAD_DIM, :], (DP, HP))
             for h in range(NUM_HEADS)], axis=0))
        b_o.append(_pad_to(bo, (HP,))[None, :])

        w_i.append(_pad_to(wi, (HP, IP)))
        b_i.append(_pad_to(bi, (IP,))[None, :])
        w_f.append(_pad_to(wf, (IP, HP)))
        b_f.append(_pad_to(bfv, (HP,))[None, :])
        ln1_g.append(ones_h); ln1_b.append(zeros_h)
        ln2_g.append(ones_h); ln2_b.append(zeros_h)

    bf16 = jnp.bfloat16
    params.update(
        w_q=jnp.stack(w_q).astype(bf16), b_q=jnp.stack(b_q),     # [L,HP,NHDP], [L,1,NHDP]
        w_k=jnp.stack(w_k).astype(bf16), b_k=jnp.stack(b_k),
        w_v=jnp.stack(w_v).astype(bf16), b_v=jnp.stack(b_v),
        w_o=jnp.stack(w_o).astype(bf16), b_o=jnp.stack(b_o),     # [L,NHDP,HP], [L,1,HP]
        w_i=jnp.stack(w_i).astype(bf16), b_i=jnp.stack(b_i),     # [L,HP,IP],   [L,1,IP]
        w_f=jnp.stack(w_f).astype(bf16), b_f=jnp.stack(b_f),     # [L,IP,HP],   [L,1,HP]
        ln1_g=jnp.stack(ln1_g), ln1_b=jnp.stack(ln1_b),
        ln2_g=jnp.stack(ln2_g), ln2_b=jnp.stack(ln2_b),
    )

    pw, pb = dense(keys[3 + NUM_LAYERS], HIDDEN, HIDDEN)
    aw, ab = dense(keys[4 + NUM_LAYERS], HIDDEN, OUTPUT_DIM)
    params["pool_w"] = _pad_to(pw, (HP, HP)).astype(bf16)
    params["pool_b"] = _pad_to(pb, (HP,))[None, :]
    params["add_w"] = _pad_to(aw, (HP, PP)).astype(bf16)
    params["add_b"] = _pad_to(ab, (PP,))[None, :]
    return params


# ----------------------------- forward (BertEncoder.forward) -----------------
def bert_encoder_forward(params, token_ids, segment_ids, attention_mask,
                         add_linear=ADD_LINEAR):
    B, S = token_ids.shape
    rows = B * S

    # --- embedding gathers (data-dependent; plain-JAX glue) ---
    pos_ids = jnp.arange(S)
    emb = (params["word_emb"][token_ids]
           + params["pos_emb"][pos_ids][None, :, :]
           + params["type_emb"][segment_ids]).reshape(rows, HP)

    # additive key mask [B, 1, S]; broadcast over queries/heads inside the kernel
    mask_bias = ((1.0 - attention_mask.astype(jnp.float32)) * -10000.0).reshape(B, 1, S)

    weight_args = (
        params["emb_ln_g"], params["emb_ln_b"],
        params["w_q"], params["b_q"], params["w_k"], params["b_k"],
        params["w_v"], params["b_v"], params["w_o"], params["b_o"],
        params["w_i"], params["b_i"], params["w_f"], params["b_f"],
        params["ln1_g"], params["ln1_b"], params["ln2_g"], params["ln2_b"],
        params["pool_w"], params["pool_b"], params["add_w"], params["add_b"],
    )
    vmem_full = pl.BlockSpec(memory_space=pltpu.MemorySpace.VMEM)  # whole array, copied once

    # advisory cost estimate for XLA scheduling around the custom call
    flops = 2 * rows * (
        NUM_LAYERS * (3 * HP * NHDP + NUM_HEADS * 2 * S * DP + NHDP * HP + 2 * HP * IP)
        + HP * HP + HP * PP)
    transcendentals = rows * (NUM_LAYERS * (NUM_HEADS * S + IP) + HP)
    bytes_accessed = int(
        emb.size * emb.dtype.itemsize + mask_bias.size * 4
        + sum(int(a.size) * a.dtype.itemsize for a in weight_args)
        + rows * HP * 4 + rows * PP * 4)

    hidden, result = pl.pallas_call(
        _encoder_kernel,
        grid=(B,),
        in_specs=[
            pl.BlockSpec((S, HP), lambda b: (b, 0)),       # per-batch activation tile
            pl.BlockSpec((1, 1, S), lambda b: (b, 0, 0)),  # per-batch additive key mask
        ] + [vmem_full] * len(weight_args),
        out_specs=[
            pl.BlockSpec((S, HP), lambda b: (b, 0)),
            pl.BlockSpec((S, PP), lambda b: (b, 0)),
        ],
        out_shape=[
            jax.ShapeDtypeStruct((rows, HP), jnp.float32),   # final hidden (padded)
            jax.ShapeDtypeStruct((rows, PP), jnp.float32),   # pooled->linear (padded)
        ],
        compiler_params=pltpu.CompilerParams(dimension_semantics=("parallel",)),
        cost_estimate=pl.CostEstimate(flops=int(flops),
                                      transcendentals=int(transcendentals),
                                      bytes_accessed=bytes_accessed),
    )(emb, mask_bias, *weight_args)

    if add_linear:
        # result already includes pooler tanh + additional_linear (dropout = identity)
        return result.reshape(B, S, PP)[:, 0, :OUTPUT_DIM]
    return hidden.reshape(B, S, HP)[:, 0, :HIDDEN]


# ----------------------------- main -------------------------------------------
if __name__ == "__main__":
    key = jax.random.PRNGKey(0)
    k_param, k_tok, k_seg = jax.random.split(key, 3)

    params = init_params(k_param)

    B, S = 2, 8
    token_ids = jax.random.randint(k_tok, (B, S), 0, VOCAB_SIZE)
    segment_ids = jax.random.randint(k_seg, (B, S), 0, TYPE_VOCAB_SIZE)
    attention_mask = jnp.ones((B, S), jnp.int32).at[1, 6:].set(0)  # pad last 2 tokens of row 1

    out = bert_encoder_forward(params, token_ids, segment_ids, attention_mask)
    out = jax.block_until_ready(out)
    assert out.shape == (B, OUTPUT_DIM), out.shape
    print("KERNEL_OK")
</pallas_src>

<mosaic_0001>
module attributes {stable_mosaic.version = 11 : i64} {
  func.func @_encoder_kernel(%arg0: i32, %arg1: memref<8x128xf32, #tpu.memory_space<vmem>>, %arg2: memref<1x1x8xf32, #tpu.memory_space<vmem>>, %arg3: memref<1x128xf32, #tpu.memory_space<vmem>>, %arg4: memref<1x128xf32, #tpu.memory_space<vmem>>, %arg5: memref<2x128x512xbf16, #tpu.memory_space<vmem>>, %arg6: memref<2x1x512xf32, #tpu.memory_space<vmem>>, %arg7: memref<2x128x512xbf16, #tpu.memory_space<vmem>>, %arg8: memref<2x1x512xf32, #tpu.memory_space<vmem>>, %arg9: memref<2x128x512xbf16, #tpu.memory_space<vmem>>, %arg10: memref<2x1x512xf32, #tpu.memory_space<vmem>>, %arg11: memref<2x512x128xbf16, #tpu.memory_space<vmem>>, %arg12: memref<2x1x128xf32, #tpu.memory_space<vmem>>, %arg13: memref<2x128x128xbf16, #tpu.memory_space<vmem>>, %arg14: memref<2x1x128xf32, #tpu.memory_space<vmem>>, %arg15: memref<2x128x128xbf16, #tpu.memory_space<vmem>>, %arg16: memref<2x1x128xf32, #tpu.memory_space<vmem>>, %arg17: memref<2x1x128xf32, #tpu.memory_space<vmem>>, %arg18: memref<2x1x128xf32, #tpu.memory_space<vmem>>, %arg19: memref<2x1x128xf32, #tpu.memory_space<vmem>>, %arg20: memref<2x1x128xf32, #tpu.memory_space<vmem>>, %arg21: memref<128x128xbf16, #tpu.memory_space<vmem>>, %arg22: memref<1x128xf32, #tpu.memory_space<vmem>>, %arg23: memref<128x128xbf16, #tpu.memory_space<vmem>>, %arg24: memref<1x128xf32, #tpu.memory_space<vmem>>, %arg25: memref<8x128xf32, #tpu.memory_space<vmem>>, %arg26: memref<8x128xf32, #tpu.memory_space<vmem>>) attributes {dimension_semantics = [#tpu.dimension_semantics<parallel>], iteration_bounds = array<i64: 2>, scalar_prefetch = 0 : i64, scratch_operands = 0 : i64, tpu.core_type = #tpu.core_type<tc>, window_params = [{transform_indices = @transform_0, window_bounds = array<i64: 8, 128>}, {transform_indices = @transform_1, window_bounds = array<i64: 1, 1, 8>}, {pipeline_mode = #tpu.pipeline_mode<synchronous>, transform_indices = @transform_2, window_bounds = array<i64: 1, 128>}, {pipeline_mode = #tpu.pipeline_mode<synchronous>, transform_indices = @transform_3, window_bounds = array<i64: 1, 128>}, {pipeline_mode = #tpu.pipeline_mode<synchronous>, transform_indices = @transform_4, window_bounds = array<i64: 2, 128, 512>}, {pipeline_mode = #tpu.pipeline_mode<synchronous>, transform_indices = @transform_5, window_bounds = array<i64: 2, 1, 512>}, {pipeline_mode = #tpu.pipeline_mode<synchronous>, transform_indices = @transform_6, window_bounds = array<i64: 2, 128, 512>}, {pipeline_mode = #tpu.pipeline_mode<synchronous>, transform_indices = @transform_7, window_bounds = array<i64: 2, 1, 512>}, {pipeline_mode = #tpu.pipeline_mode<synchronous>, transform_indices = @transform_8, window_bounds = array<i64: 2, 128, 512>}, {pipeline_mode = #tpu.pipeline_mode<synchronous>, transform_indices = @transform_9, window_bounds = array<i64: 2, 1, 512>}, {pipeline_mode = #tpu.pipeline_mode<synchronous>, transform_indices = @transform_10, window_bounds = array<i64: 2, 512, 128>}, {pipeline_mode = #tpu.pipeline_mode<synchronous>, transform_indices = @transform_11, window_bounds = array<i64: 2, 1, 128>}, {pipeline_mode = #tpu.pipeline_mode<synchronous>, transform_indices = @transform_12, window_bounds = array<i64: 2, 128, 128>}, {pipeline_mode = #tpu.pipeline_mode<synchronous>, transform_indices = @transform_13, window_bounds = array<i64: 2, 1, 128>}, {pipeline_mode = #tpu.pipeline_mode<synchronous>, transform_indices = @transform_14, window_bounds = array<i64: 2, 128, 128>}, {pipeline_mode = #tpu.pipeline_mode<synchronous>, transform_indices = @transform_15, window_bounds = array<i64: 2, 1, 128>}, {pipeline_mode = #tpu.pipeline_mode<synchronous>, transform_indices = @transform_16, window_bounds = array<i64: 2, 1, 128>}, {pipeline_mode = #tpu.pipeline_mode<synchronous>, transform_indices = @transform_17, window_bounds = array<i64: 2, 1, 128>}, {pipeline_mode = #tpu.pipeline_mode<synchronous>, transform_indices = @transform_18, window_bounds = array<i64: 2, 1, 128>}, {pipeline_mode = #tpu.pipeline_mode<synchronous>, transform_indices = @transform_19, window_bounds = array<i64: 2, 1, 128>}, {pipeline_mode = #tpu.pipeline_mode<synchronous>, transform_indices = @transform_20, window_bounds = array<i64: 128, 128>}, {pipeline_mode = #tpu.pipeline_mode<synchronous>, transform_indices = @transform_21, window_bounds = array<i64: 1, 128>}, {pipeline_mode = #tpu.pipeline_mode<synchronous>, transform_indices = @transform_22, window_bounds = array<i64: 128, 128>}, {pipeline_mode = #tpu.pipeline_mode<synchronous>, transform_indices = @transform_23, window_bounds = array<i64: 1, 128>}, {transform_indices = @transform_24, window_bounds = array<i64: 8, 128>}, {transform_indices = @transform_25, window_bounds = array<i64: 8, 128>}]} {
    %0 = tpu.iota {dimensions = array<i32: 1>} : vector<1x128xi32>
    %c32_i32 = arith.constant 32 : i32
    %1 = vector.broadcast %c32_i32 : i32 to vector<1x128xi32>
    %2 = arith.cmpi slt, %0, %1 : vector<1x128xi32>
    %3 = arith.extui %2 : vector<1x128xi1> to vector<1x128xi32>
    %4 = arith.sitofp %3 : vector<1x128xi32> to vector<1x128xf32>
    %c0 = arith.constant 0 : index
    %c0_0 = arith.constant 0 : index
    %5 = vector.load %arg1[%c0, %c0_0] : memref<8x128xf32, #tpu.memory_space<vmem>>, vector<8x128xf32>
    %c0_1 = arith.constant 0 : index
    %c0_2 = arith.constant 0 : index
    %6 = vector.load %arg3[%c0_1, %c0_2] : memref<1x128xf32, #tpu.memory_space<vmem>>, vector<1x128xf32>
    %c0_3 = arith.constant 0 : index
    %c0_4 = arith.constant 0 : index
    %7 = vector.load %arg4[%c0_3, %c0_4] : memref<1x128xf32, #tpu.memory_space<vmem>>, vector<1x128xf32>
    %8 = vector.broadcast %4 : vector<1x128xf32> to vector<8x128xf32>
    %9 = arith.mulf %5, %8 : vector<8x128xf32>
    %cst = arith.constant dense<0.000000e+00> : vector<8xf32>
    %10 = vector.multi_reduction <add>, %9, %cst [1] : vector<8x128xf32> to vector<8xf32>
    %11 = vector.shape_cast %10 : vector<8xf32> to vector<8x1xf32>
    %cst_5 = arith.constant 3.125000e-02 : f32
    %12 = vector.broadcast %cst_5 : f32 to vector<8x1xf32>
    %13 = arith.mulf %11, %12 : vector<8x1xf32>
    %14 = vector.broadcast %13 : vector<8x1xf32> to vector<8x128xf32>
    %15 = arith.subf %5, %14 : vector<8x128xf32>
    %16 = vector.broadcast %4 : vector<1x128xf32> to vector<8x128xf32>
    %17 = arith.mulf %15, %16 : vector<8x128xf32>
    %18 = arith.mulf %17, %17 : vector<8x128xf32>
    %cst_6 = arith.constant dense<0.000000e+00> : vector<8xf32>
    %19 = vector.multi_reduction <add>, %18, %cst_6 [1] : vector<8x128xf32> to vector<8xf32>
    %20 = vector.shape_cast %19 : vector<8xf32> to vector<8x1xf32>
    %cst_7 = arith.constant 3.125000e-02 : f32
    %21 = vector.broadcast %cst_7 : f32 to vector<8x1xf32>
    %22 = arith.mulf %20, %21 : vector<8x1xf32>
    %cst_8 = arith.constant 9.99999996E-13 : f32
    %23 = vector.broadcast %cst_8 : f32 to vector<8x1xf32>
    %24 = arith.addf %22, %23 : vector<8x1xf32>
    %25 = math.rsqrt %24 : vector<8x1xf32>
    %26 = vector.broadcast %25 : vector<8x1xf32> to vector<8x128xf32>
    %27 = arith.mulf %17, %26 : vector<8x128xf32>
    %28 = vector.broadcast %6 : vector<1x128xf32> to vector<8x128xf32>
    %29 = arith.mulf %27, %28 : vector<8x128xf32>
    %30 = vector.broadcast %7 : vector<1x128xf32> to vector<8x128xf32>
    %31 = arith.addf %29, %30 : vector<8x128xf32>
    %c0_9 = arith.constant 0 : index
    %c0_10 = arith.constant 0 : index
    %c0_11 = arith.constant 0 : index
    %32 = vector.load %arg2[%c0_9, %c0_10, %c0_11] : memref<1x1x8xf32, #tpu.memory_space<vmem>>, vector<1x1x8xf32>
    %33 = vector.shape_cast %32 : vector<1x1x8xf32> to vector<1x8xf32>
    %34 = arith.truncf %31 : vector<8x128xf32> to vector<8x128xbf16>
    %c0_12 = arith.constant 0 : index
    %c0_13 = arith.constant 0 : index
    %c0_14 = arith.constant 0 : index
    %35 = vector.load %arg5[%c0_12, %c0_13, %c0_14] : memref<2x128x512xbf16, #tpu.memory_space<vmem>>, vector<1x128x512xbf16>
    %36 = vector.shape_cast %35 : vector<1x128x512xbf16> to vector<128x512xbf16>
    %cst_15 = arith.constant dense<0.000000e+00> : vector<8x512xf32>
    %37 = tpu.matmul %34, %36, %cst_15 {dimension_numbers = #tpu.dot_dimension_numbers<[1], [0], [0], [1], [0, 0, 1, 1], [], []>} : vector<8x128xbf16>, vector<128x512xbf16>, vector<8x512xf32> -> vector<8x512xf32>
    %c0_16 = arith.constant 0 : index
    %c0_17 = arith.constant 0 : index
    %c0_18 = arith.constant 0 : index
    %38 = vector.load %arg6[%c0_16, %c0_17, %c0_18] : memref<2x1x512xf32, #tpu.memory_space<vmem>>, vector<1x1x512xf32>
    %39 = vector.shape_cast %38 : vector<1x1x512xf32> to vector<1x512xf32>
    %40 = vector.broadcast %39 : vector<1x512xf32> to vector<8x512xf32>
    %41 = arith.addf %37, %40 : vector<8x512xf32>
    %c0_19 = arith.constant 0 : index
    %c0_20 = arith.constant 0 : index
    %c0_21 = arith.constant 0 : index
    %42 = vector.load %arg7[%c0_19, %c0_20, %c0_21] : memref<2x128x512xbf16, #tpu.memory_space<vmem>>, vector<1x128x512xbf16>
    %43 = vector.shape_cast %42 : vector<1x128x512xbf16> to vector<128x512xbf16>
    %cst_22 = arith.constant dense<0.000000e+00> : vector<8x512xf32>
    %44 = tpu.matmul %34, %43, %cst_22 {dimension_numbers = #tpu.dot_dimension_numbers<[1], [0], [0], [1], [0, 0, 1, 1], [], []>} : vector<8x128xbf16>, vector<128x512xbf16>, vector<8x512xf32> -> vector<8x512xf32>
    %c0_23 = arith.constant 0 : index
    %c0_24 = arith.constant 0 : index
    %c0_25 = arith.constant 0 : index
    %45 = vector.load %arg8[%c0_23, %c0_24, %c0_25] : memref<2x1x512xf32, #tpu.memory_space<vmem>>, vector<1x1x512xf32>
    %46 = vector.shape_cast %45 : vector<1x1x512xf32> to vector<1x512xf32>
    %47 = vector.broadcast %46 : vector<1x512xf32> to vector<8x512xf32>
    %48 = arith.addf %44, %47 : vector<8x512xf32>
    %c0_26 = arith.constant 0 : index
    %c0_27 = arith.constant 0 : index
    %c0_28 = arith.constant 0 : index
    %49 = vector.load %arg9[%c0_26, %c0_27, %c0_28] : memref<2x128x512xbf16, #tpu.memory_space<vmem>>, vector<1x128x512xbf16>
    %50 = vector.shape_cast %49 : vector<1x128x512xbf16> to vector<128x512xbf16>
    %cst_29 = arith.constant dense<0.000000e+00> : vector<8x512xf32>
    %51 = tpu.matmul %34, %50, %cst_29 {dimension_numbers = #tpu.dot_dimension_numbers<[1], [0], [0], [1], [0, 0, 1, 1], [], []>} : vector<8x128xbf16>, vector<128x512xbf16>, vector<8x512xf32> -> vector<8x512xf32>
    %c0_30 = arith.constant 0 : index
    %c0_31 = arith.constant 0 : index
    %c0_32 = arith.constant 0 : index
    %52 = vector.load %arg10[%c0_30, %c0_31, %c0_32] : memref<2x1x512xf32, #tpu.memory_space<vmem>>, vector<1x1x512xf32>
    %53 = vector.shape_cast %52 : vector<1x1x512xf32> to vector<1x512xf32>
    %54 = vector.broadcast %53 : vector<1x512xf32> to vector<8x512xf32>
    %55 = arith.addf %51, %54 : vector<8x512xf32>
    %56 = vector.extract_strided_slice %41 {offsets = [0, 0], sizes = [8, 128], strides = [1, 1]} : vector<8x512xf32> to vector<8x128xf32>
    %57 = vector.extract_strided_slice %48 {offsets = [0, 0], sizes = [8, 128], strides = [1, 1]} : vector<8x512xf32> to vector<8x128xf32>
    %58 = vector.extract_strided_slice %55 {offsets = [0, 0], sizes = [8, 128], strides = [1, 1]} : vector<8x512xf32> to vector<8x128xf32>
    %59 = arith.truncf %56 : vector<8x128xf32> to vector<8x128xbf16>
    %60 = arith.truncf %57 : vector<8x128xf32> to vector<8x128xbf16>
    %cst_33 = arith.constant dense<0.000000e+00> : vector<8x8xf32>
    %61 = tpu.matmul %59, %60, %cst_33 {dimension_numbers = #tpu.dot_dimension_numbers<[1], [1], [0], [0], [0, 0, 1, 0], [], []>} : vector<8x128xbf16>, vector<8x128xbf16>, vector<8x8xf32> -> vector<8x8xf32>
    %cst_34 = arith.constant 0.353553385 : f32
    %62 = vector.broadcast %cst_34 : f32 to vector<8x8xf32>
    %63 = arith.mulf %61, %62 : vector<8x8xf32>
    %64 = vector.broadcast %33 : vector<1x8xf32> to vector<8x8xf32>
    %65 = arith.addf %63, %64 : vector<8x8xf32>
    %cst_35 = arith.constant dense<0xFF800000> : vector<8xf32>
    %66 = vector.multi_reduction <maximumf>, %65, %cst_35 [1] : vector<8x8xf32> to vector<8xf32>
    %67 = vector.shape_cast %66 : vector<8xf32> to vector<8x1xf32>
    %68 = vector.broadcast %67 : vector<8x1xf32> to vector<8x8xf32>
    %69 = arith.subf %65, %68 : vector<8x8xf32>
    %70 = math.exp %69 : vector<8x8xf32>
    %cst_36 = arith.constant dense<0.000000e+00> : vector<8xf32>
    %71 = vector.multi_reduction <add>, %70, %cst_36 [1] : vector<8x8xf32> to vector<8xf32>
    %72 = vector.shape_cast %71 : vector<8xf32> to vector<8x1xf32>
    %73 = tpu.reciprocal %72 {approx = true} : vector<8x1xf32> -> vector<8x1xf32>
    %74 = vector.broadcast %73 : vector<8x1xf32> to vector<8x8xf32>
    %75 = arith.mulf %70, %74 : vector<8x8xf32>
    %76 = arith.truncf %75 : vector<8x8xf32> to vector<8x8xbf16>
    %77 = arith.truncf %58 : vector<8x128xf32> to vector<8x128xbf16>
    %cst_37 = arith.constant dense<0.000000e+00> : vector<8x128xf32>
    %78 = tpu.matmul %76, %77, %cst_37 {dimension_numbers = #tpu.dot_dimension_numbers<[1], [0], [0], [1], [0, 0, 1, 1], [], []>} : vector<8x8xbf16>, vector<8x128xbf16>, vector<8x128xf32> -> vector<8x128xf32>
    %79 = vector.extract_strided_slice %41 {offsets = [0, 128], sizes = [8, 128], strides = [1, 1]} : vector<8x512xf32> to vector<8x128xf32>
    %80 = vector.extract_strided_slice %48 {offsets = [0, 128], sizes = [8, 128], strides = [1, 1]} : vector<8x512xf32> to vector<8x128xf32>
    %81 = vector.extract_strided_slice %55 {offsets = [0, 128], sizes = [8, 128], strides = [1, 1]} : vector<8x512xf32> to vector<8x128xf32>
    %82 = arith.truncf %79 : vector<8x128xf32> to vector<8x128xbf16>
    %83 = arith.truncf %80 : vector<8x128xf32> to vector<8x128xbf16>
    %cst_38 = arith.constant dense<0.000000e+00> : vector<8x8xf32>
    %84 = tpu.matmul %82, %83, %cst_38 {dimension_numbers = #tpu.dot_dimension_numbers<[1], [1], [0], [0], [0, 0, 1, 0], [], []>} : vector<8x128xbf16>, vector<8x128xbf16>, vector<8x8xf32> -> vector<8x8xf32>
    %cst_39 = arith.constant 0.353553385 : f32
    %85 = vector.broadcast %cst_39 : f32 to vector<8x8xf32>
    %86 = arith.mulf %84, %85 : vector<8x8xf32>
    %87 = vector.broadcast %33 : vector<1x8xf32> to vector<8x8xf32>
    %88 = arith.addf %86, %87 : vector<8x8xf32>
    %cst_40 = arith.constant dense<0xFF800000> : vector<8xf32>
    %89 = vector.multi_reduction <maximumf>, %88, %cst_40 [1] : vector<8x8xf32> to vector<8xf32>
    %90 = vector.shape_cast %89 : vector<8xf32> to vector<8x1xf32>
    %91 = vector.broadcast %90 : vector<8x1xf32> to vector<8x8xf32>
    %92 = arith.subf %88, %91 : vector<8x8xf32>
    %93 = math.exp %92 : vector<8x8xf32>
    %cst_41 = arith.constant dense<0.000000e+00> : vector<8xf32>
    %94 = vector.multi_reduction <add>, %93, %cst_41 [1] : vector<8x8xf32> to vector<8xf32>
    %95 = vector.shape_cast %94 : vector<8xf32> to vector<8x1xf32>
    %96 = tpu.reciprocal %95 {approx = true} : vector<8x1xf32> -> vector<8x1xf32>
    %97 = vector.broadcast %96 : vector<8x1xf32> to vector<8x8xf32>
    %98 = arith.mulf %93, %97 : vector<8x8xf32>
    %99 = arith.truncf %98 : vector<8x8xf32> to vector<8x8xbf16>
    %100 = arith.truncf %81 : vector<8x128xf32> to vector<8x128xbf16>
    %cst_42 = arith.constant dense<0.000000e+00> : vector<8x128xf32>
    %101 = tpu.matmul %99, %100, %cst_42 {dimension_numbers = #tpu.dot_dimension_numbers<[1], [0], [0], [1], [0, 0, 1, 1], [], []>} : vector<8x8xbf16>, vector<8x128xbf16>, vector<8x128xf32> -> vector<8x128xf32>
    %102 = vector.extract_strided_slice %41 {offsets = [0, 256], sizes = [8, 128], strides = [1, 1]} : vector<8x512xf32> to vector<8x128xf32>
    %103 = vector.extract_strided_slice %48 {offsets = [0, 256], sizes = [8, 128], strides = [1, 1]} : vector<8x512xf32> to vector<8x128xf32>
    %104 = vector.extract_strided_slice %55 {offsets = [0, 256], sizes = [8, 128], strides = [1, 1]} : vector<8x512xf32> to vector<8x128xf32>
    %105 = arith.truncf %102 : vector<8x128xf32> to vector<8x128xbf16>
    %106 = arith.truncf %103 : vector<8x128xf32> to vector<8x128xbf16>
    %cst_43 = arith.constant dense<0.000000e+00> : vector<8x8xf32>
    %107 = tpu.matmul %105, %106, %cst_43 {dimension_numbers = #tpu.dot_dimension_numbers<[1], [1], [0], [0], [0, 0, 1, 0], [], []>} : vector<8x128xbf16>, vector<8x128xbf16>, vector<8x8xf32> -> vector<8x8xf32>
    %cst_44 = arith.constant 0.353553385 : f32
    %108 = vector.broadcast %cst_44 : f32 to vector<8x8xf32>
    %109 = arith.mulf %107, %108 : vector<8x8xf32>
    %110 = vector.broadcast %33 : vector<1x8xf32> to vector<8x8xf32>
    %111 = arith.addf %109, %110 : vector<8x8xf32>
    %cst_45 = arith.constant dense<0xFF800000> : vector<8xf32>
    %112 = vector.multi_reduction <maximumf>, %111, %cst_45 [1] : vector<8x8xf32> to vector<8xf32>
    %113 = vector.shape_cast %112 : vector<8xf32> to vector<8x1xf32>
    %114 = vector.broadcast %113 : vector<8x1xf32> to vector<8x8xf32>
    %115 = arith.subf %111, %114 : vector<8x8xf32>
    %116 = math.exp %115 : vector<8x8xf32>
    %cst_46 = arith.constant dense<0.000000e+00> : vector<8xf32>
    %117 = vector.multi_reduction <add>, %116, %cst_46 [1] : vector<8x8xf32> to vector<8xf32>
    %118 = vector.shape_cast %117 : vector<8xf32> to vector<8x1xf32>
    %119 = tpu.reciprocal %118 {approx = true} : vector<8x1xf32> -> vector<8x1xf32>
    %120 = vector.broadcast %119 : vector<8x1xf32> to vector<8x8xf32>
    %121 = arith.mulf %116, %120 : vector<8x8xf32>
    %122 = arith.truncf %121 : vector<8x8xf32> to vector<8x8xbf16>
    %123 = arith.truncf %104 : vector<8x128xf32> to vector<8x128xbf16>
    %cst_47 = arith.constant dense<0.000000e+00> : vector<8x128xf32>
    %124 = tpu.matmul %122, %123, %cst_47 {dimension_numbers = #tpu.dot_dimension_numbers<[1], [0], [0], [1], [0, 0, 1, 1], [], []>} : vector<8x8xbf16>, vector<8x128xbf16>, vector<8x128xf32> -> vector<8x128xf32>
    %125 = vector.extract_strided_slice %41 {offsets = [0, 384], sizes = [8, 128], strides = [1, 1]} : vector<8x512xf32> to vector<8x128xf32>
    %126 = vector.extract_strided_slice %48 {offsets = [0, 384], sizes = [8, 128], strides = [1, 1]} : vector<8x512xf32> to vector<8x128xf32>
    %127 = vector.extract_strided_slice %55 {offsets = [0, 384], sizes = [8, 128], strides = [1, 1]} : vector<8x512xf32> to vector<8x128xf32>
    %128 = arith.truncf %125 : vector<8x128xf32> to vector<8x128xbf16>
    %129 = arith.truncf %126 : vector<8x128xf32> to vector<8x128xbf16>
    %cst_48 = arith.constant dense<0.000000e+00> : vector<8x8xf32>
    %130 = tpu.matmul %128, %129, %cst_48 {dimension_numbers = #tpu.dot_dimension_numbers<[1], [1], [0], [0], [0, 0, 1, 0], [], []>} : vector<8x128xbf16>, vector<8x128xbf16>, vector<8x8xf32> -> vector<8x8xf32>
    %cst_49 = arith.constant 0.353553385 : f32
    %131 = vector.broadcast %cst_49 : f32 to vector<8x8xf32>
    %132 = arith.mulf %130, %131 : vector<8x8xf32>
    %133 = vector.broadcast %33 : vector<1x8xf32> to vector<8x8xf32>
    %134 = arith.addf %132, %133 : vector<8x8xf32>
    %cst_50 = arith.constant dense<0xFF800000> : vector<8xf32>
    %135 = vector.multi_reduction <maximumf>, %134, %cst_50 [1] : vector<8x8xf32> to vector<8xf32>
    %136 = vector.shape_cast %135 : vector<8xf32> to vector<8x1xf32>
    %137 = vector.broadcast %136 : vector<8x1xf32> to vector<8x8xf32>
    %138 = arith.subf %134, %137 : vector<8x8xf32>
    %139 = math.exp %138 : vector<8x8xf32>
    %cst_51 = arith.constant dense<0.000000e+00> : vector<8xf32>
    %140 = vector.multi_reduction <add>, %139, %cst_51 [1] : vector<8x8xf32> to vector<8xf32>
    %141 = vector.shape_cast %140 : vector<8xf32> to vector<8x1xf32>
    %142 = tpu.reciprocal %141 {approx = true} : vector<8x1xf32> -> vector<8x1xf32>
    %143 = vector.broadcast %142 : vector<8x1xf32> to vector<8x8xf32>
    %144 = arith.mulf %139, %143 : vector<8x8xf32>
    %145 = arith.truncf %144 : vector<8x8xf32> to vector<8x8xbf16>
    %146 = arith.truncf %127 : vector<8x128xf32> to vector<8x128xbf16>
    %cst_52 = arith.constant dense<0.000000e+00> : vector<8x128xf32>
    %147 = tpu.matmul %145, %146, %cst_52 {dimension_numbers = #tpu.dot_dimension_numbers<[1], [0], [0], [1], [0, 0, 1, 1], [], []>} : vector<8x8xbf16>, vector<8x128xbf16>, vector<8x128xf32> -> vector<8x128xf32>
    %148 = tpu.concatenate %78, %101, %124, %147 in 1 : vector<8x128xf32>, vector<8x128xf32>, vector<8x128xf32>, vector<8x128xf32> -> vector<8x512xf32>
    %c0_53 = arith.constant 0 : index
    %c0_54 = arith.constant 0 : index
    %c0_55 = arith.constant 0 : index
    %149 = vector.load %arg11[%c0_53, %c0_54, %c0_55] : memref<2x512x128xbf16, #tpu.memory_space<vmem>>, vector<1x512x128xbf16>
    %150 = vector.shape_cast %149 : vector<1x512x128xbf16> to vector<512x128xbf16>
    %151 = arith.truncf %148 : vector<8x512xf32> to vector<8x512xbf16>
    %cst_56 = arith.constant dense<0.000000e+00> : vector<8x128xf32>
    %152 = tpu.matmul %151, %150, %cst_56 {dimension_numbers = #tpu.dot_dimension_numbers<[1], [0], [0], [1], [0, 0, 1, 1], [], []>} : vector<8x512xbf16>, vector<512x128xbf16>, vector<8x128xf32> -> vector<8x128xf32>
    %c0_57 = arith.constant 0 : index
    %c0_58 = arith.constant 0 : index
    %c0_59 = arith.constant 0 : index
    %153 = vector.load %arg12[%c0_57, %c0_58, %c0_59] : memref<2x1x128xf32, #tpu.memory_space<vmem>>, vector<1x1x128xf32>
    %154 = vector.shape_cast %153 : vector<1x1x128xf32> to vector<1x128xf32>
    %155 = vector.broadcast %154 : vector<1x128xf32> to vector<8x128xf32>
    %156 = arith.addf %152, %155 : vector<8x128xf32>
    %157 = arith.addf %156, %31 : vector<8x128xf32>
    %c0_60 = arith.constant 0 : index
    %c0_61 = arith.constant 0 : index
    %c0_62 = arith.constant 0 : index
    %158 = vector.load %arg17[%c0_60, %c0_61, %c0_62] : memref<2x1x128xf32, #tpu.memory_space<vmem>>, vector<1x1x128xf32>
    %159 = vector.shape_cast %158 : vector<1x1x128xf32> to vector<1x128xf32>
    %c0_63 = arith.constant 0 : index
    %c0_64 = arith.constant 0 : index
    %c0_65 = arith.constant 0 : index
    %160 = vector.load %arg18[%c0_63, %c0_64, %c0_65] : memref<2x1x128xf32, #tpu.memory_space<vmem>>, vector<1x1x128xf32>
    %161 = vector.shape_cast %160 : vector<1x1x128xf32> to vector<1x128xf32>
    %162 = vector.broadcast %4 : vector<1x128xf32> to vector<8x128xf32>
    %163 = arith.mulf %157, %162 : vector<8x128xf32>
    %cst_66 = arith.constant dense<0.000000e+00> : vector<8xf32>
    %164 = vector.multi_reduction <add>, %163, %cst_66 [1] : vector<8x128xf32> to vector<8xf32>
    %165 = vector.shape_cast %164 : vector<8xf32> to vector<8x1xf32>
    %cst_67 = arith.constant 3.125000e-02 : f32
    %166 = vector.broadcast %cst_67 : f32 to vector<8x1xf32>
    %167 = arith.mulf %165, %166 : vector<8x1xf32>
    %168 = vector.broadcast %167 : vector<8x1xf32> to vector<8x128xf32>
    %169 = arith.subf %157, %168 : vector<8x128xf32>
    %170 = vector.broadcast %4 : vector<1x128xf32> to vector<8x128xf32>
    %171 = arith.mulf %169, %170 : vector<8x128xf32>
    %172 = arith.mulf %171, %171 : vector<8x128xf32>
    %cst_68 = arith.constant dense<0.000000e+00> : vector<8xf32>
    %173 = vector.multi_reduction <add>, %172, %cst_68 [1] : vector<8x128xf32> to vector<8xf32>
    %174 = vector.shape_cast %173 : vector<8xf32> to vector<8x1xf32>
    %cst_69 = arith.constant 3.125000e-02 : f32
    %175 = vector.broadcast %cst_69 : f32 to vector<8x1xf32>
    %176 = arith.mulf %174, %175 : vector<8x1xf32>
    %cst_70 = arith.constant 9.99999996E-13 : f32
    %177 = vector.broadcast %cst_70 : f32 to vector<8x1xf32>
    %178 = arith.addf %176, %177 : vector<8x1xf32>
    %179 = math.rsqrt %178 : vector<8x1xf32>
    %180 = vector.broadcast %179 : vector<8x1xf32> to vector<8x128xf32>
    %181 = arith.mulf %171, %180 : vector<8x128xf32>
    %182 = vector.broadcast %159 : vector<1x128xf32> to vector<8x128xf32>
    %183 = arith.mulf %181, %182 : vector<8x128xf32>
    %184 = vector.broadcast %161 : vector<1x128xf32> to vector<8x128xf32>
    %185 = arith.addf %183, %184 : vector<8x128xf32>
    %c0_71 = arith.constant 0 : index
    %c0_72 = arith.constant 0 : index
    %c0_73 = arith.constant 0 : index
    %186 = vector.load %arg13[%c0_71, %c0_72, %c0_73] : memref<2x128x128xbf16, #tpu.memory_space<vmem>>, vector<1x128x128xbf16>
    %187 = vector.shape_cast %186 : vector<1x128x128xbf16> to vector<128x128xbf16>
    %188 = arith.truncf %185 : vector<8x128xf32> to vector<8x128xbf16>
    %cst_74 = arith.constant dense<0.000000e+00> : vector<8x128xf32>
    %189 = tpu.matmul %188, %187, %cst_74 {dimension_numbers = #tpu.dot_dimension_numbers<[1], [0], [0], [1], [0, 0, 1, 1], [], []>} : vector<8x128xbf16>, vector<128x128xbf16>, vector<8x128xf32> -> vector<8x128xf32>
    %c0_75 = arith.constant 0 : index
    %c0_76 = arith.constant 0 : index
    %c0_77 = arith.constant 0 : index
    %190 = vector.load %arg14[%c0_75, %c0_76, %c0_77] : memref<2x1x128xf32, #tpu.memory_space<vmem>>, vector<1x1x128xf32>
    %191 = vector.shape_cast %190 : vector<1x1x128xf32> to vector<1x128xf32>
    %192 = vector.broadcast %191 : vector<1x128xf32> to vector<8x128xf32>
    %193 = arith.addf %189, %192 : vector<8x128xf32>
    %cst_78 = arith.constant 5.000000e-01 : f32
    %194 = vector.broadcast %cst_78 : f32 to vector<8x128xf32>
    %195 = arith.mulf %194, %193 : vector<8x128xf32>
    %cst_79 = arith.constant 4.471500e-02 : f32
    %196 = vector.broadcast %cst_79 : f32 to vector<8x128xf32>
    %197 = arith.mulf %196, %193 : vector<8x128xf32>
    %198 = arith.mulf %197, %193 : vector<8x128xf32>
    %199 = arith.mulf %198, %193 : vector<8x128xf32>
    %200 = arith.addf %193, %199 : vector<8x128xf32>
    %cst_80 = arith.constant 0.797884583 : f32
    %201 = vector.broadcast %cst_80 : f32 to vector<8x128xf32>
    %202 = arith.mulf %201, %200 : vector<8x128xf32>
    %203 = math.tanh %202 : vector<8x128xf32>
    %cst_81 = arith.constant 1.000000e+00 : f32
    %204 = vector.broadcast %cst_81 : f32 to vector<8x128xf32>
    %205 = arith.addf %204, %203 : vector<8x128xf32>
    %206 = arith.mulf %195, %205 : vector<8x128xf32>
    %c0_82 = arith.constant 0 : index
    %c0_83 = arith.constant 0 : index
    %c0_84 = arith.constant 0 : index
    %207 = vector.load %arg15[%c0_82, %c0_83, %c0_84] : memref<2x128x128xbf16, #tpu.memory_space<vmem>>, vector<1x128x128xbf16>
    %208 = vector.shape_cast %207 : vector<1x128x128xbf16> to vector<128x128xbf16>
    %209 = arith.truncf %206 : vector<8x128xf32> to vector<8x128xbf16>
    %cst_85 = arith.constant dense<0.000000e+00> : vector<8x128xf32>
    %210 = tpu.matmul %209, %208, %cst_85 {dimension_numbers = #tpu.dot_dimension_numbers<[1], [0], [0], [1], [0, 0, 1, 1], [], []>} : vector<8x128xbf16>, vector<128x128xbf16>, vector<8x128xf32> -> vector<8x128xf32>
    %c0_86 = arith.constant 0 : index
    %c0_87 = arith.constant 0 : index
    %c0_88 = arith.constant 0 : index
    %211 = vector.load %arg16[%c0_86, %c0_87, %c0_88] : memref<2x1x128xf32, #tpu.memory_space<vmem>>, vector<1x1x128xf32>
    %212 = vector.shape_cast %211 : vector<1x1x128xf32> to vector<1x128xf32>
    %213 = vector.broadcast %212 : vector<1x128xf32> to vector<8x128xf32>
    %214 = arith.addf %210, %213 : vector<8x128xf32>
    %215 = arith.addf %214, %185 : vector<8x128xf32>
    %c0_89 = arith.constant 0 : index
    %c0_90 = arith.constant 0 : index
    %c0_91 = arith.constant 0 : index
    %216 = vector.load %arg19[%c0_89, %c0_90, %c0_91] : memref<2x1x128xf32, #tpu.memory_space<vmem>>, vector<1x1x128xf32>
    %217 = vector.shape_cast %216 : vector<1x1x128xf32> to vector<1x128xf32>
    %c0_92 = arith.constant 0 : index
    %c0_93 = arith.constant 0 : index
    %c0_94 = arith.constant 0 : index
    %218 = vector.load %arg20[%c0_92, %c0_93, %c0_94] : memref<2x1x128xf32, #tpu.memory_space<vmem>>, vector<1x1x128xf32>
    %219 = vector.shape_cast %218 : vector<1x1x128xf32> to vector<1x128xf32>
    %220 = vector.broadcast %4 : vector<1x128xf32> to vector<8x128xf32>
    %221 = arith.mulf %215, %220 : vector<8x128xf32>
    %cst_95 = arith.constant dense<0.000000e+00> : vector<8xf32>
    %222 = vector.multi_reduction <add>, %221, %cst_95 [1] : vector<8x128xf32> to vector<8xf32>
    %223 = vector.shape_cast %222 : vector<8xf32> to vector<8x1xf32>
    %cst_96 = arith.constant 3.125000e-02 : f32
    %224 = vector.broadcast %cst_96 : f32 to vector<8x1xf32>
    %225 = arith.mulf %223, %224 : vector<8x1xf32>
    %226 = vector.broadcast %225 : vector<8x1xf32> to vector<8x128xf32>
    %227 = arith.subf %215, %226 : vector<8x128xf32>
    %228 = vector.broadcast %4 : vector<1x128xf32> to vector<8x128xf32>
    %229 = arith.mulf %227, %228 : vector<8x128xf32>
    %230 = arith.mulf %229, %229 : vector<8x128xf32>
    %cst_97 = arith.constant dense<0.000000e+00> : vector<8xf32>
    %231 = vector.multi_reduction <add>, %230, %cst_97 [1] : vector<8x128xf32> to vector<8xf32>
    %232 = vector.shape_cast %231 : vector<8xf32> to vector<8x1xf32>
    %cst_98 = arith.constant 3.125000e-02 : f32
    %233 = vector.broadcast %cst_98 : f32 to vector<8x1xf32>
    %234 = arith.mulf %232, %233 : vector<8x1xf32>
    %cst_99 = arith.constant 9.99999996E-13 : f32
    %235 = vector.broadcast %cst_99 : f32 to vector<8x1xf32>
    %236 = arith.addf %234, %235 : vector<8x1xf32>
    %237 = math.rsqrt %236 : vector<8x1xf32>
    %238 = vector.broadcast %237 : vector<8x1xf32> to vector<8x128xf32>
    %239 = arith.mulf %229, %238 : vector<8x128xf32>
    %240 = vector.broadcast %217 : vector<1x128xf32> to vector<8x128xf32>
    %241 = arith.mulf %239, %240 : vector<8x128xf32>
    %242 = vector.broadcast %219 : vector<1x128xf32> to vector<8x128xf32>
    %243 = arith.addf %241, %242 : vector<8x128xf32>
    %244 = arith.truncf %243 : vector<8x128xf32> to vector<8x128xbf16>
    %c1 = arith.constant 1 : index
    %c0_100 = arith.constant 0 : index
    %c0_101 = arith.constant 0 : index
    %245 = vector.load %arg5[%c1, %c0_100, %c0_101] : memref<2x128x512xbf16, #tpu.memory_space<vmem>>, vector<1x128x512xbf16>
    %246 = vector.shape_cast %245 : vector<1x128x512xbf16> to vector<128x512xbf16>
    %cst_102 = arith.constant dense<0.000000e+00> : vector<8x512xf32>
    %247 = tpu.matmul %244, %246, %cst_102 {dimension_numbers = #tpu.dot_dimension_numbers<[1], [0], [0], [1], [0, 0, 1, 1], [], []>} : vector<8x128xbf16>, vector<128x512xbf16>, vector<8x512xf32> -> vector<8x512xf32>
    %c1_103 = arith.constant 1 : index
    %c0_104 = arith.constant 0 : index
    %c0_105 = arith.constant 0 : index
    %248 = vector.load %arg6[%c1_103, %c0_104, %c0_105] : memref<2x1x512xf32, #tpu.memory_space<vmem>>, vector<1x1x512xf32>
    %249 = vector.shape_cast %248 : vector<1x1x512xf32> to vector<1x512xf32>
    %250 = vector.broadcast %249 : vector<1x512xf32> to vector<8x512xf32>
    %251 = arith.addf %247, %250 : vector<8x512xf32>
    %c1_106 = arith.constant 1 : index
    %c0_107 = arith.constant 0 : index
    %c0_108 = arith.constant 0 : index
    %252 = vector.load %arg7[%c1_106, %c0_107, %c0_108] : memref<2x128x512xbf16, #tpu.memory_space<vmem>>, vector<1x128x512xbf16>
    %253 = vector.shape_cast %252 : vector<1x128x512xbf16> to vector<128x512xbf16>
    %cst_109 = arith.constant dense<0.000000e+00> : vector<8x512xf32>
    %254 = tpu.matmul %244, %253, %cst_109 {dimension_numbers = #tpu.dot_dimension_numbers<[1], [0], [0], [1], [0, 0, 1, 1], [], []>} : vector<8x128xbf16>, vector<128x512xbf16>, vector<8x512xf32> -> vector<8x512xf32>
    %c1_110 = arith.constant 1 : index
    %c0_111 = arith.constant 0 : index
    %c0_112 = arith.constant 0 : index
    %255 = vector.load %arg8[%c1_110, %c0_111, %c0_112] : memref<2x1x512xf32, #tpu.memory_space<vmem>>, vector<1x1x512xf32>
    %256 = vector.shape_cast %255 : vector<1x1x512xf32> to vector<1x512xf32>
    %257 = vector.broadcast %256 : vector<1x512xf32> to vector<8x512xf32>
    %258 = arith.addf %254, %257 : vector<8x512xf32>
    %c1_113 = arith.constant 1 : index
    %c0_114 = arith.constant 0 : index
    %c0_115 = arith.constant 0 : index
    %259 = vector.load %arg9[%c1_113, %c0_114, %c0_115] : memref<2x128x512xbf16, #tpu.memory_space<vmem>>, vector<1x128x512xbf16>
    %260 = vector.shape_cast %259 : vector<1x128x512xbf16> to vector<128x512xbf16>
    %cst_116 = arith.constant dense<0.000000e+00> : vector<8x512xf32>
    %261 = tpu.matmul %244, %260, %cst_116 {dimension_numbers = #tpu.dot_dimension_numbers<[1], [0], [0], [1], [0, 0, 1, 1], [], []>} : vector<8x128xbf16>, vector<128x512xbf16>, vector<8x512xf32> -> vector<8x512xf32>
    %c1_117 = arith.constant 1 : index
    %c0_118 = arith.constant 0 : index
    %c0_119 = arith.constant 0 : index
    %262 = vector.load %arg10[%c1_117, %c0_118, %c0_119] : memref<2x1x512xf32, #tpu.memory_space<vmem>>, vector<1x1x512xf32>
    %263 = vector.shape_cast %262 : vector<1x1x512xf32> to vector<1x512xf32>
    %264 = vector.broadcast %263 : vector<1x512xf32> to vector<8x512xf32>
    %265 = arith.addf %261, %264 : vector<8x512xf32>
    %266 = vector.extract_strided_slice %251 {offsets = [0, 0], sizes = [8, 128], strides = [1, 1]} : vector<8x512xf32> to vector<8x128xf32>
    %267 = vector.extract_strided_slice %258 {offsets = [0, 0], sizes = [8, 128], strides = [1, 1]} : vector<8x512xf32> to vector<8x128xf32>
    %268 = vector.extract_strided_slice %265 {offsets = [0, 0], sizes = [8, 128], strides = [1, 1]} : vector<8x512xf32> to vector<8x128xf32>
    %269 = arith.truncf %266 : vector<8x128xf32> to vector<8x128xbf16>
    %270 = arith.truncf %267 : vector<8x128xf32> to vector<8x128xbf16>
    %cst_120 = arith.constant dense<0.000000e+00> : vector<8x8xf32>
    %271 = tpu.matmul %269, %270, %cst_120 {dimension_numbers = #tpu.dot_dimension_numbers<[1], [1], [0], [0], [0, 0, 1, 0], [], []>} : vector<8x128xbf16>, vector<8x128xbf16>, vector<8x8xf32> -> vector<8x8xf32>
    %cst_121 = arith.constant 0.353553385 : f32
    %272 = vector.broadcast %cst_121 : f32 to vector<8x8xf32>
    %273 = arith.mulf %271, %272 : vector<8x8xf32>
    %274 = vector.broadcast %33 : vector<1x8xf32> to vector<8x8xf32>
    %275 = arith.addf %273, %274 : vector<8x8xf32>
    %cst_122 = arith.constant dense<0xFF800000> : vector<8xf32>
    %276 = vector.multi_reduction <maximumf>, %275, %cst_122 [1] : vector<8x8xf32> to vector<8xf32>
    %277 = vector.shape_cast %276 : vector<8xf32> to vector<8x1xf32>
    %278 = vector.broadcast %277 : vector<8x1xf32> to vector<8x8xf32>
    %279 = arith.subf %275, %278 : vector<8x8xf32>
    %280 = math.exp %279 : vector<8x8xf32>
    %cst_123 = arith.constant dense<0.000000e+00> : vector<8xf32>
    %281 = vector.multi_reduction <add>, %280, %cst_123 [1] : vector<8x8xf32> to vector<8xf32>
    %282 = vector.shape_cast %281 : vector<8xf32> to vector<8x1xf32>
    %283 = tpu.reciprocal %282 {approx = true} : vector<8x1xf32> -> vector<8x1xf32>
    %284 = vector.broadcast %283 : vector<8x1xf32> to vector<8x8xf32>
    %285 = arith.mulf %280, %284 : vector<8x8xf32>
    %286 = arith.truncf %285 : vector<8x8xf32> to vector<8x8xbf16>
    %287 = arith.truncf %268 : vector<8x128xf32> to vector<8x128xbf16>
    %cst_124 = arith.constant dense<0.000000e+00> : vector<8x128xf32>
    %288 = tpu.matmul %286, %287, %cst_124 {dimension_numbers = #tpu.dot_dimension_numbers<[1], [0], [0], [1], [0, 0, 1, 1], [], []>} : vector<8x8xbf16>, vector<8x128xbf16>, vector<8x128xf32> -> vector<8x128xf32>
    %289 = vector.extract_strided_slice %251 {offsets = [0, 128], sizes = [8, 128], strides = [1, 1]} : vector<8x512xf32> to vector<8x128xf32>
    %290 = vector.extract_strided_slice %258 {offsets = [0, 128], sizes = [8, 128], strides = [1, 1]} : vector<8x512xf32> to vector<8x128xf32>
    %291 = vector.extract_strided_slice %265 {offsets = [0, 128], sizes = [8, 128], strides = [1, 1]} : vector<8x512xf32> to vector<8x128xf32>
    %292 = arith.truncf %289 : vector<8x128xf32> to vector<8x128xbf16>
    %293 = arith.truncf %290 : vector<8x128xf32> to vector<8x128xbf16>
    %cst_125 = arith.constant dense<0.000000e+00> : vector<8x8xf32>
    %294 = tpu.matmul %292, %293, %cst_125 {dimension_numbers = #tpu.dot_dimension_numbers<[1], [1], [0], [0], [0, 0, 1, 0], [], []>} : vector<8x128xbf16>, vector<8x128xbf16>, vector<8x8xf32> -> vector<8x8xf32>
    %cst_126 = arith.constant 0.353553385 : f32
    %295 = vector.broadcast %cst_126 : f32 to vector<8x8xf32>
    %296 = arith.mulf %294, %295 : vector<8x8xf32>
    %297 = vector.broadcast %33 : vector<1x8xf32> to vector<8x8xf32>
    %298 = arith.addf %296, %297 : vector<8x8xf32>
    %cst_127 = arith.constant dense<0xFF800000> : vector<8xf32>
    %299 = vector.multi_reduction <maximumf>, %298, %cst_127 [1] : vector<8x8xf32> to vector<8xf32>
    %300 = vector.shape_cast %299 : vector<8xf32> to vector<8x1xf32>
    %301 = vector.broadcast %300 : vector<8x1xf32> to vector<8x8xf32>
    %302 = arith.subf %298, %301 : vector<8x8xf32>
    %303 = math.exp %302 : vector<8x8xf32>
    %cst_128 = arith.constant dense<0.000000e+00> : vector<8xf32>
    %304 = vector.multi_reduction <add>, %303, %cst_128 [1] : vector<8x8xf32> to vector<8xf32>
    %305 = vector.shape_cast %304 : vector<8xf32> to vector<8x1xf32>
    %306 = tpu.reciprocal %305 {approx = true} : vector<8x1xf32> -> vector<8x1xf32>
    %307 = vector.broadcast %306 : vector<8x1xf32> to vector<8x8xf32>
    %308 = arith.mulf %303, %307 : vector<8x8xf32>
    %309 = arith.truncf %308 : vector<8x8xf32> to vector<8x8xbf16>
    %310 = arith.truncf %291 : vector<8x128xf32> to vector<8x128xbf16>
    %cst_129 = arith.constant dense<0.000000e+00> : vector<8x128xf32>
    %311 = tpu.matmul %309, %310, %cst_129 {dimension_numbers = #tpu.dot_dimension_numbers<[1], [0], [0], [1], [0, 0, 1, 1], [], []>} : vector<8x8xbf16>, vector<8x128xbf16>, vector<8x128xf32> -> vector<8x128xf32>
    %312 = vector.extract_strided_slice %251 {offsets = [0, 256], sizes = [8, 128], strides = [1, 1]} : vector<8x512xf32> to vector<8x128xf32>
    %313 = vector.extract_strided_slice %258 {offsets = [0, 256], sizes = [8, 128], strides = [1, 1]} : vector<8x512xf32> to vector<8x128xf32>
    %314 = vector.extract_strided_slice %265 {offsets = [0, 256], sizes = [8, 128], strides = [1, 1]} : vector<8x512xf32> to vector<8x128xf32>
    %315 = arith.truncf %312 : vector<8x128xf32> to vector<8x128xbf16>
    %316 = arith.truncf %313 : vector<8x128xf32> to vector<8x128xbf16>
    %cst_130 = arith.constant dense<0.000000e+00> : vector<8x8xf32>
    %317 = tpu.matmul %315, %316, %cst_130 {dimension_numbers = #tpu.dot_dimension_numbers<[1], [1], [0], [0], [0, 0, 1, 0], [], []>} : vector<8x128xbf16>, vector<8x128xbf16>, vector<8x8xf32> -> vector<8x8xf32>
    %cst_131 = arith.constant 0.353553385 : f32
    %318 = vector.broadcast %cst_131 : f32 to vector<8x8xf32>
    %319 = arith.mulf %317, %318 : vector<8x8xf32>
    %320 = vector.broadcast %33 : vector<1x8xf32> to vector<8x8xf32>
    %321 = arith.addf %319, %320 : vector<8x8xf32>
    %cst_132 = arith.constant dense<0xFF800000> : vector<8xf32>
    %322 = vector.multi_reduction <maximumf>, %321, %cst_132 [1] : vector<8x8xf32> to vector<8xf32>
    %323 = vector.shape_cast %322 : vector<8xf32> to vector<8x1xf32>
    %324 = vector.broadcast %323 : vector<8x1xf32> to vector<8x8xf32>
    %325 = arith.subf %321, %324 : vector<8x8xf32>
    %326 = math.exp %325 : vector<8x8xf32>
    %cst_133 = arith.constant dense<0.000000e+00> : vector<8xf32>
    %327 = vector.multi_reduction <add>, %326, %cst_133 [1] : vector<8x8xf32> to vector<8xf32>
    %328 = vector.shape_cast %327 : vector<8xf32> to vector<8x1xf32>
    %329 = tpu.reciprocal %328 {approx = true} : vector<8x1xf32> -> vector<8x1xf32>
    %330 = vector.broadcast %329 : vector<8x1xf32> to vector<8x8xf32>
    %331 = arith.mulf %326, %330 : vector<8x8xf32>
    %332 = arith.truncf %331 : vector<8x8xf32> to vector<8x8xbf16>
    %333 = arith.truncf %314 : vector<8x128xf32> to vector<8x128xbf16>
    %cst_134 = arith.constant dense<0.000000e+00> : vector<8x128xf32>
    %334 = tpu.matmul %332, %333, %cst_134 {dimension_numbers = #tpu.dot_dimension_numbers<[1], [0], [0], [1], [0, 0, 1, 1], [], []>} : vector<8x8xbf16>, vector<8x128xbf16>, vector<8x128xf32> -> vector<8x128xf32>
    %335 = vector.extract_strided_slice %251 {offsets = [0, 384], sizes = [8, 128], strides = [1, 1]} : vector<8x512xf32> to vector<8x128xf32>
    %336 = vector.extract_strided_slice %258 {offsets = [0, 384], sizes = [8, 128], strides = [1, 1]} : vector<8x512xf32> to vector<8x128xf32>
    %337 = vector.extract_strided_slice %265 {offsets = [0, 384], sizes = [8, 128], strides = [1, 1]} : vector<8x512xf32> to vector<8x128xf32>
    %338 = arith.truncf %335 : vector<8x128xf32> to vector<8x128xbf16>
    %339 = arith.truncf %336 : vector<8x128xf32> to vector<8x128xbf16>
    %cst_135 = arith.constant dense<0.000000e+00> : vector<8x8xf32>
    %340 = tpu.matmul %338, %339, %cst_135 {dimension_numbers = #tpu.dot_dimension_numbers<[1], [1], [0], [0], [0, 0, 1, 0], [], []>} : vector<8x128xbf16>, vector<8x128xbf16>, vector<8x8xf32> -> vector<8x8xf32>
    %cst_136 = arith.constant 0.353553385 : f32
    %341 = vector.broadcast %cst_136 : f32 to vector<8x8xf32>
    %342 = arith.mulf %340, %341 : vector<8x8xf32>
    %343 = vector.broadcast %33 : vector<1x8xf32> to vector<8x8xf32>
    %344 = arith.addf %342, %343 : vector<8x8xf32>
    %cst_137 = arith.constant dense<0xFF800000> : vector<8xf32>
    %345 = vector.multi_reduction <maximumf>, %344, %cst_137 [1] : vector<8x8xf32> to vector<8xf32>
    %346 = vector.shape_cast %345 : vector<8xf32> to vector<8x1xf32>
    %347 = vector.broadcast %346 : vector<8x1xf32> to vector<8x8xf32>
    %348 = arith.subf %344, %347 : vector<8x8xf32>
    %349 = math.exp %348 : vector<8x8xf32>
    %cst_138 = arith.constant dense<0.000000e+00> : vector<8xf32>
    %350 = vector.multi_reduction <add>, %349, %cst_138 [1] : vector<8x8xf32> to vector<8xf32>
    %351 = vector.shape_cast %350 : vector<8xf32> to vector<8x1xf32>
    %352 = tpu.reciprocal %351 {approx = true} : vector<8x1xf32> -> vector<8x1xf32>
    %353 = vector.broadcast %352 : vector<8x1xf32> to vector<8x8xf32>
    %354 = arith.mulf %349, %353 : vector<8x8xf32>
    %355 = arith.truncf %354 : vector<8x8xf32> to vector<8x8xbf16>
    %356 = arith.truncf %337 : vector<8x128xf32> to vector<8x128xbf16>
    %cst_139 = arith.constant dense<0.000000e+00> : vector<8x128xf32>
    %357 = tpu.matmul %355, %356, %cst_139 {dimension_numbers = #tpu.dot_dimension_numbers<[1], [0], [0], [1], [0, 0, 1, 1], [], []>} : vector<8x8xbf16>, vector<8x128xbf16>, vector<8x128xf32> -> vector<8x128xf32>
    %358 = tpu.concatenate %288, %311, %334, %357 in 1 : vector<8x128xf32>, vector<8x128xf32>, vector<8x128xf32>, vector<8x128xf32> -> vector<8x512xf32>
    %c1_140 = arith.constant 1 : index
    %c0_141 = arith.constant 0 : index
    %c0_142 = arith.constant 0 : index
    %359 = vector.load %arg11[%c1_140, %c0_141, %c0_142] : memref<2x512x128xbf16, #tpu.memory_space<vmem>>, vector<1x512x128xbf16>
    %360 = vector.shape_cast %359 : vector<1x512x128xbf16> to vector<512x128xbf16>
    %361 = arith.truncf %358 : vector<8x512xf32> to vector<8x512xbf16>
    %cst_143 = arith.constant dense<0.000000e+00> : vector<8x128xf32>
    %362 = tpu.matmul %361, %360, %cst_143 {dimension_numbers = #tpu.dot_dimension_numbers<[1], [0], [0], [1], [0, 0, 1, 1], [], []>} : vector<8x512xbf16>, vector<512x128xbf16>, vector<8x128xf32> -> vector<8x128xf32>
    %c1_144 = arith.constant 1 : index
    %c0_145 = arith.constant 0 : index
    %c0_146 = arith.constant 0 : index
    %363 = vector.load %arg12[%c1_144, %c0_145, %c0_146] : memref<2x1x128xf32, #tpu.memory_space<vmem>>, vector<1x1x128xf32>
    %364 = vector.shape_cast %363 : vector<1x1x128xf32> to vector<1x128xf32>
    %365 = vector.broadcast %364 : vector<1x128xf32> to vector<8x128xf32>
    %366 = arith.addf %362, %365 : vector<8x128xf32>
    %367 = arith.addf %366, %243 : vector<8x128xf32>
    %c1_147 = arith.constant 1 : index
    %c0_148 = arith.constant 0 : index
    %c0_149 = arith.constant 0 : index
    %368 = vector.load %arg17[%c1_147, %c0_148, %c0_149] : memref<2x1x128xf32, #tpu.memory_space<vmem>>, vector<1x1x128xf32>
    %369 = vector.shape_cast %368 : vector<1x1x128xf32> to vector<1x128xf32>
    %c1_150 = arith.constant 1 : index
    %c0_151 = arith.constant 0 : index
    %c0_152 = arith.constant 0 : index
    %370 = vector.load %arg18[%c1_150, %c0_151, %c0_152] : memref<2x1x128xf32, #tpu.memory_space<vmem>>, vector<1x1x128xf32>
    %371 = vector.shape_cast %370 : vector<1x1x128xf32> to vector<1x128xf32>
    %372 = vector.broadcast %4 : vector<1x128xf32> to vector<8x128xf32>
    %373 = arith.mulf %367, %372 : vector<8x128xf32>
    %cst_153 = arith.constant dense<0.000000e+00> : vector<8xf32>
    %374 = vector.multi_reduction <add>, %373, %cst_153 [1] : vector<8x128xf32> to vector<8xf32>
    %375 = vector.shape_cast %374 : vector<8xf32> to vector<8x1xf32>
    %cst_154 = arith.constant 3.125000e-02 : f32
    %376 = vector.broadcast %cst_154 : f32 to vector<8x1xf32>
    %377 = arith.mulf %375, %376 : vector<8x1xf32>
    %378 = vector.broadcast %377 : vector<8x1xf32> to vector<8x128xf32>
    %379 = arith.subf %367, %378 : vector<8x128xf32>
    %380 = vector.broadcast %4 : vector<1x128xf32> to vector<8x128xf32>
    %381 = arith.mulf %379, %380 : vector<8x128xf32>
    %382 = arith.mulf %381, %381 : vector<8x128xf32>
    %cst_155 = arith.constant dense<0.000000e+00> : vector<8xf32>
    %383 = vector.multi_reduction <add>, %382, %cst_155 [1] : vector<8x128xf32> to vector<8xf32>
    %384 = vector.shape_cast %383 : vector<8xf32> to vector<8x1xf32>
    %cst_156 = arith.constant 3.125000e-02 : f32
    %385 = vector.broadcast %cst_156 : f32 to vector<8x1xf32>
    %386 = arith.mulf %384, %385 : vector<8x1xf32>
    %cst_157 = arith.constant 9.99999996E-13 : f32
    %387 = vector.broadcast %cst_157 : f32 to vector<8x1xf32>
    %388 = arith.addf %386, %387 : vector<8x1xf32>
    %389 = math.rsqrt %388 : vector<8x1xf32>
    %390 = vector.broadcast %389 : vector<8x1xf32> to vector<8x128xf32>
    %391 = arith.mulf %381, %390 : vector<8x128xf32>
    %392 = vector.broadcast %369 : vector<1x128xf32> to vector<8x128xf32>
    %393 = arith.mulf %391, %392 : vector<8x128xf32>
    %394 = vector.broadcast %371 : vector<1x128xf32> to vector<8x128xf32>
    %395 = arith.addf %393, %394 : vector<8x128xf32>
    %c1_158 = arith.constant 1 : index
    %c0_159 = arith.constant 0 : index
    %c0_160 = arith.constant 0 : index
    %396 = vector.load %arg13[%c1_158, %c0_159, %c0_160] : memref<2x128x128xbf16, #tpu.memory_space<vmem>>, vector<1x128x128xbf16>
    %397 = vector.shape_cast %396 : vector<1x128x128xbf16> to vector<128x128xbf16>
    %398 = arith.truncf %395 : vector<8x128xf32> to vector<8x128xbf16>
    %cst_161 = arith.constant dense<0.000000e+00> : vector<8x128xf32>
    %399 = tpu.matmul %398, %397, %cst_161 {dimension_numbers = #tpu.dot_dimension_numbers<[1], [0], [0], [1], [0, 0, 1, 1], [], []>} : vector<8x128xbf16>, vector<128x128xbf16>, vector<8x128xf32> -> vector<8x128xf32>
    %c1_162 = arith.constant 1 : index
    %c0_163 = arith.constant 0 : index
    %c0_164 = arith.constant 0 : index
    %400 = vector.load %arg14[%c1_162, %c0_163, %c0_164] : memref<2x1x128xf32, #tpu.memory_space<vmem>>, vector<1x1x128xf32>
    %401 = vector.shape_cast %400 : vector<1x1x128xf32> to vector<1x128xf32>
    %402 = vector.broadcast %401 : vector<1x128xf32> to vector<8x128xf32>
    %403 = arith.addf %399, %402 : vector<8x128xf32>
    %cst_165 = arith.constant 5.000000e-01 : f32
    %404 = vector.broadcast %cst_165 : f32 to vector<8x128xf32>
    %405 = arith.mulf %404, %403 : vector<8x128xf32>
    %cst_166 = arith.constant 4.471500e-02 : f32
    %406 = vector.broadcast %cst_166 : f32 to vector<8x128xf32>
    %407 = arith.mulf %406, %403 : vector<8x128xf32>
    %408 = arith.mulf %407, %403 : vector<8x128xf32>
    %409 = arith.mulf %408, %403 : vector<8x128xf32>
    %410 = arith.addf %403, %409 : vector<8x128xf32>
    %cst_167 = arith.constant 0.797884583 : f32
    %411 = vector.broadcast %cst_167 : f32 to vector<8x128xf32>
    %412 = arith.mulf %411, %410 : vector<8x128xf32>
    %413 = math.tanh %412 : vector<8x128xf32>
    %cst_168 = arith.constant 1.000000e+00 : f32
    %414 = vector.broadcast %cst_168 : f32 to vector<8x128xf32>
    %415 = arith.addf %414, %413 : vector<8x128xf32>
    %416 = arith.mulf %405, %415 : vector<8x128xf32>
    %c1_169 = arith.constant 1 : index
    %c0_170 = arith.constant 0 : index
    %c0_171 = arith.constant 0 : index
    %417 = vector.load %arg15[%c1_169, %c0_170, %c0_171] : memref<2x128x128xbf16, #tpu.memory_space<vmem>>, vector<1x128x128xbf16>
    %418 = vector.shape_cast %417 : vector<1x128x128xbf16> to vector<128x128xbf16>
    %419 = arith.truncf %416 : vector<8x128xf32> to vector<8x128xbf16>
    %cst_172 = arith.constant dense<0.000000e+00> : vector<8x128xf32>
    %420 = tpu.matmul %419, %418, %cst_172 {dimension_numbers = #tpu.dot_dimension_numbers<[1], [0], [0], [1], [0, 0, 1, 1], [], []>} : vector<8x128xbf16>, vector<128x128xbf16>, vector<8x128xf32> -> vector<8x128xf32>
    %c1_173 = arith.constant 1 : index
    %c0_174 = arith.constant 0 : index
    %c0_175 = arith.constant 0 : index
    %421 = vector.load %arg16[%c1_173, %c0_174, %c0_175] : memref<2x1x128xf32, #tpu.memory_space<vmem>>, vector<1x1x128xf32>
    %422 = vector.shape_cast %421 : vector<1x1x128xf32> to vector<1x128xf32>
    %423 = vector.broadcast %422 : vector<1x128xf32> to vector<8x128xf32>
    %424 = arith.addf %420, %423 : vector<8x128xf32>
    %425 = arith.addf %424, %395 : vector<8x128xf32>
    %c1_176 = arith.constant 1 : index
    %c0_177 = arith.constant 0 : index
    %c0_178 = arith.constant 0 : index
    %426 = vector.load %arg19[%c1_176, %c0_177, %c0_178] : memref<2x1x128xf32, #tpu.memory_space<vmem>>, vector<1x1x128xf32>
    %427 = vector.shape_cast %426 : vector<1x1x128xf32> to vector<1x128xf32>
    %c1_179 = arith.constant 1 : index
    %c0_180 = arith.constant 0 : index
    %c0_181 = arith.constant 0 : index
    %428 = vector.load %arg20[%c1_179, %c0_180, %c0_181] : memref<2x1x128xf32, #tpu.memory_space<vmem>>, vector<1x1x128xf32>
    %429 = vector.shape_cast %428 : vector<1x1x128xf32> to vector<1x128xf32>
    %430 = vector.broadcast %4 : vector<1x128xf32> to vector<8x128xf32>
    %431 = arith.mulf %425, %430 : vector<8x128xf32>
    %cst_182 = arith.constant dense<0.000000e+00> : vector<8xf32>
    %432 = vector.multi_reduction <add>, %431, %cst_182 [1] : vector<8x128xf32> to vector<8xf32>
    %433 = vector.shape_cast %432 : vector<8xf32> to vector<8x1xf32>
    %cst_183 = arith.constant 3.125000e-02 : f32
    %434 = vector.broadcast %cst_183 : f32 to vector<8x1xf32>
    %435 = arith.mulf %433, %434 : vector<8x1xf32>
    %436 = vector.broadcast %435 : vector<8x1xf32> to vector<8x128xf32>
    %437 = arith.subf %425, %436 : vector<8x128xf32>
    %438 = vector.broadcast %4 : vector<1x128xf32> to vector<8x128xf32>
    %439 = arith.mulf %437, %438 : vector<8x128xf32>
    %440 = arith.mulf %439, %439 : vector<8x128xf32>
    %cst_184 = arith.constant dense<0.000000e+00> : vector<8xf32>
    %441 = vector.multi_reduction <add>, %440, %cst_184 [1] : vector<8x128xf32> to vector<8xf32>
    %442 = vector.shape_cast %441 : vector<8xf32> to vector<8x1xf32>
    %cst_185 = arith.constant 3.125000e-02 : f32
    %443 = vector.broadcast %cst_185 : f32 to vector<8x1xf32>
    %444 = arith.mulf %442, %443 : vector<8x1xf32>
    %cst_186 = arith.constant 9.99999996E-13 : f32
    %445 = vector.broadcast %cst_186 : f32 to vector<8x1xf32>
    %446 = arith.addf %444, %445 : vector<8x1xf32>
    %447 = math.rsqrt %446 : vector<8x1xf32>
    %448 = vector.broadcast %447 : vector<8x1xf32> to vector<8x128xf32>
    %449 = arith.mulf %439, %448 : vector<8x128xf32>
    %450 = vector.broadcast %427 : vector<1x128xf32> to vector<8x128xf32>
    %451 = arith.mulf %449, %450 : vector<8x128xf32>
    %452 = vector.broadcast %429 : vector<1x128xf32> to vector<8x128xf32>
    %453 = arith.addf %451, %452 : vector<8x128xf32>
    %c0_187 = arith.constant 0 : index
    %c0_188 = arith.constant 0 : index
    %454 = vector.load %arg25[%c0_187, %c0_188] : memref<8x128xf32, #tpu.memory_space<vmem>>, vector<8x128xf32>
    tpu.vector_store %arg25[%c0_187, %c0_188], %453 {strides = array<i32>} : memref<8x128xf32, #tpu.memory_space<vmem>>, vector<8x128xf32>,
    %c0_189 = arith.constant 0 : index
    %c0_190 = arith.constant 0 : index
    %455 = vector.load %arg21[%c0_189, %c0_190] : memref<128x128xbf16, #tpu.memory_space<vmem>>, vector<128x128xbf16>
    %456 = arith.truncf %453 : vector<8x128xf32> to vector<8x128xbf16>
    %cst_191 = arith.constant dense<0.000000e+00> : vector<8x128xf32>
    %457 = tpu.matmul %456, %455, %cst_191 {dimension_numbers = #tpu.dot_dimension_numbers<[1], [0], [0], [1], [0, 0, 1, 1], [], []>} : vector<8x128xbf16>, vector<128x128xbf16>, vector<8x128xf32> -> vector<8x128xf32>
    %c0_192 = arith.constant 0 : index
    %c0_193 = arith.constant 0 : index
    %458 = vector.load %arg22[%c0_192, %c0_193] : memref<1x128xf32, #tpu.memory_space<vmem>>, vector<1x128xf32>
    %459 = vector.broadcast %458 : vector<1x128xf32> to vector<8x128xf32>
    %460 = arith.addf %457, %459 : vector<8x128xf32>
    %461 = math.tanh %460 : vector<8x128xf32>
    %c0_194 = arith.constant 0 : index
    %c0_195 = arith.constant 0 : index
    %462 = vector.load %arg23[%c0_194, %c0_195] : memref<128x128xbf16, #tpu.memory_space<vmem>>, vector<128x128xbf16>
    %463 = arith.truncf %461 : vector<8x128xf32> to vector<8x128xbf16>
    %cst_196 = arith.constant dense<0.000000e+00> : vector<8x128xf32>
    %464 = tpu.matmul %463, %462, %cst_196 {dimension_numbers = #tpu.dot_dimension_numbers<[1], [0], [0], [1], [0, 0, 1, 1], [], []>} : vector<8x128xbf16>, vector<128x128xbf16>, vector<8x128xf32> -> vector<8x128xf32>
    %c0_197 = arith.constant 0 : index
    %c0_198 = arith.constant 0 : index
    %465 = vector.load %arg24[%c0_197, %c0_198] : memref<1x128xf32, #tpu.memory_space<vmem>>, vector<1x128xf32>
    %466 = vector.broadcast %465 : vector<1x128xf32> to vector<8x128xf32>
    %467 = arith.addf %464, %466 : vector<8x128xf32>
    %c0_199 = arith.constant 0 : index
    %c0_200 = arith.constant 0 : index
    %468 = vector.load %arg26[%c0_199, %c0_200] : memref<8x128xf32, #tpu.memory_space<vmem>>, vector<8x128xf32>
    tpu.vector_store %arg26[%c0_199, %c0_200], %467 {strides = array<i32>} : memref<8x128xf32, #tpu.memory_space<vmem>>, vector<8x128xf32>,
    return
  }
  func.func @transform_0(%arg0: i32) -> (i32, i32) {
    %c0_i32 = arith.constant 0 : i32
    %c0_i32_0 = arith.constant 0 : i32
    return %arg0, %c0_i32 : i32, i32
  }
  func.func @transform_1(%arg0: i32) -> (i32, i32, i32) {
    %c0_i32 = arith.constant 0 : i32
    %c0_i32_0 = arith.constant 0 : i32
    %c0_i32_1 = arith.constant 0 : i32
    return %arg0, %c0_i32, %c0_i32_0 : i32, i32, i32
  }
  func.func @transform_2(%arg0: i32) -> (i32, i32) {
    %c0_i32 = arith.constant 0 : i32
    %c0_i32_0 = arith.constant 0 : i32
    %c0_i32_1 = arith.constant 0 : i32
    return %c0_i32, %c0_i32_0 : i32, i32
  }
  func.func @transform_3(%arg0: i32) -> (i32, i32) {
    %c0_i32 = arith.constant 0 : i32
    %c0_i32_0 = arith.constant 0 : i32
    %c0_i32_1 = arith.constant 0 : i32
    return %c0_i32, %c0_i32_0 : i32, i32
  }
  func.func @transform_4(%arg0: i32) -> (i32, i32, i32) {
    %c0_i32 = arith.constant 0 : i32
    %c0_i32_0 = arith.constant 0 : i32
    %c0_i32_1 = arith.constant 0 : i32
    %c0_i32_2 = arith.constant 0 : i32
    return %c0_i32, %c0_i32_0, %c0_i32_1 : i32, i32, i32
  }
  func.func @transform_5(%arg0: i32) -> (i32, i32, i32) {
    %c0_i32 = arith.constant 0 : i32
    %c0_i32_0 = arith.constant 0 : i32
    %c0_i32_1 = arith.constant 0 : i32
    %c0_i32_2 = arith.constant 0 : i32
    return %c0_i32, %c0_i32_0, %c0_i32_1 : i32, i32, i32
  }
  func.func @transform_6(%arg0: i32) -> (i32, i32, i32) {
    %c0_i32 = arith.constant 0 : i32
    %c0_i32_0 = arith.constant 0 : i32
    %c0_i32_1 = arith.constant 0 : i32
    %c0_i32_2 = arith.constant 0 : i32
    return %c0_i32, %c0_i32_0, %c0_i32_1 : i32, i32, i32
  }
  func.func @transform_7(%arg0: i32) -> (i32, i32, i32) {
    %c0_i32 = arith.constant 0 : i32
    %c0_i32_0 = arith.constant 0 : i32
    %c0_i32_1 = arith.constant 0 : i32
    %c0_i32_2 = arith.constant 0 : i32
    return %c0_i32, %c0_i32_0, %c0_i32_1 : i32, i32, i32
  }
  func.func @transform_8(%arg0: i32) -> (i32, i32, i32) {
    %c0_i32 = arith.constant 0 : i32
    %c0_i32_0 = arith.constant 0 : i32
    %c0_i32_1 = arith.constant 0 : i32
    %c0_i32_2 = arith.constant 0 : i32
    return %c0_i32, %c0_i32_0, %c0_i32_1 : i32, i32, i32
  }
  func.func @transform_9(%arg0: i32) -> (i32, i32, i32) {
    %c0_i32 = arith.constant 0 : i32
    %c0_i32_0 = arith.constant 0 : i32
    %c0_i32_1 = arith.constant 0 : i32
    %c0_i32_2 = arith.constant 0 : i32
    return %c0_i32, %c0_i32_0, %c0_i32_1 : i32, i32, i32
  }
  func.func @transform_10(%arg0: i32) -> (i32, i32, i32) {
    %c0_i32 = arith.constant 0 : i32
    %c0_i32_0 = arith.constant 0 : i32
    %c0_i32_1 = arith.constant 0 : i32
    %c0_i32_2 = arith.constant 0 : i32
    return %c0_i32, %c0_i32_0, %c0_i32_1 : i32, i32, i32
  }
  func.func @transform_11(%arg0: i32) -> (i32, i32, i32) {
    %c0_i32 = arith.constant 0 : i32
    %c0_i32_0 = arith.constant 0 : i32
    %c0_i32_1 = arith.constant 0 : i32
    %c0_i32_2 = arith.constant 0 : i32
    return %c0_i32, %c0_i32_0, %c0_i32_1 : i32, i32, i32
  }
  func.func @transform_12(%arg0: i32) -> (i32, i32, i32) {
    %c0_i32 = arith.constant 0 : i32
    %c0_i32_0 = arith.constant 0 : i32
    %c0_i32_1 = arith.constant 0 : i32
    %c0_i32_2 = arith.constant 0 : i32
    return %c0_i32, %c0_i32_0, %c0_i32_1 : i32, i32, i32
  }
  func.func @transform_13(%arg0: i32) -> (i32, i32, i32) {
    %c0_i32 = arith.constant 0 : i32
    %c0_i32_0 = arith.constant 0 : i32
    %c0_i32_1 = arith.constant 0 : i32
    %c0_i32_2 = arith.constant 0 : i32
    return %c0_i32, %c0_i32_0, %c0_i32_1 : i32, i32, i32
  }
  func.func @transform_14(%arg0: i32) -> (i32, i32, i32) {
    %c0_i32 = arith.constant 0 : i32
    %c0_i32_0 = arith.constant 0 : i32
    %c0_i32_1 = arith.constant 0 : i32
    %c0_i32_2 = arith.constant 0 : i32
    return %c0_i32, %c0_i32_0, %c0_i32_1 : i32, i32, i32
  }
  func.func @transform_15(%arg0: i32) -> (i32, i32, i32) {
    %c0_i32 = arith.constant 0 : i32
    %c0_i32_0 = arith.constant 0 : i32
    %c0_i32_1 = arith.constant 0 : i32
    %c0_i32_2 = arith.constant 0 : i32
    return %c0_i32, %c0_i32_0, %c0_i32_1 : i32, i32, i32
  }
  func.func @transform_16(%arg0: i32) -> (i32, i32, i32) {
    %c0_i32 = arith.constant 0 : i32
    %c0_i32_0 = arith.constant 0 : i32
    %c0_i32_1 = arith.constant 0 : i32
    %c0_i32_2 = arith.constant 0 : i32
    return %c0_i32, %c0_i32_0, %c0_i32_1 : i32, i32, i32
  }
  func.func @transform_17(%arg0: i32) -> (i32, i32, i32) {
    %c0_i32 = arith.constant 0 : i32
    %c0_i32_0 = arith.constant 0 : i32
    %c0_i32_1 = arith.constant 0 : i32
    %c0_i32_2 = arith.constant 0 : i32
    return %c0_i32, %c0_i32_0, %c0_i32_1 : i32, i32, i32
  }
  func.func @transform_18(%arg0: i32) -> (i32, i32, i32) {
    %c0_i32 = arith.constant 0 : i32
    %c0_i32_0 = arith.constant 0 : i32
    %c0_i32_1 = arith.constant 0 : i32
    %c0_i32_2 = arith.constant 0 : i32
    return %c0_i32, %c0_i32_0, %c0_i32_1 : i32, i32, i32
  }
  func.func @transform_19(%arg0: i32) -> (i32, i32, i32) {
    %c0_i32 = arith.constant 0 : i32
    %c0_i32_0 = arith.constant 0 : i32
    %c0_i32_1 = arith.constant 0 : i32
    %c0_i32_2 = arith.constant 0 : i32
    return %c0_i32, %c0_i32_0, %c0_i32_1 : i32, i32, i32
  }
  func.func @transform_20(%arg0: i32) -> (i32, i32) {
    %c0_i32 = arith.constant 0 : i32
    %c0_i32_0 = arith.constant 0 : i32
    %c0_i32_1 = arith.constant 0 : i32
    return %c0_i32, %c0_i32_0 : i32, i32
  }
  func.func @transform_21(%arg0: i32) -> (i32, i32) {
    %c0_i32 = arith.constant 0 : i32
    %c0_i32_0 = arith.constant 0 : i32
    %c0_i32_1 = arith.constant 0 : i32
    return %c0_i32, %c0_i32_0 : i32, i32
  }
  func.func @transform_22(%arg0: i32) -> (i32, i32) {
    %c0_i32 = arith.constant 0 : i32
    %c0_i32_0 = arith.constant 0 : i32
    %c0_i32_1 = arith.constant 0 : i32
    return %c0_i32, %c0_i32_0 : i32, i32
  }
  func.func @transform_23(%arg0: i32) -> (i32, i32) {
    %c0_i32 = arith.constant 0 : i32
    %c0_i32_0 = arith.constant 0 : i32
    %c0_i32_1 = arith.constant 0 : i32
    return %c0_i32, %c0_i32_0 : i32, i32
  }
  func.func @transform_24(%arg0: i32) -> (i32, i32) {
    %c0_i32 = arith.constant 0 : i32
    %c0_i32_0 = arith.constant 0 : i32
    return %arg0, %c0_i32 : i32, i32
  }
  func.func @transform_25(%arg0: i32) -> (i32, i32) {
    %c0_i32 = arith.constant 0 : i32
    %c0_i32_0 = arith.constant 0 : i32
    return %arg0, %c0_i32 : i32, i32
  }
}

</mosaic_0001>

<llo_original>
// kernel: tpu_custom_call.1
$region0: #{tpu_custom_call.1}
  #allocation0 [shape = 'u32[]', space=smem, size = 0x4, offset = 0x4, fixed_abs, tag = 'smem constant byte address 0x4 - core index']
  #allocation1 [shape = 'u32[72,128]{1,0:T(1,128)}', space=vmem, size = 0x9000, scoped, tag = 'internal scratch']
  %s0 = inlined_call_operand.hbm [shape: f32[16,128], index: 0, kind: input, shape index: {}]
  %s1 = inlined_call_operand.hbm [shape: f32[2,1,8], index: 1, kind: input, shape index: {}]
  %s2 = inlined_call_operand.hbm [shape: f32[1,128], index: 2, kind: input, shape index: {}]
  %s3 = inlined_call_operand.hbm [shape: f32[1,128], index: 3, kind: input, shape index: {}]
  %s4 = inlined_call_operand.hbm [shape: bf16[2,128,512], index: 4, kind: input, shape index: {}]
  %s5 = inlined_call_operand.hbm [shape: f32[2,1,512], index: 5, kind: input, shape index: {}]
  %s6 = inlined_call_operand.hbm [shape: bf16[2,128,512], index: 6, kind: input, shape index: {}]
  %s7 = inlined_call_operand.hbm [shape: f32[2,1,512], index: 7, kind: input, shape index: {}]
  %s8 = inlined_call_operand.hbm [shape: bf16[2,128,512], index: 8, kind: input, shape index: {}]
  %s9 = inlined_call_operand.vmem [shape: f32[2,1,512], index: 9, kind: input, shape index: {}]
  %s10 = inlined_call_operand.hbm [shape: bf16[2,512,128], index: 10, kind: input, shape index: {}]
  %s11 = inlined_call_operand.vmem [shape: f32[2,1,128], index: 11, kind: input, shape index: {}]
  %s12 = inlined_call_operand.hbm [shape: bf16[2,128,128], index: 12, kind: input, shape index: {}]
  %s13 = inlined_call_operand.vmem [shape: f32[2,1,128], index: 13, kind: input, shape index: {}]
  %s14 = inlined_call_operand.hbm [shape: bf16[2,128,128], index: 14, kind: input, shape index: {}]
  %s15 = inlined_call_operand.vmem [shape: f32[2,1,128], index: 15, kind: input, shape index: {}]
  %s16 = inlined_call_operand.hbm [shape: f32[2,1,128], index: 16, kind: input, shape index: {}]
  %s17 = inlined_call_operand.vmem [shape: f32[2,1,128], index: 17, kind: input, shape index: {}]
  %s18 = inlined_call_operand.hbm [shape: f32[2,1,128], index: 18, kind: input, shape index: {}]
  %s19 = inlined_call_operand.vmem [shape: f32[2,1,128], index: 19, kind: input, shape index: {}]
  %s20 = inlined_call_operand.hbm [shape: bf16[128,128], index: 20, kind: input, shape index: {}]
  %s21 = inlined_call_operand.vmem [shape: f32[1,128], index: 21, kind: input, shape index: {}]
  %s22 = inlined_call_operand.hbm [shape: bf16[128,128], index: 22, kind: input, shape index: {}]
  %s23 = inlined_call_operand.vmem [shape: f32[1,128], index: 23, kind: input, shape index: {}]
  %s24 = inlined_call_operand.hbm [shape: f32[16,128], index: 24, kind: output, shape index: {0}]
  %s25 = inlined_call_operand.hbm [shape: f32[16,128], index: 25, kind: output, shape index: {1}]
  %26 = xla_tuple %s24, %s25
  %s27 = sld [smem:[#allocation0]]
  $region201: #{tpu_custom_call.1} parent=0
    _
  %s29 = ssub.s32 1, %s27
  %s30 = scalar_select 0, %s29, %s27
  $region1: #{tpu_custom_call.1} parent=0
    #allocation2 [shape = 'u8[8192]{0}', space=vmem, size = 0x2000, scoped, tag = 'input window, operand 0']
    #allocation3 [shape = 's32[2]{0}', space=sflag, size = 0x8, scoped, tag = 'scoped memory for tpu_custom_call.1']
    #allocation4 [shape = 's32[2]{0}', space=sflag, size = 0x8, scoped, tag = 'scoped memory for tpu_custom_call.1']
    #allocation5 [shape = 'u8[1024]{0}', space=vmem, size = 0x400, scoped, tag = 'input window, operand 1']
    #allocation6 [shape = 's32[2]{0}', space=sflag, size = 0x8, scoped, tag = 'scoped memory for tpu_custom_call.1']
    #allocation7 [shape = 'u8[512]{0}', space=vmem, size = 0x400, scoped, tag = 'input window, operand 2, single buffered']
    #allocation8 [shape = 'u8[512]{0}', space=vmem, size = 0x400, scoped, tag = 'input window, operand 3, single buffered']
    #allocation9 [shape = 's32[1]{0}', space=sflag, size = 0x4, scoped, tag = 'scoped memory for tpu_custom_call.1']
    #allocation10 [shape = 'u8[262144]{0}', space=vmem, size = 0x40000, scoped, tag = 'input window, operand 4, single buffered']
    #allocation11 [shape = 'u8[4096]{0}', space=vmem, size = 0x1000, scoped, tag = 'input window, operand 5, single buffered']
    #allocation12 [shape = 's32[1]{0}', space=sflag, size = 0x4, scoped, tag = 'scoped memory for tpu_custom_call.1']
    #allocation13 [shape = 'u8[262144]{0}', space=vmem, size = 0x40000, scoped, tag = 'input window, operand 6, single buffered']
    #allocation14 [shape = 'u8[4096]{0}', space=vmem, size = 0x1000, scoped, tag = 'input window, operand 7, single buffered']
    #allocation15 [shape = 's32[1]{0}', space=sflag, size = 0x4, scoped, tag = 'scoped memory for tpu_custom_call.1']
    #allocation16 [shape = 'u8[262144]{0}', space=vmem, size = 0x40000, scoped, tag = 'input window, operand 8, single buffered']
    #allocation17 [shape = 'u8[262144]{0}', space=vmem, size = 0x40000, scoped, tag = 'input window, operand 10, single buffered']
    #allocation18 [shape = 's32[1]{0}', space=sflag, size = 0x4, scoped, tag = 'scoped memory for tpu_custom_call.1']
    #allocation19 [shape = 'u8[65536]{0}', space=vmem, size = 0x10000, scoped, tag = 'input window, operand 12, single buffered']
    #allocation20 [shape = 'u8[65536]{0}', space=vmem, size = 0x10000, scoped, tag = 'input window, operand 14, single buffered']
    #allocation21 [shape = 's32[1]{0}', space=sflag, size = 0x4, scoped, tag = 'scoped memory for tpu_custom_call.1']
    #allocation22 [shape = 'u8[1024]{0}', space=vmem, size = 0x400, scoped, tag = 'input window, operand 16, single buffered']
    #allocation23 [shape = 'u8[1024]{0}', space=vmem, size = 0x400, scoped, tag = 'input window, operand 18, single buffered']
    #allocation24 [shape = 's32[1]{0}', space=sflag, size = 0x4, scoped, tag = 'scoped memory for tpu_custom_call.1']
    #allocation25 [shape = 'u8[32768]{0}', space=vmem, size = 0x8000, scoped, tag = 'input window, operand 20, single buffered']
    #allocation26 [shape = 'u8[32768]{0}', space=vmem, size = 0x8000, scoped, tag = 'input window, operand 22, single buffered']
    #allocation27 [shape = 's32[1]{0}', space=sflag, size = 0x4, scoped, tag = 'scoped memory for tpu_custom_call.1']
    #allocation28 [shape = 'u8[8192]{0}', space=vmem, size = 0x2000, scoped, tag = 'output window, operand 0']
    #allocation29 [shape = 'u8[8192]{0}', space=vmem, size = 0x2000, scoped, tag = 'output window, operand 1']
    #allocation30 [shape = 's32[2]{0}', space=sflag, size = 0x8, scoped, tag = 'scoped memory for tpu_custom_call.1']
    %31 = vsyncpa [#allocation3], 0
    %s32 = scalar_lea.sflag [#allocation3], 1
    %33 = vsyncpa %s32, 0
    %34 = vsyncpa [#allocation6], 0
    %s35 = scalar_lea.sflag [#allocation6], 1
    %36 = vsyncpa %s35, 0
    %37 = vsyncpa [#allocation9], 0
    %38 = vsyncpa [#allocation12], 0
    %39 = vsyncpa [#allocation15], 0
    %40 = vsyncpa [#allocation18], 0
    %41 = vsyncpa [#allocation21], 0
    %42 = vsyncpa [#allocation24], 0
    %43 = vsyncpa [#allocation27], 0
    %44 = vsyncpa [#allocation4], 0
    %s45 = scalar_lea.sflag [#allocation4], 1
    %46 = vsyncpa %s45, 0
    %47 = vsyncpa [#allocation30], 0
    %s48 = scalar_lea.sflag [#allocation30], 1
    %49 = vsyncpa %s48, 0
    loop: start=0, step=1, limit=4
    $region2: #{tpu_custom_call.1} parent=1 // loop_pre_header
      _
    $region3: #{tpu_custom_call.1} parent=1 // loop_header
      %s51 = sphi 0, %s55
      %p52 = scmp.ge.s32.totalorder %s51, 4
      %s61 = sphi 0, %s63
      %s64 = sphi 0, %s61
      %s65 = sphi 0, %s64
      %s81 = sphi 0, %s65
      %s87 = sphi 0, %s89
      %s90 = sphi 0, %s87
      %s91 = sphi 0, %s90
      %s107 = sphi 0, %s91
      %s111 = sphi 0, %s111
      %s113 = sphi 0, %s111
      %s114 = sphi 0, %s113
      %s128 = sphi 0, %s114
      %s132 = sphi 0, %s132
      %s134 = sphi 0, %s132
      %s135 = sphi 0, %s134
      %s149 = sphi 0, %s135
      %s153 = sphi 0, %s153
      %s155 = sphi 0, %s153
      %s156 = sphi 0, %s155
      %s170 = sphi 0, %s156
      %s174 = sphi 0, %s174
      %s176 = sphi 0, %s174
      %s177 = sphi 0, %s176
      %s191 = sphi 0, %s177
      %s195 = sphi 0, %s195
      %s197 = sphi 0, %s195
      %s198 = sphi 0, %s197
      %s212 = sphi 0, %s198
      %s216 = sphi 0, %s216
      %s218 = sphi 0, %s216
      %s219 = sphi 0, %s218
      %s233 = sphi 0, %s219
      %s237 = sphi 0, %s237
      %s239 = sphi 0, %s237
      %s240 = sphi 0, %s239
      %s254 = sphi 0, %s240
      %s258 = sphi 0, %s258
      %s260 = sphi 0, %s258
      %s261 = sphi 0, %s260
      %s275 = sphi 0, %s261
      %s279 = sphi 0, %s279
      %s281 = sphi 0, %s279
      %s282 = sphi 0, %s281
      %s296 = sphi 0, %s282
      %s300 = sphi 0, %s300
      %s302 = sphi 0, %s300
      %s303 = sphi 0, %s302
      %s317 = sphi 0, %s303
      %s321 = sphi 0, %s321
      %s323 = sphi 0, %s321
      %s324 = sphi 0, %s323
      %s338 = sphi 0, %s324
      %s342 = sphi 0, %s342
      %s344 = sphi 0, %s342
      %s345 = sphi 0, %s344
      %s359 = sphi 0, %s345
      %s363 = sphi 0, %s363
      %s365 = sphi 0, %s363
      %s366 = sphi 0, %s365
      %s380 = sphi 0, %s366
      %s384 = sphi 0, %s384
      %s386 = sphi 0, %s384
      %s387 = sphi 0, %s386
      %s401 = sphi 0, %s387
      %s405 = sphi 0, %s405
      %s407 = sphi 0, %s405
      %s408 = sphi 0, %s407
      %s422 = sphi 0, %s408
      %s426 = sphi 0, %s426
      %s428 = sphi 0, %s426
      %s429 = sphi 0, %s428
      %s443 = sphi 0, %s429
      %s447 = sphi 0, %s447
      %s449 = sphi 0, %s447
      %s450 = sphi 0, %s449
      %s464 = sphi 0, %s450
      %s468 = sphi 0, %s468
      %s470 = sphi 0, %s468
      %s471 = sphi 0, %s470
      %s485 = sphi 0, %s471
      %s489 = sphi 0, %s489
      %s491 = sphi 0, %s489
      %s492 = sphi 0, %s491
      %s506 = sphi 0, %s492
      %s510 = sphi 0, %s510
      %s512 = sphi 0, %s510
      %s513 = sphi 0, %s512
      %s527 = sphi 0, %s513
      %s531 = sphi 0, %s531
      %s533 = sphi 0, %s531
      %s534 = sphi 0, %s533
      %s548 = sphi 0, %s534
      %s552 = sphi 0, %s552
      %s554 = sphi 0, %s552
      %s555 = sphi 0, %s554
      %s569 = sphi 0, %s555
      %s575 = sphi 0, %s577
      %s578 = sphi 0, %s575
      %s579 = sphi 0, %s578
      %s595 = sphi 0, %s579
      %s601 = sphi 0, %s603
      %s604 = sphi 0, %s601
      %s605 = sphi 0, %s604
      %s621 = sphi 0, %s605
    $region4: #{tpu_custom_call.1} parent=1 // loop_header_branch
      %54 = sbr.rel (%p52) target = $region8
    $region5: #{tpu_custom_call.1} parent=1 // loop_body
      %s56 = ssub.s32 %s51, 1
      %s57 = ssub.s32 %s51, 2
      %s58 = sadd.s32 %s51, 1
      %s59 = ssub.s32 %s51, %s58
      %p60 = scmp.eq.s32.totalorder %s59, 0
      %s62 = sadd.s32 %s61, 1
      %s63 = scalar_select %p60, %s61, %s62
      %p66 = pneg %p60
      %p67 = scmp.eq.s32.totalorder %s51, 1
      %p68 = por %p66, %p67
      %p69 = scmp.ne.s32.totalorder %s61, %s64
      %p70 = scmp.eq.s32.totalorder %s51, 0
      %p71 = por %p69, %p70
      %p72 = scmp.ne.s32.totalorder %s61, %s64
      %p73 = scmp.eq.s32.totalorder %s56, 1
      %p74 = por %p72, %p73
      %p75 = scmp.ne.s32.totalorder %s64, %s65
      %p76 = scmp.eq.s32.totalorder %s56, 0
      %p77 = por %p75, %p76
      %p78 = scmp.ne.s32.totalorder %s64, %s65
      %p79 = scmp.eq.s32.totalorder %s57, 1
      %p80 = por %p78, %p79
      %p82 = scmp.ne.s32.totalorder %s65, %s81
      %p83 = scmp.eq.s32.totalorder %s57, 0
      %p84 = por %p82, %p83
      %s85 = ssub.s32 %s51, %s58
      %p86 = scmp.eq.s32.totalorder %s85, 0
      %s88 = sadd.s32 %s87, 1
      %s89 = scalar_select %p86, %s87, %s88
      %p92 = pneg %p86
      %p93 = scmp.eq.s32.totalorder %s51, 1
      %p94 = por %p92, %p93
      %p95 = scmp.ne.s32.totalorder %s87, %s90
      %p96 = scmp.eq.s32.totalorder %s51, 0
      %p97 = por %p95, %p96
      %p98 = scmp.ne.s32.totalorder %s87, %s90
      %p99 = scmp.eq.s32.totalorder %s56, 1
      %p100 = por %p98, %p99
      %p101 = scmp.ne.s32.totalorder %s90, %s91
      %p102 = scmp.eq.s32.totalorder %s56, 0
      %p103 = por %p101, %p102
      %p104 = scmp.ne.s32.totalorder %s90, %s91
      %p105 = scmp.eq.s32.totalorder %s57, 1
      %p106 = por %p104, %p105
      %p108 = scmp.ne.s32.totalorder %s91, %s107
      %p109 = scmp.eq.s32.totalorder %s57, 0
      %p110 = por %p108, %p109
      %s112 = sadd.s32 %s111, 1
      %p115 = scmp.eq.s32.totalorder %s51, 1
      %p116 = scmp.ne.s32.totalorder %s111, %s113
      %p117 = scmp.eq.s32.totalorder %s51, 0
      %p118 = por %p116, %p117
      %p119 = scmp.ne.s32.totalorder %s111, %s113
      %p120 = scmp.eq.s32.totalorder %s56, 1
      %p121 = por %p119, %p120
      %p122 = scmp.ne.s32.totalorder %s113, %s114
      %p123 = scmp.eq.s32.totalorder %s56, 0
      %p124 = por %p122, %p123
      %p125 = scmp.ne.s32.totalorder %s113, %s114
      %p126 = scmp.eq.s32.totalorder %s57, 1
      %p127 = por %p125, %p126
      %p129 = scmp.ne.s32.totalorder %s114, %s128
      %p130 = scmp.eq.s32.totalorder %s57, 0
      %p131 = por %p129, %p130
      %s133 = sadd.s32 %s132, 1
      %p136 = scmp.eq.s32.totalorder %s51, 1
      %p137 = scmp.ne.s32.totalorder %s132, %s134
      %p138 = scmp.eq.s32.totalorder %s51, 0
      %p139 = por %p137, %p138
      %p140 = scmp.ne.s32.totalorder %s132, %s134
      %p141 = scmp.eq.s32.totalorder %s56, 1
      %p142 = por %p140, %p141
      %p143 = scmp.ne.s32.totalorder %s134, %s135
      %p144 = scmp.eq.s32.totalorder %s56, 0
      %p145 = por %p143, %p144
      %p146 = scmp.ne.s32.totalorder %s134, %s135
      %p147 = scmp.eq.s32.totalorder %s57, 1
      %p148 = por %p146, %p147
      %p150 = scmp.ne.s32.totalorder %s135, %s149
      %p151 = scmp.eq.s32.totalorder %s57, 0
      %p152 = por %p150, %p151
      %s154 = sadd.s32 %s153, 1
      %p157 = scmp.eq.s32.totalorder %s51, 1
      %p158 = scmp.ne.s32.totalorder %s153, %s155
      %p159 = scmp.eq.s32.totalorder %s51, 0
      %p160 = por %p158, %p159
      %p161 = scmp.ne.s32.totalorder %s153, %s155
      %p162 = scmp.eq.s32.totalorder %s56, 1
      %p163 = por %p161, %p162
      %p164 = scmp.ne.s32.totalorder %s155, %s156
      %p165 = scmp.eq.s32.totalorder %s56, 0
      %p166 = por %p164, %p165
      %p167 = scmp.ne.s32.totalorder %s155, %s156
      %p168 = scmp.eq.s32.totalorder %s57, 1
      %p169 = por %p167, %p168
      %p171 = scmp.ne.s32.totalorder %s156, %s170
      %p172 = scmp.eq.s32.totalorder %s57, 0
      %p173 = por %p171, %p172
      %s175 = sadd.s32 %s174, 1
      %p178 = scmp.eq.s32.totalorder %s51, 1
      %p179 = scmp.ne.s32.totalorder %s174, %s176
      %p180 = scmp.eq.s32.totalorder %s51, 0
      %p181 = por %p179, %p180
      %p182 = scmp.ne.s32.totalorder %s174, %s176
      %p183 = scmp.eq.s32.totalorder %s56, 1
      %p184 = por %p182, %p183
      %p185 = scmp.ne.s32.totalorder %s176, %s177
      %p186 = scmp.eq.s32.totalorder %s56, 0
      %p187 = por %p185, %p186
      %p188 = scmp.ne.s32.totalorder %s176, %s177
      %p189 = scmp.eq.s32.totalorder %s57, 1
      %p190 = por %p188, %p189
      %p192 = scmp.ne.s32.totalorder %s177, %s191
      %p193 = scmp.eq.s32.totalorder %s57, 0
      %p194 = por %p192, %p193
      %s196 = sadd.s32 %s195, 1
      %p199 = scmp.eq.s32.totalorder %s51, 1
      %p200 = scmp.ne.s32.totalorder %s195, %s197
      %p201 = scmp.eq.s32.totalorder %s51, 0
      %p202 = por %p200, %p201
      %p203 = scmp.ne.s32.totalorder %s195, %s197
      %p204 = scmp.eq.s32.totalorder %s56, 1
      %p205 = por %p203, %p204
      %p206 = scmp.ne.s32.totalorder %s197, %s198
      %p207 = scmp.eq.s32.totalorder %s56, 0
      %p208 = por %p206, %p207
      %p209 = scmp.ne.s32.totalorder %s197, %s198
      %p210 = scmp.eq.s32.totalorder %s57, 1
      %p211 = por %p209, %p210
      %p213 = scmp.ne.s32.totalorder %s198, %s212
      %p214 = scmp.eq.s32.totalorder %s57, 0
      %p215 = por %p213, %p214
      %s217 = sadd.s32 %s216, 1
      %p220 = scmp.eq.s32.totalorder %s51, 1
      %p221 = scmp.ne.s32.totalorder %s216, %s218
      %p222 = scmp.eq.s32.totalorder %s51, 0
      %p223 = por %p221, %p222
      %p224 = scmp.ne.s32.totalorder %s216, %s218
      %p225 = scmp.eq.s32.totalorder %s56, 1
      %p226 = por %p224, %p225
      %p227 = scmp.ne.s32.totalorder %s218, %s219
      %p228 = scmp.eq.s32.totalorder %s56, 0
      %p229 = por %p227, %p228
      %p230 = scmp.ne.s32.totalorder %s218, %s219
      %p231 = scmp.eq.s32.totalorder %s57, 1
      %p232 = por %p230, %p231
      %p234 = scmp.ne.s32.totalorder %s219, %s233
      %p235 = scmp.eq.s32.totalorder %s57, 0
      %p236 = por %p234, %p235
      %s238 = sadd.s32 %s237, 1
      %p241 = scmp.eq.s32.totalorder %s51, 1
      %p242 = scmp.ne.s32.totalorder %s237, %s239
      %p243 = scmp.eq.s32.totalorder %s51, 0
      %p244 = por %p242, %p243
      %p245 = scmp.ne.s32.totalorder %s237, %s239
      %p246 = scmp.eq.s32.totalorder %s56, 1
      %p247 = por %p245, %p246
      %p248 = scmp.ne.s32.totalorder %s239, %s240
      %p249 = scmp.eq.s32.totalorder %s56, 0
      %p250 = por %p248, %p249
      %p251 = scmp.ne.s32.totalorder %s239, %s240
      %p252 = scmp.eq.s32.totalorder %s57, 1
      %p253 = por %p251, %p252
      %p255 = scmp.ne.s32.totalorder %s240, %s254
      %p256 = scmp.eq.s32.totalorder %s57, 0
      %p257 = por %p255, %p256
      %s259 = sadd.s32 %s258, 1
      %p262 = scmp.eq.s32.totalorder %s51, 1
      %p263 = scmp.ne.s32.totalorder %s258, %s260
      %p264 = scmp.eq.s32.totalorder %s51, 0
      %p265 = por %p263, %p264
      %p266 = scmp.ne.s32.totalorder %s258, %s260
      %p267 = scmp.eq.s32.totalorder %s56, 1
      %p268 = por %p266, %p267
      %p269 = scmp.ne.s32.totalorder %s260, %s261
      %p270 = scmp.eq.s32.totalorder %s56, 0
      %p271 = por %p269, %p270
      %p272 = scmp.ne.s32.totalorder %s260, %s261
      %p273 = scmp.eq.s32.totalorder %s57, 1
      %p274 = por %p272, %p273
      %p276 = scmp.ne.s32.totalorder %s261, %s275
      %p277 = scmp.eq.s32.totalorder %s57, 0
      %p278 = por %p276, %p277
      %s280 = sadd.s32 %s279, 1
      %p283 = scmp.eq.s32.totalorder %s51, 1
      %p284 = scmp.ne.s32.totalorder %s279, %s281
      %p285 = scmp.eq.s32.totalorder %s51, 0
      %p286 = por %p284, %p285
      %p287 = scmp.ne.s32.totalorder %s279, %s281
      %p288 = scmp.eq.s32.totalorder %s56, 1
      %p289 = por %p287, %p288
      %p290 = scmp.ne.s32.totalorder %s281, %s282
      %p291 = scmp.eq.s32.totalorder %s56, 0
      %p292 = por %p290, %p291
      %p293 = scmp.ne.s32.totalorder %s281, %s282
      %p294 = scmp.eq.s32.totalorder %s57, 1
      %p295 = por %p293, %p294
      %p297 = scmp.ne.s32.totalorder %s282, %s296
      %p298 = scmp.eq.s32.totalorder %s57, 0
      %p299 = por %p297, %p298
      %s301 = sadd.s32 %s300, 1
      %p304 = scmp.eq.s32.totalorder %s51, 1
      %p305 = scmp.ne.s32.totalorder %s300, %s302
      %p306 = scmp.eq.s32.totalorder %s51, 0
      %p307 = por %p305, %p306
      %p308 = scmp.ne.s32.totalorder %s300, %s302
      %p309 = scmp.eq.s32.totalorder %s56, 1
      %p310 = por %p308, %p309
      %p311 = scmp.ne.s32.totalorder %s302, %s303
      %p312 = scmp.eq.s32.totalorder %s56, 0
      %p313 = por %p311, %p312
      %p314 = scmp.ne.s32.totalorder %s302, %s303
      %p315 = scmp.eq.s32.totalorder %s57, 1
      %p316 = por %p314, %p315
      %p318 = scmp.ne.s32.totalorder %s303, %s317
      %p319 = scmp.eq.s32.totalorder %s57, 0
      %p320 = por %p318, %p319
      %s322 = sadd.s32 %s321, 1
      %p325 = scmp.eq.s32.totalorder %s51, 1
      %p326 = scmp.ne.s32.totalorder %s321, %s323
      %p327 = scmp.eq.s32.totalorder %s51, 0
      %p328 = por %p326, %p327
      %p329 = scmp.ne.s32.totalorder %s321, %s323
      %p330 = scmp.eq.s32.totalorder %s56, 1
      %p331 = por %p329, %p330
      %p332 = scmp.ne.s32.totalorder %s323, %s324
      %p333 = scmp.eq.s32.totalorder %s56, 0
      %p334 = por %p332, %p333
      %p335 = scmp.ne.s32.totalorder %s323, %s324
      %p336 = scmp.eq.s32.totalorder %s57, 1
      %p337 = por %p335, %p336
      %p339 = scmp.ne.s32.totalorder %s324, %s338
      %p340 = scmp.eq.s32.totalorder %s57, 0
      %p341 = por %p339, %p340
      %s343 = sadd.s32 %s342, 1
      %p346 = scmp.eq.s32.totalorder %s51, 1
      %p347 = scmp.ne.s32.totalorder %s342, %s344
      %p348 = scmp.eq.s32.totalorder %s51, 0
      %p349 = por %p347, %p348
      %p350 = scmp.ne.s32.totalorder %s342, %s344
      %p351 = scmp.eq.s32.totalorder %s56, 1
      %p352 = por %p350, %p351
      %p353 = scmp.ne.s32.totalorder %s344, %s345
      %p354 = scmp.eq.s32.totalorder %s56, 0
      %p355 = por %p353, %p354
      %p356 = scmp.ne.s32.totalorder %s344, %s345
      %p357 = scmp.eq.s32.totalorder %s57, 1
      %p358 = por %p356, %p357
      %p360 = scmp.ne.s32.totalorder %s345, %s359
      %p361 = scmp.eq.s32.totalorder %s57, 0
      %p362 = por %p360, %p361
      %s364 = sadd.s32 %s363, 1
      %p367 = scmp.eq.s32.totalorder %s51, 1
      %p368 = scmp.ne.s32.totalorder %s363, %s365
      %p369 = scmp.eq.s32.totalorder %s51, 0
      %p370 = por %p368, %p369
      %p371 = scmp.ne.s32.totalorder %s363, %s365
      %p372 = scmp.eq.s32.totalorder %s56, 1
      %p373 = por %p371, %p372
      %p374 = scmp.ne.s32.totalorder %s365, %s366
      %p375 = scmp.eq.s32.totalorder %s56, 0
      %p376 = por %p374, %p375
      %p377 = scmp.ne.s32.totalorder %s365, %s366
      %p378 = scmp.eq.s32.totalorder %s57, 1
      %p379 = por %p377, %p378
      %p381 = scmp.ne.s32.totalorder %s366, %s380
      %p382 = scmp.eq.s32.totalorder %s57, 0
      %p383 = por %p381, %p382
      %s385 = sadd.s32 %s384, 1
      %p388 = scmp.eq.s32.totalorder %s51, 1
      %p389 = scmp.ne.s32.totalorder %s384, %s386
      %p390 = scmp.eq.s32.totalorder %s51, 0
      %p391 = por %p389, %p390
      %p392 = scmp.ne.s32.totalorder %s384, %s386
      %p393 = scmp.eq.s32.totalorder %s56, 1
      %p394 = por %p392, %p393
      %p395 = scmp.ne.s32.totalorder %s386, %s387
      %p396 = scmp.eq.s32.totalorder %s56, 0
      %p397 = por %p395, %p396
      %p398 = scmp.ne.s32.totalorder %s386, %s387
      %p399 = scmp.eq.s32.totalorder %s57, 1
      %p400 = por %p398, %p399
      %p402 = scmp.ne.s32.totalorder %s387, %s401
      %p403 = scmp.eq.s32.totalorder %s57, 0
      %p404 = por %p402, %p403
      %s406 = sadd.s32 %s405, 1
      %p409 = scmp.eq.s32.totalorder %s51, 1
      %p410 = scmp.ne.s32.totalorder %s405, %s407
      %p411 = scmp.eq.s32.totalorder %s51, 0
      %p412 = por %p410, %p411
      %p413 = scmp.ne.s32.totalorder %s405, %s407
      %p414 = scmp.eq.s32.totalorder %s56, 1
      %p415 = por %p413, %p414
      %p416 = scmp.ne.s32.totalorder %s407, %s408
      %p417 = scmp.eq.s32.totalorder %s56, 0
      %p418 = por %p416, %p417
      %p419 = scmp.ne.s32.totalorder %s407, %s408
      %p420 = scmp.eq.s32.totalorder %s57, 1
      %p421 = por %p419, %p420
      %p423 = scmp.ne.s32.totalorder %s408, %s422
      %p424 = scmp.eq.s32.totalorder %s57, 0
      %p425 = por %p423, %p424
      %s427 = sadd.s32 %s426, 1
      %p430 = scmp.eq.s32.totalorder %s51, 1
      %p431 = scmp.ne.s32.totalorder %s426, %s428
      %p432 = scmp.eq.s32.totalorder %s51, 0
      %p433 = por %p431, %p432
      %p434 = scmp.ne.s32.totalorder %s426, %s428
      %p435 = scmp.eq.s32.totalorder %s56, 1
      %p436 = por %p434, %p435
      %p437 = scmp.ne.s32.totalorder %s428, %s429
      %p438 = scmp.eq.s32.totalorder %s56, 0
      %p439 = por %p437, %p438
      %p440 = scmp.ne.s32.totalorder %s428, %s429
      %p441 = scmp.eq.s32.totalorder %s57, 1
      %p442 = por %p440, %p441
      %p444 = scmp.ne.s32.totalorder %s429, %s443
      %p445 = scmp.eq.s32.totalorder %s57, 0
      %p446 = por %p444, %p445
      %s448 = sadd.s32 %s447, 1
      %p451 = scmp.eq.s32.totalorder %s51, 1
      %p452 = scmp.ne.s32.totalorder %s447, %s449
      %p453 = scmp.eq.s32.totalorder %s51, 0
      %p454 = por %p452, %p453
      %p455 = scmp.ne.s32.totalorder %s447, %s449
      %p456 = scmp.eq.s32.totalorder %s56, 1
      %p457 = por %p455, %p456
      %p458 = scmp.ne.s32.totalorder %s449, %s450
      %p459 = scmp.eq.s32.totalorder %s56, 0
      %p460 = por %p458, %p459
      %p461 = scmp.ne.s32.totalorder %s449, %s450
      %p462 = scmp.eq.s32.totalorder %s57, 1
      %p463 = por %p461, %p462
      %p465 = scmp.ne.s32.totalorder %s450, %s464
      %p466 = scmp.eq.s32.totalorder %s57, 0
      %p467 = por %p465, %p466
      %s469 = sadd.s32 %s468, 1
      %p472 = scmp.eq.s32.totalorder %s51, 1
      %p473 = scmp.ne.s32.totalorder %s468, %s470
      %p474 = scmp.eq.s32.totalorder %s51, 0
      %p475 = por %p473, %p474
      %p476 = scmp.ne.s32.totalorder %s468, %s470
      %p477 = scmp.eq.s32.totalorder %s56, 1
      %p478 = por %p476, %p477
      %p479 = scmp.ne.s32.totalorder %s470, %s471
      %p480 = scmp.eq.s32.totalorder %s56, 0
      %p481 = por %p479, %p480
      %p482 = scmp.ne.s32.totalorder %s470, %s471
      %p483 = scmp.eq.s32.totalorder %s57, 1
      %p484 = por %p482, %p483
      %p486 = scmp.ne.s32.totalorder %s471, %s485
      %p487 = scmp.eq.s32.totalorder %s57, 0
      %p488 = por %p486, %p487
      %s490 = sadd.s32 %s489, 1
      %p493 = scmp.eq.s32.totalorder %s51, 1
      %p494 = scmp.ne.s32.totalorder %s489, %s491
      %p495 = scmp.eq.s32.totalorder %s51, 0
      %p496 = por %p494, %p495
      %p497 = scmp.ne.s32.totalorder %s489, %s491
      %p498 = scmp.eq.s32.totalorder %s56, 1
      %p499 = por %p497, %p498
      %p500 = scmp.ne.s32.totalorder %s491, %s492
      %p501 = scmp.eq.s32.totalorder %s56, 0
      %p502 = por %p500, %p501
      %p503 = scmp.ne.s32.totalorder %s491, %s492
      %p504 = scmp.eq.s32.totalorder %s57, 1
      %p505 = por %p503, %p504
      %p507 = scmp.ne.s32.totalorder %s492, %s506
      %p508 = scmp.eq.s32.totalorder %s57, 0
      %p509 = por %p507, %p508
      %s511 = sadd.s32 %s510, 1
      %p514 = scmp.eq.s32.totalorder %s51, 1
      %p515 = scmp.ne.s32.totalorder %s510, %s512
      %p516 = scmp.eq.s32.totalorder %s51, 0
      %p517 = por %p515, %p516
      %p518 = scmp.ne.s32.totalorder %s510, %s512
      %p519 = scmp.eq.s32.totalorder %s56, 1
      %p520 = por %p518, %p519
      %p521 = scmp.ne.s32.totalorder %s512, %s513
      %p522 = scmp.eq.s32.totalorder %s56, 0
      %p523 = por %p521, %p522
      %p524 = scmp.ne.s32.totalorder %s512, %s513
      %p525 = scmp.eq.s32.totalorder %s57, 1
      %p526 = por %p524, %p525
      %p528 = scmp.ne.s32.totalorder %s513, %s527
      %p529 = scmp.eq.s32.totalorder %s57, 0
      %p530 = por %p528, %p529
      %s532 = sadd.s32 %s531, 1
      %p535 = scmp.eq.s32.totalorder %s51, 1
      %p536 = scmp.ne.s32.totalorder %s531, %s533
      %p537 = scmp.eq.s32.totalorder %s51, 0
      %p538 = por %p536, %p537
      %p539 = scmp.ne.s32.totalorder %s531, %s533
      %p540 = scmp.eq.s32.totalorder %s56, 1
      %p541 = por %p539, %p540
      %p542 = scmp.ne.s32.totalorder %s533, %s534
      %p543 = scmp.eq.s32.totalorder %s56, 0
      %p544 = por %p542, %p543
      %p545 = scmp.ne.s32.totalorder %s533, %s534
      %p546 = scmp.eq.s32.totalorder %s57, 1
      %p547 = por %p545, %p546
      %p549 = scmp.ne.s32.totalorder %s534, %s548
      %p550 = scmp.eq.s32.totalorder %s57, 0
      %p551 = por %p549, %p550
      %s553 = sadd.s32 %s552, 1
      %p556 = scmp.eq.s32.totalorder %s51, 1
      %p557 = scmp.ne.s32.totalorder %s552, %s554
      %p558 = scmp.eq.s32.totalorder %s51, 0
      %p559 = por %p557, %p558
      %p560 = scmp.ne.s32.totalorder %s552, %s554
      %p561 = scmp.eq.s32.totalorder %s56, 1
      %p562 = por %p560, %p561
      %p563 = scmp.ne.s32.totalorder %s554, %s555
      %p564 = scmp.eq.s32.totalorder %s56, 0
      %p565 = por %p563, %p564
      %p566 = scmp.ne.s32.totalorder %s554, %s555
      %p567 = scmp.eq.s32.totalorder %s57, 1
      %p568 = por %p566, %p567
      %p570 = scmp.ne.s32.totalorder %s555, %s569
      %p571 = scmp.eq.s32.totalorder %s57, 0
      %p572 = por %p570, %p571
      %s573 = ssub.s32 %s51, %s58
      %p574 = scmp.eq.s32.totalorder %s573, 0
      %s576 = sadd.s32 %s575, 1
      %s577 = scalar_select %p574, %s575, %s576
      %p580 = pneg %p574
      %p581 = scmp.eq.s32.totalorder %s51, 1
      %p582 = por %p580, %p581
      %p583 = scmp.ne.s32.totalorder %s575, %s578
      %p584 = scmp.eq.s32.totalorder %s51, 0
      %p585 = por %p583, %p584
      %p586 = scmp.ne.s32.totalorder %s575, %s578
      %p587 = scmp.eq.s32.totalorder %s56, 1
      %p588 = por %p586, %p587
      %p589 = scmp.ne.s32.totalorder %s578, %s579
      %p590 = scmp.eq.s32.totalorder %s56, 0
      %p591 = por %p589, %p590
      %p592 = scmp.ne.s32.totalorder %s578, %s579
      %p593 = scmp.eq.s32.totalorder %s57, 1
      %p594 = por %p592, %p593
      %p596 = scmp.ne.s32.totalorder %s579, %s595
      %p597 = scmp.eq.s32.totalorder %s57, 0
      %p598 = por %p596, %p597
      %s599 = ssub.s32 %s51, %s58
      %p600 = scmp.eq.s32.totalorder %s599, 0
      %s602 = sadd.s32 %s601, 1
      %s603 = scalar_select %p600, %s601, %s602
      %p606 = pneg %p600
      %p607 = scmp.eq.s32.totalorder %s51, 1
      %p608 = por %p606, %p607
      %p609 = scmp.ne.s32.totalorder %s601, %s604
      %p610 = scmp.eq.s32.totalorder %s51, 0
      %p611 = por %p609, %p610
      %p612 = scmp.ne.s32.totalorder %s601, %s604
      %p613 = scmp.eq.s32.totalorder %s56, 1
      %p614 = por %p612, %p613
      %p615 = scmp.ne.s32.totalorder %s604, %s605
      %p616 = scmp.eq.s32.totalorder %s56, 0
      %p617 = por %p615, %p616
      %p618 = scmp.ne.s32.totalorder %s604, %s605
      %p619 = scmp.eq.s32.totalorder %s57, 1
      %p620 = por %p618, %p619
      %p622 = scmp.ne.s32.totalorder %s605, %s621
      %p623 = scmp.eq.s32.totalorder %s57, 0
      %p624 = por %p622, %p623
      %p625 = scmp.le.s32.totalorder 1, %s51
      %p626 = scmp.lt.s32.totalorder %s51, 3
      %p627 = pnand %p625, %p626
      %p628 = pneg %p627
      // Predicated region
      $region9: #{tpu_custom_call.1} parent=5 // pred_check
        _
      $region10: #{tpu_custom_call.1} parent=5 // pred_check_branch
        %630 = sbr.rel (%p627) target = $region12
      $region11: #{tpu_custom_call.1} parent=5 // pred_region
        %s631 = ssub.s32 %s51, 1
        // Predicated region
        $region13: #{tpu_custom_call.1} parent=11 // pred_check
          %p632 = pneg %p124
        $region14: #{tpu_custom_call.1} parent=11 // pred_check_branch
          %634 = sbr.rel (%p632) target = $region16
        $region15: #{tpu_custom_call.1} parent=11 // pred_region
          %636 = vsyncadd [#allocation6], 0
          %s638 = sshll.u32 %s2, 4
          %s639 = int_to_ptr.hbm [resolvable:$true] %s638
          %s640 = sshll.u32 [#allocation7], 4
          %s641 = int_to_ptr.vmem [resolvable:$true] %s640
          %643 = dma.hbm_to_vmem [thread:$0]  %s639, 16, %s641, [#allocation6]
        $region16: #{tpu_custom_call.1} parent=11 // pred_fallthru
          _
        // Predicated region
        $region17: #{tpu_custom_call.1} parent=11 // pred_check
          %p644 = pneg %p145
        $region18: #{tpu_custom_call.1} parent=11 // pred_check_branch
          %646 = sbr.rel (%p644) target = $region20
        $region19: #{tpu_custom_call.1} parent=11 // pred_region
          %648 = vsyncadd [#allocation9], 0
          %s650 = sshll.u32 %s3, 4
          %s651 = int_to_ptr.hbm [resolvable:$true] %s650
          %s652 = sshll.u32 [#allocation8], 4
          %s653 = int_to_ptr.vmem [resolvable:$true] %s652
          %655 = dma.hbm_to_vmem [thread:$0]  %s651, 16, %s653, [#allocation9]
        $region20: #{tpu_custom_call.1} parent=11 // pred_fallthru
          _
        // Predicated region
        $region21: #{tpu_custom_call.1} parent=11 // pred_check
          %p656 = pneg %p166
        $region22: #{tpu_custom_call.1} parent=11 // pred_check_branch
          %658 = sbr.rel (%p656) target = $region24
        $region23: #{tpu_custom_call.1} parent=11 // pred_region
          %660 = vsyncadd [#allocation9], 0
          %s661 = sshll.u32 %s4, 4
          %s662 = int_to_ptr.hbm [resolvable:$true] %s661
          %s663 = sshll.u32 [#allocation10], 4
          %s664 = int_to_ptr.vmem [resolvable:$true] %s663
          %669 = dma.hbm_to_vmem [thread:$0]  %s662, 8192, %s664, [#allocation9], 256, 256, 16
        $region24: #{tpu_custom_call.1} parent=11 // pred_fallthru
          _
        // Predicated region
        $region25: #{tpu_custom_call.1} parent=11 // pred_check
          %p670 = pneg %p187
        $region26: #{tpu_custom_call.1} parent=11 // pred_check_branch
          %672 = sbr.rel (%p670) target = $region28
        $region27: #{tpu_custom_call.1} parent=11 // pred_region
          %674 = vsyncadd [#allocation12], 0
          %s675 = sshll.u32 %s5, 4
          %s676 = int_to_ptr.hbm [resolvable:$true] %s675
          %s677 = sshll.u32 [#allocation11], 4
          %s678 = int_to_ptr.vmem [resolvable:$true] %s677
          %683 = dma.hbm_to_vmem [thread:$0]  %s676, 128, %s678, [#allocation12], 64, 64, 4
        $region28: #{tpu_custom_call.1} parent=11 // pred_fallthru
          _
        // Predicated region
        $region29: #{tpu_custom_call.1} parent=11 // pred_check
          %p684 = pneg %p208
        $region30: #{tpu_custom_call.1} parent=11 // pred_check_branch
          %686 = sbr.rel (%p684) target = $region32
        $region31: #{tpu_custom_call.1} parent=11 // pred_region
          %688 = vsyncadd [#allocation12], 0
          %s689 = sshll.u32 %s6, 4
          %s690 = int_to_ptr.hbm [resolvable:$true] %s689
          %s691 = sshll.u32 [#allocation13], 4
          %s692 = int_to_ptr.vmem [resolvable:$true] %s691
          %697 = dma.hbm_to_vmem [thread:$0]  %s690, 8192, %s692, [#allocation12], 256, 256, 16
        $region32: #{tpu_custom_call.1} parent=11 // pred_fallthru
          _
        // Predicated region
        $region33: #{tpu_custom_call.1} parent=11 // pred_check
          %p698 = pneg %p229
        $region34: #{tpu_custom_call.1} parent=11 // pred_check_branch
          %700 = sbr.rel (%p698) target = $region36
        $region35: #{tpu_custom_call.1} parent=11 // pred_region
          %702 = vsyncadd [#allocation15], 0
          %s703 = sshll.u32 %s7, 4
          %s704 = int_to_ptr.hbm [resolvable:$true] %s703
          %s705 = sshll.u32 [#allocation14], 4
          %s706 = int_to_ptr.vmem [resolvable:$true] %s705
          %711 = dma.hbm_to_vmem [thread:$0]  %s704, 128, %s706, [#allocation15], 64, 64, 4
        $region36: #{tpu_custom_call.1} parent=11 // pred_fallthru
          _
        // Predicated region
        $region37: #{tpu_custom_call.1} parent=11 // pred_check
          %p712 = pneg %p250
        $region38: #{tpu_custom_call.1} parent=11 // pred_check_branch
          %714 = sbr.rel (%p712) target = $region40
        $region39: #{tpu_custom_call.1} parent=11 // pred_region
          %716 = vsyncadd [#allocation15], 0
          %s717 = sshll.u32 %s8, 4
          %s718 = int_to_ptr.hbm [resolvable:$true] %s717
          %s719 = sshll.u32 [#allocation16], 4
          %s720 = int_to_ptr.vmem [resolvable:$true] %s719
          %725 = dma.hbm_to_vmem [thread:$0]  %s718, 8192, %s720, [#allocation15], 256, 256, 16
        $region40: #{tpu_custom_call.1} parent=11 // pred_fallthru
          _
        // Predicated region
        $region41: #{tpu_custom_call.1} parent=11 // pred_check
          %p726 = pneg %p271
        $region42: #{tpu_custom_call.1} parent=11 // pred_check_branch
          %728 = sbr.rel (%p726) target = $region44
        $region43: #{tpu_custom_call.1} parent=11 // pred_region
          _
        $region44: #{tpu_custom_call.1} parent=11 // pred_fallthru
          _
        // Predicated region
        $region45: #{tpu_custom_call.1} parent=11 // pred_check
          %p729 = pneg %p292
        $region46: #{tpu_custom_call.1} parent=11 // pred_check_branch
          %731 = sbr.rel (%p729) target = $region48
        $region47: #{tpu_custom_call.1} parent=11 // pred_region
          %733 = vsyncadd [#allocation18], 0
          %s734 = sshll.u32 %s10, 4
          %s735 = int_to_ptr.hbm [resolvable:$true] %s734
          %s736 = sshll.u32 [#allocation17], 4
          %s737 = int_to_ptr.vmem [resolvable:$true] %s736
          %742 = dma.hbm_to_vmem [thread:$0]  %s735, 8192, %s737, [#allocation18], 64, 64, 4
        $region48: #{tpu_custom_call.1} parent=11 // pred_fallthru
          _
        // Predicated region
        $region49: #{tpu_custom_call.1} parent=11 // pred_check
          %p743 = pneg %p313
        $region50: #{tpu_custom_call.1} parent=11 // pred_check_branch
          %745 = sbr.rel (%p743) target = $region52
        $region51: #{tpu_custom_call.1} parent=11 // pred_region
          _
        $region52: #{tpu_custom_call.1} parent=11 // pred_fallthru
          _
        // Predicated region
        $region53: #{tpu_custom_call.1} parent=11 // pred_check
          %p746 = pneg %p334
        $region54: #{tpu_custom_call.1} parent=11 // pred_check_branch
          %748 = sbr.rel (%p746) target = $region56
        $region55: #{tpu_custom_call.1} parent=11 // pred_region
          %750 = vsyncadd [#allocation18], 0
          %s751 = sshll.u32 %s12, 4
          %s752 = int_to_ptr.hbm [resolvable:$true] %s751
          %s753 = sshll.u32 [#allocation19], 4
          %s754 = int_to_ptr.vmem [resolvable:$true] %s753
          %759 = dma.hbm_to_vmem [thread:$0]  %s752, 2048, %s754, [#allocation18], 64, 64, 4
        $region56: #{tpu_custom_call.1} parent=11 // pred_fallthru
          _
        // Predicated region
        $region57: #{tpu_custom_call.1} parent=11 // pred_check
          %p760 = pneg %p355
        $region58: #{tpu_custom_call.1} parent=11 // pred_check_branch
          %762 = sbr.rel (%p760) target = $region60
        $region59: #{tpu_custom_call.1} parent=11 // pred_region
          _
        $region60: #{tpu_custom_call.1} parent=11 // pred_fallthru
          _
        // Predicated region
        $region61: #{tpu_custom_call.1} parent=11 // pred_check
          %p763 = pneg %p376
        $region62: #{tpu_custom_call.1} parent=11 // pred_check_branch
          %765 = sbr.rel (%p763) target = $region64
        $region63: #{tpu_custom_call.1} parent=11 // pred_region
          %767 = vsyncadd [#allocation21], 0
          %s768 = sshll.u32 %s14, 4
          %s769 = int_to_ptr.hbm [resolvable:$true] %s768
          %s770 = sshll.u32 [#allocation20], 4
          %s771 = int_to_ptr.vmem [resolvable:$true] %s770
          %776 = dma.hbm_to_vmem [thread:$0]  %s769, 2048, %s771, [#allocation21], 64, 64, 4
        $region64: #{tpu_custom_call.1} parent=11 // pred_fallthru
          _
        // Predicated region
        $region65: #{tpu_custom_call.1} parent=11 // pred_check
          %p777 = pneg %p397
        $region66: #{tpu_custom_call.1} parent=11 // pred_check_branch
          %779 = sbr.rel (%p777) target = $region68
        $region67: #{tpu_custom_call.1} parent=11 // pred_region
          _
        $region68: #{tpu_custom_call.1} parent=11 // pred_fallthru
          _
        // Predicated region
        $region69: #{tpu_custom_call.1} parent=11 // pred_check
          %p780 = pneg %p418
        $region70: #{tpu_custom_call.1} parent=11 // pred_check_branch
          %782 = sbr.rel (%p780) target = $region72
        $region71: #{tpu_custom_call.1} parent=11 // pred_region
          %784 = vsyncadd [#allocation21], 0
          %s785 = sshll.u32 %s16, 4
          %s786 = int_to_ptr.hbm [resolvable:$true] %s785
          %s787 = sshll.u32 [#allocation22], 4
          %s788 = int_to_ptr.vmem [resolvable:$true] %s787
          %793 = dma.hbm_to_vmem [thread:$0]  %s786, 32, %s788, [#allocation21], 16, 16, 1
        $region72: #{tpu_custom_call.1} parent=11 // pred_fallthru
          _
        // Predicated region
        $region73: #{tpu_custom_call.1} parent=11 // pred_check
          %p794 = pneg %p439
        $region74: #{tpu_custom_call.1} parent=11 // pred_check_branch
          %796 = sbr.rel (%p794) target = $region76
        $region75: #{tpu_custom_call.1} parent=11 // pred_region
          _
        $region76: #{tpu_custom_call.1} parent=11 // pred_fallthru
          _
        // Predicated region
        $region77: #{tpu_custom_call.1} parent=11 // pred_check
          %p797 = pneg %p460
        $region78: #{tpu_custom_call.1} parent=11 // pred_check_branch
          %799 = sbr.rel (%p797) target = $region80
        $region79: #{tpu_custom_call.1} parent=11 // pred_region
          %801 = vsyncadd [#allocation24], 0
          %s802 = sshll.u32 %s18, 4
          %s803 = int_to_ptr.hbm [resolvable:$true] %s802
          %s804 = sshll.u32 [#allocation23], 4
          %s805 = int_to_ptr.vmem [resolvable:$true] %s804
          %810 = dma.hbm_to_vmem [thread:$0]  %s803, 32, %s805, [#allocation24], 16, 16, 1
        $region80: #{tpu_custom_call.1} parent=11 // pred_fallthru
          _
        // Predicated region
        $region81: #{tpu_custom_call.1} parent=11 // pred_check
          %p811 = pneg %p481
        $region82: #{tpu_custom_call.1} parent=11 // pred_check_branch
          %813 = sbr.rel (%p811) target = $region84
        $region83: #{tpu_custom_call.1} parent=11 // pred_region
          _
        $region84: #{tpu_custom_call.1} parent=11 // pred_fallthru
          _
        // Predicated region
        $region85: #{tpu_custom_call.1} parent=11 // pred_check
          %p814 = pneg %p502
        $region86: #{tpu_custom_call.1} parent=11 // pred_check_branch
          %816 = sbr.rel (%p814) target = $region88
        $region87: #{tpu_custom_call.1} parent=11 // pred_region
          %818 = vsyncadd [#allocation24], 0
          %s819 = sshll.u32 %s20, 4
          %s820 = int_to_ptr.hbm [resolvable:$true] %s819
          %s821 = sshll.u32 [#allocation25], 4
          %s822 = int_to_ptr.vmem [resolvable:$true] %s821
          %827 = dma.hbm_to_vmem [thread:$0]  %s820, 1024, %s822, [#allocation24], 64, 64, 4
        $region88: #{tpu_custom_call.1} parent=11 // pred_fallthru
          _
        // Predicated region
        $region89: #{tpu_custom_call.1} parent=11 // pred_check
          %p828 = pneg %p523
        $region90: #{tpu_custom_call.1} parent=11 // pred_check_branch
          %830 = sbr.rel (%p828) target = $region92
        $region91: #{tpu_custom_call.1} parent=11 // pred_region
          _
        $region92: #{tpu_custom_call.1} parent=11 // pred_fallthru
          _
        // Predicated region
        $region93: #{tpu_custom_call.1} parent=11 // pred_check
          %p831 = pneg %p544
        $region94: #{tpu_custom_call.1} parent=11 // pred_check_branch
          %833 = sbr.rel (%p831) target = $region96
        $region95: #{tpu_custom_call.1} parent=11 // pred_region
          %835 = vsyncadd [#allocation27], 0
          %s836 = sshll.u32 %s22, 4
          %s837 = int_to_ptr.hbm [resolvable:$true] %s836
          %s838 = sshll.u32 [#allocation26], 4
          %s839 = int_to_ptr.vmem [resolvable:$true] %s838
          %844 = dma.hbm_to_vmem [thread:$0]  %s837, 1024, %s839, [#allocation27], 64, 64, 4
        $region96: #{tpu_custom_call.1} parent=11 // pred_fallthru
          _
        // Predicated region
        $region97: #{tpu_custom_call.1} parent=11 // pred_check
          %p845 = pneg %p565
        $region98: #{tpu_custom_call.1} parent=11 // pred_check_branch
          %847 = sbr.rel (%p845) target = $region100
        $region99: #{tpu_custom_call.1} parent=11 // pred_region
          _
        $region100: #{tpu_custom_call.1} parent=11 // pred_fallthru
          _
      $region12: #{tpu_custom_call.1} parent=5 // pred_fallthru
        _
      %p848 = scmp.lt.s32.totalorder %s51, 2
      // Predicated region
      $region101: #{tpu_custom_call.1} parent=5 // pred_check
        %p849 = pneg %p848
      $region102: #{tpu_custom_call.1} parent=5 // pred_check_branch
        %851 = sbr.rel (%p849) target = $region104
      $region103: #{tpu_custom_call.1} parent=5 // pred_region
        // Predicated region
        $region105: #{tpu_custom_call.1} parent=103 // pred_check
          %p852 = pneg %p71
        $region106: #{tpu_custom_call.1} parent=103 // pred_check_branch
          %854 = sbr.rel (%p852) target = $region108
        $region107: #{tpu_custom_call.1} parent=103 // pred_region
          %s855 = sand.u32 %s61, 1
          %s856 = scalar_lea.sflag [#allocation3], %s855
          %s857 = sand.u32 %s61, 1
          %s858 = smul.addr %s857, 8
          %s859 = scalar_lea.vmem [#allocation2], %s858
          %861 = vsyncadd %s856, 0
          %s862 = smul.addr %s51, 8
          %s863 = scalar_lea.hbm %s0, %s862
          %s865 = sshll.u32 %s863, 4
          %s866 = int_to_ptr.hbm [resolvable:$true] %s865
          %s867 = sshll.u32 %s859, 4
          %s868 = int_to_ptr.vmem [resolvable:$true] %s867
          %870 = dma.hbm_to_vmem [thread:$0]  %s866, 128, %s868, %s856
        $region108: #{tpu_custom_call.1} parent=103 // pred_fallthru
          _
        // Predicated region
        $region109: #{tpu_custom_call.1} parent=103 // pred_check
          %p871 = pneg %p97
        $region110: #{tpu_custom_call.1} parent=103 // pred_check_branch
          %873 = sbr.rel (%p871) target = $region112
        $region111: #{tpu_custom_call.1} parent=103 // pred_region
          %s874 = sand.u32 %s51, 1
          %s875 = scalar_lea.sflag [#allocation6], %s874
          %s876 = sand.u32 %s87, 1
          %s877 = scalar_lea.vmem [#allocation5], %s876
          %879 = vsyncadd %s875, 0
          %s880 = scalar_lea.hbm %s1, %s51
          %s882 = sshll.u32 %s880, 4
          %s883 = int_to_ptr.hbm [resolvable:$true] %s882
          %s884 = sshll.u32 %s877, 4
          %s885 = int_to_ptr.vmem [resolvable:$true] %s884
          %887 = dma.hbm_to_vmem [thread:$0]  %s883, 16, %s885, %s875
        $region112: #{tpu_custom_call.1} parent=103 // pred_fallthru
          _
      $region104: #{tpu_custom_call.1} parent=5 // pred_fallthru
        _
      %p888 = scmp.le.s32.totalorder 1, %s51
      %p889 = scmp.lt.s32.totalorder %s51, 3
      %p890 = pnand %p888, %p889
      %p891 = pneg %p890
      // Predicated region
      $region113: #{tpu_custom_call.1} parent=5 // pred_check
        _
      $region114: #{tpu_custom_call.1} parent=5 // pred_check_branch
        %893 = sbr.rel (%p890) target = $region116
      $region115: #{tpu_custom_call.1} parent=5 // pred_region
        %s894 = ssub.s32 %s51, 1
        %s895 = sand.u32 %s64, 1
        %s896 = scalar_lea.sflag [#allocation3], %s895
        %s897 = sand.u32 %s64, 1
        %s898 = smul.addr %s897, 8
        %s899 = scalar_lea.vmem [#allocation2], %s898
        // Predicated region
        $region117: #{tpu_custom_call.1} parent=115 // pred_check
          %p900 = pneg %p77
        $region118: #{tpu_custom_call.1} parent=115 // pred_check_branch
          %902 = sbr.rel (%p900) target = $region120
        $region119: #{tpu_custom_call.1} parent=115 // pred_region
          %904 = dma.done %s896, 128
        $region120: #{tpu_custom_call.1} parent=115 // pred_fallthru
          _
        %s905 = sand.u32 %s56, 1
        %s906 = scalar_lea.sflag [#allocation6], %s905
        %s907 = sand.u32 %s90, 1
        %s908 = scalar_lea.vmem [#allocation5], %s907
        // Predicated region
        $region121: #{tpu_custom_call.1} parent=115 // pred_check
          %p909 = pneg %p103
        $region122: #{tpu_custom_call.1} parent=115 // pred_check_branch
          %911 = sbr.rel (%p909) target = $region124
        $region123: #{tpu_custom_call.1} parent=115 // pred_region
          %913 = dma.done %s906, 16
        $region124: #{tpu_custom_call.1} parent=115 // pred_fallthru
          _
        // Predicated region
        $region125: #{tpu_custom_call.1} parent=115 // pred_check
          %p914 = pneg %p124
        $region126: #{tpu_custom_call.1} parent=115 // pred_check_branch
          %916 = sbr.rel (%p914) target = $region128
        $region127: #{tpu_custom_call.1} parent=115 // pred_region
          %918 = dma.done [#allocation6], 16
        $region128: #{tpu_custom_call.1} parent=115 // pred_fallthru
          _
        // Predicated region
        $region129: #{tpu_custom_call.1} parent=115 // pred_check
          %p919 = pneg %p145
        $region130: #{tpu_custom_call.1} parent=115 // pred_check_branch
          %921 = sbr.rel (%p919) target = $region132
        $region131: #{tpu_custom_call.1} parent=115 // pred_region
          %923 = dma.done [#allocation9], 16
        $region132: #{tpu_custom_call.1} parent=115 // pred_fallthru
          _
        // Predicated region
        $region133: #{tpu_custom_call.1} parent=115 // pred_check
          %p924 = pneg %p166
        $region134: #{tpu_custom_call.1} parent=115 // pred_check_branch
          %926 = sbr.rel (%p924) target = $region136
        $region135: #{tpu_custom_call.1} parent=115 // pred_region
          %928 = dma.done [#allocation9], 8192
        $region136: #{tpu_custom_call.1} parent=115 // pred_fallthru
          _
        // Predicated region
        $region137: #{tpu_custom_call.1} parent=115 // pred_check
          %p929 = pneg %p187
        $region138: #{tpu_custom_call.1} parent=115 // pred_check_branch
          %931 = sbr.rel (%p929) target = $region140
        $region139: #{tpu_custom_call.1} parent=115 // pred_region
          %933 = dma.done [#allocation12], 128
        $region140: #{tpu_custom_call.1} parent=115 // pred_fallthru
          _
        // Predicated region
        $region141: #{tpu_custom_call.1} parent=115 // pred_check
          %p934 = pneg %p208
        $region142: #{tpu_custom_call.1} parent=115 // pred_check_branch
          %936 = sbr.rel (%p934) target = $region144
        $region143: #{tpu_custom_call.1} parent=115 // pred_region
          %938 = dma.done [#allocation12], 8192
        $region144: #{tpu_custom_call.1} parent=115 // pred_fallthru
          _
        // Predicated region
        $region145: #{tpu_custom_call.1} parent=115 // pred_check
          %p939 = pneg %p229
        $region146: #{tpu_custom_call.1} parent=115 // pred_check_branch
          %941 = sbr.rel (%p939) target = $region148
        $region147: #{tpu_custom_call.1} parent=115 // pred_region
          %943 = dma.done [#allocation15], 128
        $region148: #{tpu_custom_call.1} parent=115 // pred_fallthru
          _
        // Predicated region
        $region149: #{tpu_custom_call.1} parent=115 // pred_check
          %p944 = pneg %p250
        $region150: #{tpu_custom_call.1} parent=115 // pred_check_branch
          %946 = sbr.rel (%p944) target = $region152
        $region151: #{tpu_custom_call.1} parent=115 // pred_region
          %948 = dma.done [#allocation15], 8192
        $region152: #{tpu_custom_call.1} parent=115 // pred_fallthru
          _
        // Predicated region
        $region153: #{tpu_custom_call.1} parent=115 // pred_check
          %p949 = pneg %p292
        $region154: #{tpu_custom_call.1} parent=115 // pred_check_branch
          %951 = sbr.rel (%p949) target = $region156
        $region155: #{tpu_custom_call.1} parent=115 // pred_region
          %953 = dma.done [#allocation18], 8192
        $region156: #{tpu_custom_call.1} parent=115 // pred_fallthru
          _
        // Predicated region
        $region157: #{tpu_custom_call.1} parent=115 // pred_check
          %p954 = pneg %p334
        $region158: #{tpu_custom_call.1} parent=115 // pred_check_branch
          %956 = sbr.rel (%p954) target = $region160
        $region159: #{tpu_custom_call.1} parent=115 // pred_region
          %958 = dma.done [#allocation18], 2048
        $region160: #{tpu_custom_call.1} parent=115 // pred_fallthru
          _
        // Predicated region
        $region161: #{tpu_custom_call.1} parent=115 // pred_check
          %p959 = pneg %p376
        $region162: #{tpu_custom_call.1} parent=115 // pred_check_branch
          %961 = sbr.rel (%p959) target = $region164
        $region163: #{tpu_custom_call.1} parent=115 // pred_region
          %963 = dma.done [#allocation21], 2048
        $region164: #{tpu_custom_call.1} parent=115 // pred_fallthru
          _
        // Predicated region
        $region165: #{tpu_custom_call.1} parent=115 // pred_check
          %p964 = pneg %p418
        $region166: #{tpu_custom_call.1} parent=115 // pred_check_branch
          %966 = sbr.rel (%p964) target = $region168
        $region167: #{tpu_custom_call.1} parent=115 // pred_region
          %968 = dma.done [#allocation21], 32
        $region168: #{tpu_custom_call.1} parent=115 // pred_fallthru
          _
        // Predicated region
        $region169: #{tpu_custom_call.1} parent=115 // pred_check
          %p969 = pneg %p460
        $region170: #{tpu_custom_call.1} parent=115 // pred_check_branch
          %971 = sbr.rel (%p969) target = $region172
        $region171: #{tpu_custom_call.1} parent=115 // pred_region
          %973 = dma.done [#allocation24], 32
        $region172: #{tpu_custom_call.1} parent=115 // pred_fallthru
          _
        // Predicated region
        $region173: #{tpu_custom_call.1} parent=115 // pred_check
          %p974 = pneg %p502
        $region174: #{tpu_custom_call.1} parent=115 // pred_check_branch
          %976 = sbr.rel (%p974) target = $region176
        $region175: #{tpu_custom_call.1} parent=115 // pred_region
          %978 = dma.done [#allocation24], 1024
        $region176: #{tpu_custom_call.1} parent=115 // pred_fallthru
          _
        // Predicated region
        $region177: #{tpu_custom_call.1} parent=115 // pred_check
          %p979 = pneg %p544
        $region178: #{tpu_custom_call.1} parent=115 // pred_check_branch
          %981 = sbr.rel (%p979) target = $region180
        $region179: #{tpu_custom_call.1} parent=115 // pred_region
          %983 = dma.done [#allocation27], 1024
        $region180: #{tpu_custom_call.1} parent=115 // pred_fallthru
          _
        %s984 = sand.u32 %s64, 1
        %s985 = scalar_lea.sflag [#allocation3], %s984
        %s986 = sand.u32 %s64, 1
        %s987 = smul.addr %s986, 8
        %s988 = scalar_lea.vmem [#allocation2], %s987
        %p989 = pneg %p77
        %p990 = pneg %p74
        %s991 = sand.u32 %s56, 1
        %s992 = scalar_lea.sflag [#allocation6], %s991
        %s993 = sand.u32 %s90, 1
        %s994 = scalar_lea.vmem [#allocation5], %s993
        %p995 = pneg %p103
        %p996 = pneg %p100
        %p997 = pneg %p124
        %p998 = pneg %p121
        %p999 = pneg %p145
        %p1000 = pneg %p142
        %p1001 = pneg %p166
        %p1002 = pneg %p163
        %p1003 = pneg %p187
        %p1004 = pneg %p184
        %p1005 = pneg %p208
        %p1006 = pneg %p205
        %p1007 = pneg %p229
        %p1008 = pneg %p226
        %p1009 = pneg %p250
        %p1010 = pneg %p247
        %p1011 = pneg %p271
        %p1012 = pneg %p268
        %p1013 = pneg %p292
        %p1014 = pneg %p289
        %p1015 = pneg %p313
        %p1016 = pneg %p310
        %p1017 = pneg %p334
        %p1018 = pneg %p331
        %p1019 = pneg %p355
        %p1020 = pneg %p352
        %p1021 = pneg %p376
        %p1022 = pneg %p373
        %p1023 = pneg %p397
        %p1024 = pneg %p394
        %p1025 = pneg %p418
        %p1026 = pneg %p415
        %p1027 = pneg %p439
        %p1028 = pneg %p436
        %p1029 = pneg %p460
        %p1030 = pneg %p457
        %p1031 = pneg %p481
        %p1032 = pneg %p478
        %p1033 = pneg %p502
        %p1034 = pneg %p499
        %p1035 = pneg %p523
        %p1036 = pneg %p520
        %p1037 = pneg %p544
        %p1038 = pneg %p541
        %p1039 = pneg %p565
        %p1040 = pneg %p562
        %p1041 = pneg %p591
        %p1042 = pneg %p588
        %s1043 = sand.u32 %s578, 1
        %s1044 = scalar_lea.sflag [#allocation4], %s1043
        %s1045 = sand.u32 %s578, 1
        %s1046 = smul.addr %s1045, 8
        %s1047 = scalar_lea.vmem [#allocation28], %s1046
        %p1048 = pneg %p617
        %p1049 = pneg %p614
        %s1050 = sand.u32 %s604, 1
        %s1051 = scalar_lea.sflag [#allocation30], %s1050
        %s1052 = sand.u32 %s604, 1
        %s1053 = smul.addr %s1052, 8
        %s1054 = scalar_lea.vmem [#allocation29], %s1053
        %v1056 = vlaneseq
        %v1057 = vand.u32 %v1056, 127
        %vm1058 = vcmp.lt.s32.totalorder %v1057, 32
        %v1059 = vsel %vm1058, 1, 0
        %v1060 = vcvt.s32.f32 %v1059
        %v1061 = vld [vmem:[%s899] sm:$0xff]
        %v1062 = vld [vmem:[#allocation7] sm:$0x1]
        %v1063 = vld [vmem:[#allocation8] sm:$0x1]
        %v1064 = vmul.f32 %v1061, %v1060
        %1065 = vadd.xlane.f32.xlu0 %v1064
        %v1066 = vpop.xlane.xlu0 %1065
        %v1067 = vmul.f32 %v1066, 0.03125
        %v1068 = vsub.f32 %v1061, %v1067
        %v1069 = vmul.f32 %v1068, %v1060
        %v1070 = vmul.f32 %v1069, %v1069
        %1071 = vadd.xlane.f32.xlu0 %v1070
        %v1072 = vpop.xlane.xlu0 %1071
        %v1073 = vmul.f32 %v1072, 0.03125
        %v1074 = vadd.f32 %v1073, 1e-12
        %v1075 = vrsqrt.pop %v1074
        %v1076 = vmul.f32 %v1075, %v1074
        %v1077 = vmul.f32 %v1076, %v1075
        %v1078 = vmul.f32 0.5, %v1077
        %v1079 = vsub.f32 1.5, %v1078
        %v1080 = vmul.f32 %v1075, %v1079
        %vm1081 = vweird.f32 %v1074
        %vm1082 = vweird.f32 %v1075
        %vm1083 = vmor %vm1081, %vm1082
        %v1084 = vsel %vm1083, %v1075, %v1080
        %v1085 = vmul.f32 %v1069, %v1084
        %v1087 = vperm.slane %v1062, 0
        %v1089 = vmul.f32 %v1085, %v1087
        %v1091 = vperm.slane %v1063, 0
        %v1093 = vadd.f32 %v1089, %v1091
        %v1094 = vld [vmem:[%s908] sm:$0x1]
        %v1095 = vpack.c.bf16 %v1093, %v1093
        %v1096 = vld [vmem:[#allocation10] sm:$0xff]
        %v1097 = vld [vmem:[#allocation10 + $0x8] sm:$0xff]
        %v1098 = vld [vmem:[#allocation10 + $0x10] sm:$0xff]
        %v1099 = vld [vmem:[#allocation10 + $0x18] sm:$0xff]
        %v1100 = vld [vmem:[#allocation10 + $0x20] sm:$0xff]
        %v1101 = vld [vmem:[#allocation10 + $0x28] sm:$0xff]
        %v1102 = vld [vmem:[#allocation10 + $0x30] sm:$0xff]
        %v1103 = vld [vmem:[#allocation10 + $0x38] sm:$0xff]
        %v1104 = vld [vmem:[#allocation10 + $0x40] sm:$0xff]
        %v1105 = vld [vmem:[#allocation10 + $0x48] sm:$0xff]
        %v1106 = vld [vmem:[#allocation10 + $0x50] sm:$0xff]
        %v1107 = vld [vmem:[#allocation10 + $0x58] sm:$0xff]
        %v1108 = vld [vmem:[#allocation10 + $0x60] sm:$0xff]
        %v1109 = vld [vmem:[#allocation10 + $0x68] sm:$0xff]
        %v1110 = vld [vmem:[#allocation10 + $0x70] sm:$0xff]
        %v1111 = vld [vmem:[#allocation10 + $0x78] sm:$0xff]
        %v1112 = vld [vmem:[#allocation10 + $0x80] sm:$0xff]
        %v1113 = vld [vmem:[#allocation10 + $0x88] sm:$0xff]
        %v1114 = vld [vmem:[#allocation10 + $0x90] sm:$0xff]
        %v1115 = vld [vmem:[#allocation10 + $0x98] sm:$0xff]
        %v1116 = vld [vmem:[#allocation10 + $0xa0] sm:$0xff]
        %v1117 = vld [vmem:[#allocation10 + $0xa8] sm:$0xff]
        %v1118 = vld [vmem:[#allocation10 + $0xb0] sm:$0xff]
        %v1119 = vld [vmem:[#allocation10 + $0xb8] sm:$0xff]
        %v1120 = vld [vmem:[#allocation10 + $0xc0] sm:$0xff]
        %v1121 = vld [vmem:[#allocation10 + $0xc8] sm:$0xff]
        %v1122 = vld [vmem:[#allocation10 + $0xd0] sm:$0xff]
        %v1123 = vld [vmem:[#allocation10 + $0xd8] sm:$0xff]
        %v1124 = vld [vmem:[#allocation10 + $0xe0] sm:$0xff]
        %v1125 = vld [vmem:[#allocation10 + $0xe8] sm:$0xff]
        %v1126 = vld [vmem:[#allocation10 + $0xf0] sm:$0xff]
        %v1127 = vld [vmem:[#allocation10 + $0xf8] sm:$0xff]
        %v1128 = vld [vmem:[#allocation11] sm:$0xf]
        %v1130 = vperm.slane %v1128, 0
        %v1131 = vperm.slane %v1128, 1
        %v1132 = vperm.slane %v1128, 2
        %v1133 = vperm.slane %v1128, 3
        %v1170 = vunpack.c.l.b16 %v1096
        %v1171 = vunpack.c.h.b16 %v1096
        %v1172 = vunpack.c.l.b16 %v1097
        %v1173 = vunpack.c.h.b16 %v1097
        %v1174 = vunpack.c.l.b16 %v1098
        %v1175 = vunpack.c.h.b16 %v1098
        %v1176 = vunpack.c.l.b16 %v1099
        %v1177 = vunpack.c.h.b16 %v1099
        %v1178 = vunpack.c.l.b16 %v1100
        %v1179 = vunpack.c.h.b16 %v1100
        %v1180 = vunpack.c.l.b16 %v1101
        %v1181 = vunpack.c.h.b16 %v1101
        %v1182 = vunpack.c.l.b16 %v1102
        %v1183 = vunpack.c.h.b16 %v1102
        %v1184 = vunpack.c.l.b16 %v1103
        %v1185 = vunpack.c.h.b16 %v1103
        %v1186 = vunpack.c.l.b16 %v1104
        %v1187 = vunpack.c.h.b16 %v1104
        %v1188 = vunpack.c.l.b16 %v1105
        %v1189 = vunpack.c.h.b16 %v1105
        %v1190 = vunpack.c.l.b16 %v1106
        %v1191 = vunpack.c.h.b16 %v1106
        %v1192 = vunpack.c.l.b16 %v1107
        %v1193 = vunpack.c.h.b16 %v1107
        %v1194 = vunpack.c.l.b16 %v1108
        %v1195 = vunpack.c.h.b16 %v1108
        %v1196 = vunpack.c.l.b16 %v1109
        %v1197 = vunpack.c.h.b16 %v1109
        %v1198 = vunpack.c.l.b16 %v1110
        %v1199 = vunpack.c.h.b16 %v1110
        %v1200 = vunpack.c.l.b16 %v1111
        %v1201 = vunpack.c.h.b16 %v1111
        %v1202 = vunpack.c.l.b16 %v1112
        %v1203 = vunpack.c.h.b16 %v1112
        %v1204 = vunpack.c.l.b16 %v1113
        %v1205 = vunpack.c.h.b16 %v1113
        %v1206 = vunpack.c.l.b16 %v1114
        %v1207 = vunpack.c.h.b16 %v1114
        %v1208 = vunpack.c.l.b16 %v1115
        %v1209 = vunpack.c.h.b16 %v1115
        %v1210 = vunpack.c.l.b16 %v1116
        %v1211 = vunpack.c.h.b16 %v1116
        %v1212 = vunpack.c.l.b16 %v1117
        %v1213 = vunpack.c.h.b16 %v1117
        %v1214 = vunpack.c.l.b16 %v1118
        %v1215 = vunpack.c.h.b16 %v1118
        %v1216 = vunpack.c.l.b16 %v1119
        %v1217 = vunpack.c.h.b16 %v1119
        %v1218 = vunpack.c.l.b16 %v1120
        %v1219 = vunpack.c.h.b16 %v1120
        %v1220 = vunpack.c.l.b16 %v1121
        %v1221 = vunpack.c.h.b16 %v1121
        %v1222 = vunpack.c.l.b16 %v1122
        %v1223 = vunpack.c.h.b16 %v1122
        %v1224 = vunpack.c.l.b16 %v1123
        %v1225 = vunpack.c.h.b16 %v1123
        %v1226 = vunpack.c.l.b16 %v1124
        %v1227 = vunpack.c.h.b16 %v1124
        %v1228 = vunpack.c.l.b16 %v1125
        %v1229 = vunpack.c.h.b16 %v1125
        %v1230 = vunpack.c.l.b16 %v1126
        %v1231 = vunpack.c.h.b16 %v1126
        %v1232 = vunpack.c.l.b16 %v1127
        %v1233 = vunpack.c.h.b16 %v1127
        %v1234 = vpack.c.b16 %v1174, %v1170
        %v1235 = vpack.c.b16 %v1175, %v1171
        %v1236 = vpack.c.b16 %v1176, %v1172
        %v1237 = vpack.c.b16 %v1177, %v1173
        %v1238 = vpack.c.b16 %v1182, %v1178
        %v1239 = vpack.c.b16 %v1183, %v1179
        %v1240 = vpack.c.b16 %v1184, %v1180
        %v1241 = vpack.c.b16 %v1185, %v1181
        %v1242 = vpack.c.b16 %v1190, %v1186
        %v1243 = vpack.c.b16 %v1191, %v1187
        %v1244 = vpack.c.b16 %v1192, %v1188
        %v1245 = vpack.c.b16 %v1193, %v1189
        %v1246 = vpack.c.b16 %v1198, %v1194
        %v1247 = vpack.c.b16 %v1199, %v1195
        %v1248 = vpack.c.b16 %v1200, %v1196
        %v1249 = vpack.c.b16 %v1201, %v1197
        %v1250 = vpack.c.b16 %v1206, %v1202
        %v1251 = vpack.c.b16 %v1207, %v1203
        %v1252 = vpack.c.b16 %v1208, %v1204
        %v1253 = vpack.c.b16 %v1209, %v1205
        %v1254 = vpack.c.b16 %v1214, %v1210
        %v1255 = vpack.c.b16 %v1215, %v1211
        %v1256 = vpack.c.b16 %v1216, %v1212
        %v1257 = vpack.c.b16 %v1217, %v1213
        %v1258 = vpack.c.b16 %v1222, %v1218
        %v1259 = vpack.c.b16 %v1223, %v1219
        %v1260 = vpack.c.b16 %v1224, %v1220
        %v1261 = vpack.c.b16 %v1225, %v1221
        %v1262 = vpack.c.b16 %v1230, %v1226
        %v1263 = vpack.c.b16 %v1231, %v1227
        %v1264 = vpack.c.b16 %v1232, %v1228
        %v1265 = vpack.c.b16 %v1233, %v1229
        %1298 = vmatpush.bf16.msra.mxu0 %v1262
        %1299 = vmatpush.bf16.msra.mxu0 %v1258
        %1300 = vmatpush.bf16.msra.mxu0 %v1254
        %1301 = vmatpush.bf16.msra.mxu0 %v1250
        %1302 = vmatpush.bf16.msra.mxu0 %v1246
        %1303 = vmatpush.bf16.msra.mxu0 %v1242
        %1304 = vmatpush.bf16.msra.mxu0 %v1238
        %1305 = vmatpush.bf16.msra.mxu0 %v1234
        %1306 = vmatmul.bf16.gmra.mxu0 %v1095
        %v1307 = vpop.f32.mrf.mxu0
        %v1308 = vadd.f32 %v1130, %v1307
        %v1309 = vpop.f32.mrf.mxu0
        %1310 = vdwg.mxu0
        %1311 = vmatpush.bf16.msra.mxu0 %v1263
        %1312 = vmatpush.bf16.msra.mxu0 %v1259
        %1313 = vmatpush.bf16.msra.mxu0 %v1255
        %1314 = vmatpush.bf16.msra.mxu0 %v1251
        %1315 = vmatpush.bf16.msra.mxu0 %v1247
        %1316 = vmatpush.bf16.msra.mxu0 %v1243
        %1317 = vmatpush.bf16.msra.mxu0 %v1239
        %1318 = vmatpush.bf16.msra.mxu0 %v1235
        %1319 = vmatmul.bf16.gmra.mxu0 %v1095
        %v1320 = vpop.f32.mrf.mxu0
        %v1321 = vadd.f32 %v1131, %v1320
        %v1322 = vpop.f32.mrf.mxu0
        %1323 = vdwg.mxu0
        %1324 = vmatpush.bf16.msra.mxu0 %v1264
        %1325 = vmatpush.bf16.msra.mxu0 %v1260
        %1326 = vmatpush.bf16.msra.mxu0 %v1256
        %1327 = vmatpush.bf16.msra.mxu0 %v1252
        %1328 = vmatpush.bf16.msra.mxu0 %v1248
        %1329 = vmatpush.bf16.msra.mxu0 %v1244
        %1330 = vmatpush.bf16.msra.mxu0 %v1240
        %1331 = vmatpush.bf16.msra.mxu0 %v1236
        %1332 = vmatmul.bf16.gmra.mxu0 %v1095
        %v1333 = vpop.f32.mrf.mxu0
        %v1334 = vadd.f32 %v1132, %v1333
        %v1335 = vpop.f32.mrf.mxu0
        %1336 = vdwg.mxu0
        %1337 = vmatpush.bf16.msra.mxu0 %v1265
        %1338 = vmatpush.bf16.msra.mxu0 %v1261
        %1339 = vmatpush.bf16.msra.mxu0 %v1257
        %1340 = vmatpush.bf16.msra.mxu0 %v1253
        %1341 = vmatpush.bf16.msra.mxu0 %v1249
        %1342 = vmatpush.bf16.msra.mxu0 %v1245
        %1343 = vmatpush.bf16.msra.mxu0 %v1241
        %1344 = vmatpush.bf16.msra.mxu0 %v1237
        %1345 = vmatmul.bf16.gmra.mxu0 %v1095
        %v1346 = vpop.f32.mrf.mxu0
        %v1347 = vadd.f32 %v1133, %v1346
        %v1348 = vpop.f32.mrf.mxu0
        %1349 = vdwg.mxu0
        %v1350 = vld [vmem:[#allocation13] sm:$0xff]
        %v1351 = vld [vmem:[#allocation13 + $0x8] sm:$0xff]
        %v1352 = vld [vmem:[#allocation13 + $0x10] sm:$0xff]
        %v1353 = vld [vmem:[#allocation13 + $0x18] sm:$0xff]
        %v1354 = vld [vmem:[#allocation13 + $0x20] sm:$0xff]
        %v1355 = vld [vmem:[#allocation13 + $0x28] sm:$0xff]
        %v1356 = vld [vmem:[#allocation13 + $0x30] sm:$0xff]
        %v1357 = vld [vmem:[#allocation13 + $0x38] sm:$0xff]
        %v1358 = vld [vmem:[#allocation13 + $0x40] sm:$0xff]
        %v1359 = vld [vmem:[#allocation13 + $0x48] sm:$0xff]
        %v1360 = vld [vmem:[#allocation13 + $0x50] sm:$0xff]
        %v1361 = vld [vmem:[#allocation13 + $0x58] sm:$0xff]
        %v1362 = vld [vmem:[#allocation13 + $0x60] sm:$0xff]
        %v1363 = vld [vmem:[#allocation13 + $0x68] sm:$0xff]
        %v1364 = vld [vmem:[#allocation13 + $0x70] sm:$0xff]
        %v1365 = vld [vmem:[#allocation13 + $0x78] sm:$0xff]
        %v1366 = vld [vmem:[#allocation13 + $0x80] sm:$0xff]
        %v1367 = vld [vmem:[#allocation13 + $0x88] sm:$0xff]
        %v1368 = vld [vmem:[#allocation13 + $0x90] sm:$0xff]
        %v1369 = vld [vmem:[#allocation13 + $0x98] sm:$0xff]
        %v1370 = vld [vmem:[#allocation13 + $0xa0] sm:$0xff]
        %v1371 = vld [vmem:[#allocation13 + $0xa8] sm:$0xff]
        %v1372 = vld [vmem:[#allocation13 + $0xb0] sm:$0xff]
        %v1373 = vld [vmem:[#allocation13 + $0xb8] sm:$0xff]
        %v1374 = vld [vmem:[#allocation13 + $0xc0] sm:$0xff]
        %v1375 = vld [vmem:[#allocation13 + $0xc8] sm:$0xff]
        %v1376 = vld [vmem:[#allocation13 + $0xd0] sm:$0xff]
        %v1377 = vld [vmem:[#allocation13 + $0xd8] sm:$0xff]
        %v1378 = vld [vmem:[#allocation13 + $0xe0] sm:$0xff]
        %v1379 = vld [vmem:[#allocation13 + $0xe8] sm:$0xff]
        %v1380 = vld [vmem:[#allocation13 + $0xf0] sm:$0xff]
        %v1381 = vld [vmem:[#allocation13 + $0xf8] sm:$0xff]
        %v1382 = vld [vmem:[#allocation14] sm:$0xf]
        %v1384 = vperm.slane %v1382, 0
        %v1385 = vperm.slane %v1382, 1
        %v1386 = vperm.slane %v1382, 2
        %v1387 = vperm.slane %v1382, 3
        %v1424 = vunpack.c.l.b16 %v1350
        %v1425 = vunpack.c.h.b16 %v1350
        %v1426 = vunpack.c.l.b16 %v1351
        %v1427 = vunpack.c.h.b16 %v1351
        %v1428 = vunpack.c.l.b16 %v1352
        %v1429 = vunpack.c.h.b16 %v1352
        %v1430 = vunpack.c.l.b16 %v1353
        %v1431 = vunpack.c.h.b16 %v1353
        %v1432 = vunpack.c.l.b16 %v1354
        %v1433 = vunpack.c.h.b16 %v1354
        %v1434 = vunpack.c.l.b16 %v1355
        %v1435 = vunpack.c.h.b16 %v1355
        %v1436 = vunpack.c.l.b16 %v1356
        %v1437 = vunpack.c.h.b16 %v1356
        %v1438 = vunpack.c.l.b16 %v1357
        %v1439 = vunpack.c.h.b16 %v1357
        %v1440 = vunpack.c.l.b16 %v1358
        %v1441 = vunpack.c.h.b16 %v1358
        %v1442 = vunpack.c.l.b16 %v1359
        %v1443 = vunpack.c.h.b16 %v1359
        %v1444 = vunpack.c.l.b16 %v1360
        %v1445 = vunpack.c.h.b16 %v1360
        %v1446 = vunpack.c.l.b16 %v1361
        %v1447 = vunpack.c.h.b16 %v1361
        %v1448 = vunpack.c.l.b16 %v1362
        %v1449 = vunpack.c.h.b16 %v1362
        %v1450 = vunpack.c.l.b16 %v1363
        %v1451 = vunpack.c.h.b16 %v1363
        %v1452 = vunpack.c.l.b16 %v1364
        %v1453 = vunpack.c.h.b16 %v1364
        %v1454 = vunpack.c.l.b16 %v1365
        %v1455 = vunpack.c.h.b16 %v1365
        %v1456 = vunpack.c.l.b16 %v1366
        %v1457 = vunpack.c.h.b16 %v1366
        %v1458 = vunpack.c.l.b16 %v1367
        %v1459 = vunpack.c.h.b16 %v1367
        %v1460 = vunpack.c.l.b16 %v1368
        %v1461 = vunpack.c.h.b16 %v1368
        %v1462 = vunpack.c.l.b16 %v1369
        %v1463 = vunpack.c.h.b16 %v1369
        %v1464 = vunpack.c.l.b16 %v1370
        %v1465 = vunpack.c.h.b16 %v1370
        %v1466 = vunpack.c.l.b16 %v1371
        %v1467 = vunpack.c.h.b16 %v1371
        %v1468 = vunpack.c.l.b16 %v1372
        %v1469 = vunpack.c.h.b16 %v1372
        %v1470 = vunpack.c.l.b16 %v1373
        %v1471 = vunpack.c.h.b16 %v1373
        %v1472 = vunpack.c.l.b16 %v1374
        %v1473 = vunpack.c.h.b16 %v1374
        %v1474 = vunpack.c.l.b16 %v1375
        %v1475 = vunpack.c.h.b16 %v1375
        %v1476 = vunpack.c.l.b16 %v1376
        %v1477 = vunpack.c.h.b16 %v1376
        %v1478 = vunpack.c.l.b16 %v1377
        %v1479 = vunpack.c.h.b16 %v1377
        %v1480 = vunpack.c.l.b16 %v1378
        %v1481 = vunpack.c.h.b16 %v1378
        %v1482 = vunpack.c.l.b16 %v1379
        %v1483 = vunpack.c.h.b16 %v1379
        %v1484 = vunpack.c.l.b16 %v1380
        %v1485 = vunpack.c.h.b16 %v1380
        %v1486 = vunpack.c.l.b16 %v1381
        %v1487 = vunpack.c.h.b16 %v1381
        %v1488 = vpack.c.b16 %v1428, %v1424
        %v1489 = vpack.c.b16 %v1429, %v1425
        %v1490 = vpack.c.b16 %v1430, %v1426
        %v1491 = vpack.c.b16 %v1431, %v1427
        %v1492 = vpack.c.b16 %v1436, %v1432
        %v1493 = vpack.c.b16 %v1437, %v1433
        %v1494 = vpack.c.b16 %v1438, %v1434
        %v1495 = vpack.c.b16 %v1439, %v1435
        %v1496 = vpack.c.b16 %v1444, %v1440
        %v1497 = vpack.c.b16 %v1445, %v1441
        %v1498 = vpack.c.b16 %v1446, %v1442
        %v1499 = vpack.c.b16 %v1447, %v1443
        %v1500 = vpack.c.b16 %v1452, %v1448
        %v1501 = vpack.c.b16 %v1453, %v1449
        %v1502 = vpack.c.b16 %v1454, %v1450
        %v1503 = vpack.c.b16 %v1455, %v1451
        %v1504 = vpack.c.b16 %v1460, %v1456
        %v1505 = vpack.c.b16 %v1461, %v1457
        %v1506 = vpack.c.b16 %v1462, %v1458
        %v1507 = vpack.c.b16 %v1463, %v1459
        %v1508 = vpack.c.b16 %v1468, %v1464
        %v1509 = vpack.c.b16 %v1469, %v1465
        %v1510 = vpack.c.b16 %v1470, %v1466
        %v1511 = vpack.c.b16 %v1471, %v1467
        %v1512 = vpack.c.b16 %v1476, %v1472
        %v1513 = vpack.c.b16 %v1477, %v1473
        %v1514 = vpack.c.b16 %v1478, %v1474
        %v1515 = vpack.c.b16 %v1479, %v1475
        %v1516 = vpack.c.b16 %v1484, %v1480
        %v1517 = vpack.c.b16 %v1485, %v1481
        %v1518 = vpack.c.b16 %v1486, %v1482
        %v1519 = vpack.c.b16 %v1487, %v1483
        %1552 = vmatpush.bf16.msra.mxu0 %v1516
        %1553 = vmatpush.bf16.msra.mxu0 %v1512
        %1554 = vmatpush.bf16.msra.mxu0 %v1508
        %1555 = vmatpush.bf16.msra.mxu0 %v1504
        %1556 = vmatpush.bf16.msra.mxu0 %v1500
        %1557 = vmatpush.bf16.msra.mxu0 %v1496
        %1558 = vmatpush.bf16.msra.mxu0 %v1492
        %1559 = vmatpush.bf16.msra.mxu0 %v1488
        %1560 = vmatmul.bf16.gmra.mxu0 %v1095
        %v1561 = vpop.f32.mrf.mxu0
        %v1562 = vadd.f32 %v1384, %v1561
        %v1563 = vpop.f32.mrf.mxu0
        %1564 = vdwg.mxu0
        %1565 = vmatpush.bf16.msra.mxu0 %v1517
        %1566 = vmatpush.bf16.msra.mxu0 %v1513
        %1567 = vmatpush.bf16.msra.mxu0 %v1509
        %1568 = vmatpush.bf16.msra.mxu0 %v1505
        %1569 = vmatpush.bf16.msra.mxu0 %v1501
        %1570 = vmatpush.bf16.msra.mxu0 %v1497
        %1571 = vmatpush.bf16.msra.mxu0 %v1493
        %1572 = vmatpush.bf16.msra.mxu0 %v1489
        %1573 = vmatmul.bf16.gmra.mxu0 %v1095
        %v1574 = vpop.f32.mrf.mxu0
        %v1575 = vadd.f32 %v1385, %v1574
        %v1576 = vpop.f32.mrf.mxu0
        %1577 = vdwg.mxu0
        %1578 = vmatpush.bf16.msra.mxu0 %v1518
        %1579 = vmatpush.bf16.msra.mxu0 %v1514
        %1580 = vmatpush.bf16.msra.mxu0 %v1510
        %1581 = vmatpush.bf16.msra.mxu0 %v1506
        %1582 = vmatpush.bf16.msra.mxu0 %v1502
        %1583 = vmatpush.bf16.msra.mxu0 %v1498
        %1584 = vmatpush.bf16.msra.mxu0 %v1494
        %1585 = vmatpush.bf16.msra.mxu0 %v1490
        %1586 = vmatmul.bf16.gmra.mxu0 %v1095
        %v1587 = vpop.f32.mrf.mxu0
        %v1588 = vadd.f32 %v1386, %v1587
        %v1589 = vpop.f32.mrf.mxu0
        %1590 = vdwg.mxu0
        %1591 = vmatpush.bf16.msra.mxu0 %v1519
        %1592 = vmatpush.bf16.msra.mxu0 %v1515
        %1593 = vmatpush.bf16.msra.mxu0 %v1511
        %1594 = vmatpush.bf16.msra.mxu0 %v1507
        %1595 = vmatpush.bf16.msra.mxu0 %v1503
        %1596 = vmatpush.bf16.msra.mxu0 %v1499
        %1597 = vmatpush.bf16.msra.mxu0 %v1495
        %1598 = vmatpush.bf16.msra.mxu0 %v1491
        %1599 = vmatmul.bf16.gmra.mxu0 %v1095
        %v1600 = vpop.f32.mrf.mxu0
        %v1601 = vadd.f32 %v1387, %v1600
        %v1602 = vpop.f32.mrf.mxu0
        %1603 = vdwg.mxu0
        %v1604 = vld [vmem:[#allocation16] sm:$0xff]
        %v1605 = vld [vmem:[#allocation16 + $0x8] sm:$0xff]
        %v1606 = vld [vmem:[#allocation16 + $0x10] sm:$0xff]
        %v1607 = vld [vmem:[#allocation16 + $0x18] sm:$0xff]
        %v1608 = vld [vmem:[#allocation16 + $0x20] sm:$0xff]
        %v1609 = vld [vmem:[#allocation16 + $0x28] sm:$0xff]
        %v1610 = vld [vmem:[#allocation16 + $0x30] sm:$0xff]
        %v1611 = vld [vmem:[#allocation16 + $0x38] sm:$0xff]
        %v1612 = vld [vmem:[#allocation16 + $0x40] sm:$0xff]
        %v1613 = vld [vmem:[#allocation16 + $0x48] sm:$0xff]
        %v1614 = vld [vmem:[#allocation16 + $0x50] sm:$0xff]
        %v1615 = vld [vmem:[#allocation16 + $0x58] sm:$0xff]
        %v1616 = vld [vmem:[#allocation16 + $0x60] sm:$0xff]
        %v1617 = vld [vmem:[#allocation16 + $0x68] sm:$0xff]
        %v1618 = vld [vmem:[#allocation16 + $0x70] sm:$0xff]
        %v1619 = vld [vmem:[#allocation16 + $0x78] sm:$0xff]
        %v1620 = vld [vmem:[#allocation16 + $0x80] sm:$0xff]
        %v1621 = vld [vmem:[#allocation16 + $0x88] sm:$0xff]
        %v1622 = vld [vmem:[#allocation16 + $0x90] sm:$0xff]
        %v1623 = vld [vmem:[#allocation16 + $0x98] sm:$0xff]
        %v1624 = vld [vmem:[#allocation16 + $0xa0] sm:$0xff]
        %v1625 = vld [vmem:[#allocation16 + $0xa8] sm:$0xff]
        %v1626 = vld [vmem:[#allocation16 + $0xb0] sm:$0xff]
        %v1627 = vld [vmem:[#allocation16 + $0xb8] sm:$0xff]
        %v1628 = vld [vmem:[#allocation16 + $0xc0] sm:$0xff]
        %v1629 = vld [vmem:[#allocation16 + $0xc8] sm:$0xff]
        %v1630 = vld [vmem:[#allocation16 + $0xd0] sm:$0xff]
        %v1631 = vld [vmem:[#allocation16 + $0xd8] sm:$0xff]
        %v1632 = vld [vmem:[#allocation16 + $0xe0] sm:$0xff]
        %v1633 = vld [vmem:[#allocation16 + $0xe8] sm:$0xff]
        %v1634 = vld [vmem:[#allocation16 + $0xf0] sm:$0xff]
        %v1635 = vld [vmem:[#allocation16 + $0xf8] sm:$0xff]
        %v1636 = vld [vmem:[%s9] sm:$0xf]
        %v1638 = vperm.slane %v1636, 0
        %v1639 = vperm.slane %v1636, 1
        %v1640 = vperm.slane %v1636, 2
        %v1641 = vperm.slane %v1636, 3
        %v1678 = vunpack.c.l.b16 %v1604
        %v1679 = vunpack.c.h.b16 %v1604
        %v1680 = vunpack.c.l.b16 %v1605
        %v1681 = vunpack.c.h.b16 %v1605
        %v1682 = vunpack.c.l.b16 %v1606
        %v1683 = vunpack.c.h.b16 %v1606
        %v1684 = vunpack.c.l.b16 %v1607
        %v1685 = vunpack.c.h.b16 %v1607
        %v1686 = vunpack.c.l.b16 %v1608
        %v1687 = vunpack.c.h.b16 %v1608
        %v1688 = vunpack.c.l.b16 %v1609
        %v1689 = vunpack.c.h.b16 %v1609
        %v1690 = vunpack.c.l.b16 %v1610
        %v1691 = vunpack.c.h.b16 %v1610
        %v1692 = vunpack.c.l.b16 %v1611
        %v1693 = vunpack.c.h.b16 %v1611
        %v1694 = vunpack.c.l.b16 %v1612
        %v1695 = vunpack.c.h.b16 %v1612
        %v1696 = vunpack.c.l.b16 %v1613
        %v1697 = vunpack.c.h.b16 %v1613
        %v1698 = vunpack.c.l.b16 %v1614
        %v1699 = vunpack.c.h.b16 %v1614
        %v1700 = vunpack.c.l.b16 %v1615
        %v1701 = vunpack.c.h.b16 %v1615
        %v1702 = vunpack.c.l.b16 %v1616
        %v1703 = vunpack.c.h.b16 %v1616
        %v1704 = vunpack.c.l.b16 %v1617
        %v1705 = vunpack.c.h.b16 %v1617
        %v1706 = vunpack.c.l.b16 %v1618
        %v1707 = vunpack.c.h.b16 %v1618
        %v1708 = vunpack.c.l.b16 %v1619
        %v1709 = vunpack.c.h.b16 %v1619
        %v1710 = vunpack.c.l.b16 %v1620
        %v1711 = vunpack.c.h.b16 %v1620
        %v1712 = vunpack.c.l.b16 %v1621
        %v1713 = vunpack.c.h.b16 %v1621
        %v1714 = vunpack.c.l.b16 %v1622
        %v1715 = vunpack.c.h.b16 %v1622
        %v1716 = vunpack.c.l.b16 %v1623
        %v1717 = vunpack.c.h.b16 %v1623
        %v1718 = vunpack.c.l.b16 %v1624
        %v1719 = vunpack.c.h.b16 %v1624
        %v1720 = vunpack.c.l.b16 %v1625
        %v1721 = vunpack.c.h.b16 %v1625
        %v1722 = vunpack.c.l.b16 %v1626
        %v1723 = vunpack.c.h.b16 %v1626
        %v1724 = vunpack.c.l.b16 %v1627
        %v1725 = vunpack.c.h.b16 %v1627
        %v1726 = vunpack.c.l.b16 %v1628
        %v1727 = vunpack.c.h.b16 %v1628
        %v1728 = vunpack.c.l.b16 %v1629
        %v1729 = vunpack.c.h.b16 %v1629
        %v1730 = vunpack.c.l.b16 %v1630
        %v1731 = vunpack.c.h.b16 %v1630
        %v1732 = vunpack.c.l.b16 %v1631
        %v1733 = vunpack.c.h.b16 %v1631
        %v1734 = vunpack.c.l.b16 %v1632
        %v1735 = vunpack.c.h.b16 %v1632
        %v1736 = vunpack.c.l.b16 %v1633
        %v1737 = vunpack.c.h.b16 %v1633
        %v1738 = vunpack.c.l.b16 %v1634
        %v1739 = vunpack.c.h.b16 %v1634
        %v1740 = vunpack.c.l.b16 %v1635
        %v1741 = vunpack.c.h.b16 %v1635
        %v1742 = vpack.c.b16 %v1682, %v1678
        %v1743 = vpack.c.b16 %v1683, %v1679
        %v1744 = vpack.c.b16 %v1684, %v1680
        %v1745 = vpack.c.b16 %v1685, %v1681
        %v1746 = vpack.c.b16 %v1690, %v1686
        %v1747 = vpack.c.b16 %v1691, %v1687
        %v1748 = vpack.c.b16 %v1692, %v1688
        %v1749 = vpack.c.b16 %v1693, %v1689
        %v1750 = vpack.c.b16 %v1698, %v1694
        %v1751 = vpack.c.b16 %v1699, %v1695
        %v1752 = vpack.c.b16 %v1700, %v1696
        %v1753 = vpack.c.b16 %v1701, %v1697
        %v1754 = vpack.c.b16 %v1706, %v1702
        %v1755 = vpack.c.b16 %v1707, %v1703
        %v1756 = vpack.c.b16 %v1708, %v1704
        %v1757 = vpack.c.b16 %v1709, %v1705
        %v1758 = vpack.c.b16 %v1714, %v1710
        %v1759 = vpack.c.b16 %v1715, %v1711
        %v1760 = vpack.c.b16 %v1716, %v1712
        %v1761 = vpack.c.b16 %v1717, %v1713
        %v1762 = vpack.c.b16 %v1722, %v1718
        %v1763 = vpack.c.b16 %v1723, %v1719
        %v1764 = vpack.c.b16 %v1724, %v1720
        %v1765 = vpack.c.b16 %v1725, %v1721
        %v1766 = vpack.c.b16 %v1730, %v1726
        %v1767 = vpack.c.b16 %v1731, %v1727
        %v1768 = vpack.c.b16 %v1732, %v1728
        %v1769 = vpack.c.b16 %v1733, %v1729
        %v1770 = vpack.c.b16 %v1738, %v1734
        %v1771 = vpack.c.b16 %v1739, %v1735
        %v1772 = vpack.c.b16 %v1740, %v1736
        %v1773 = vpack.c.b16 %v1741, %v1737
        %1806 = vmatpush.bf16.msra.mxu0 %v1770
        %1807 = vmatpush.bf16.msra.mxu0 %v1766
        %1808 = vmatpush.bf16.msra.mxu0 %v1762
        %1809 = vmatpush.bf16.msra.mxu0 %v1758
        %1810 = vmatpush.bf16.msra.mxu0 %v1754
        %1811 = vmatpush.bf16.msra.mxu0 %v1750
        %1812 = vmatpush.bf16.msra.mxu0 %v1746
        %1813 = vmatpush.bf16.msra.mxu0 %v1742
        %1814 = vmatmul.bf16.gmra.mxu0 %v1095
        %v1815 = vpop.f32.mrf.mxu0
        %v1816 = vadd.f32 %v1638, %v1815
        %v1817 = vpop.f32.mrf.mxu0
        %1818 = vdwg.mxu0
        %1819 = vmatpush.bf16.msra.mxu0 %v1771
        %1820 = vmatpush.bf16.msra.mxu0 %v1767
        %1821 = vmatpush.bf16.msra.mxu0 %v1763
        %1822 = vmatpush.bf16.msra.mxu0 %v1759
        %1823 = vmatpush.bf16.msra.mxu0 %v1755
        %1824 = vmatpush.bf16.msra.mxu0 %v1751
        %1825 = vmatpush.bf16.msra.mxu0 %v1747
        %1826 = vmatpush.bf16.msra.mxu0 %v1743
        %1827 = vmatmul.bf16.gmra.mxu0 %v1095
        %v1828 = vpop.f32.mrf.mxu0
        %v1829 = vadd.f32 %v1639, %v1828
        %v1830 = vpop.f32.mrf.mxu0
        %1831 = vdwg.mxu0
        %1832 = vmatpush.bf16.msra.mxu0 %v1772
        %1833 = vmatpush.bf16.msra.mxu0 %v1768
        %1834 = vmatpush.bf16.msra.mxu0 %v1764
        %1835 = vmatpush.bf16.msra.mxu0 %v1760
        %1836 = vmatpush.bf16.msra.mxu0 %v1756
        %1837 = vmatpush.bf16.msra.mxu0 %v1752
        %1838 = vmatpush.bf16.msra.mxu0 %v1748
        %1839 = vmatpush.bf16.msra.mxu0 %v1744
        %1840 = vmatmul.bf16.gmra.mxu0 %v1095
        %v1841 = vpop.f32.mrf.mxu0
        %v1842 = vadd.f32 %v1640, %v1841
        %v1843 = vpop.f32.mrf.mxu0
        %1844 = vdwg.mxu0
        %1845 = vmatpush.bf16.msra.mxu0 %v1773
        %1846 = vmatpush.bf16.msra.mxu0 %v1769
        %1847 = vmatpush.bf16.msra.mxu0 %v1765
        %1848 = vmatpush.bf16.msra.mxu0 %v1761
        %1849 = vmatpush.bf16.msra.mxu0 %v1757
        %1850 = vmatpush.bf16.msra.mxu0 %v1753
        %1851 = vmatpush.bf16.msra.mxu0 %v1749
        %1852 = vmatpush.bf16.msra.mxu0 %v1745
        %1853 = vmatmul.bf16.gmra.mxu0 %v1095
        %v1854 = vpop.f32.mrf.mxu0
        %v1855 = vadd.f32 %v1641, %v1854
        %v1856 = vpop.f32.mrf.mxu0
        %1857 = vdwg.mxu0
        %v1858 = vpack.c.bf16 %v1308, %v1308
        %v1859 = vpack.c.bf16 %v1562, %v1562
        %1860 = vmatpush.bf16.xpose.msra.mxu0 0
        %1861 = vmatpush.bf16.xpose.msra.mxu0 0
        %1862 = vmatpush.bf16.xpose.msra.mxu0 0
        %1863 = vmatpush.bf16.xpose.msra.mxu0 0
        %1864 = vmatpush.bf16.xpose.msra.mxu0 0
        %1865 = vmatpush.bf16.xpose.msra.mxu0 0
        %1866 = vmatpush.bf16.xpose.msra.mxu0 0
        %1867 = vmatpush.bf16.xpose.msra.mxu0 %v1859
        %1868 = vmatmul.bf16.gmra.mxu0 %v1858
        %v1869 = vpop.f32.mrf.mxu0
        %v1870 = vadd.f32 0.0, %v1869
        %v1871 = vpop.f32.mrf.mxu0
        %1872 = vdwg.mxu0
        %v1873 = vmul.f32 %v1870, 0.35355338
        %v1875 = vperm.slane %v1094, 0
        %v1877 = vadd.f32 %v1873, %v1875
        %vm1878 = vcmask 64512
        %v1879 = vsel %vm1878, %v1877, -inf
        %1880 = vmax.xlane.f32.xlu0 %v1879
        %v1881 = vpop.xlane.xlu0 %1880
        %v1882 = vsub.f32 %v1877, %v1881
        %v1883 = vmul.f32 %v1882, 1.442695
        %v1884 = vpow.pop %v1883
        %v1885 = vsel %vm1878, %v1884, 0.0
        %1886 = vadd.xlane.f32.xlu0 %v1885
        %v1887 = vpop.xlane.xlu0 %1886
        %v1888 = vrcp.pop %v1887
        %v1889 = vmul.f32 %v1884, %v1888
        %v1890 = vpack.c.bf16 %v1889, %v1889
        %v1891 = vpack.c.bf16 %v1816, %v1816
        %v1893 = vsel %vm1878, %v1890, 0
        %vm1895 = vcmask 1043456
        %v1897 = vsel %vm1895, %v1891, 0
        %1899 = vmatpush.bf16.msra.mxu0 0
        %1900 = vmatpush.bf16.msra.mxu0 0
        %1901 = vmatpush.bf16.msra.mxu0 0
        %1902 = vmatpush.bf16.msra.mxu0 0
        %1903 = vmatpush.bf16.msra.mxu0 0
        %1904 = vmatpush.bf16.msra.mxu0 0
        %1905 = vmatpush.bf16.msra.mxu0 0
        %1906 = vmatpush.bf16.msra.mxu0 %v1897
        %1907 = vmatmul.bf16.gmra.mxu0 %v1893
        %v1908 = vpop.f32.mrf.mxu0
        %v1909 = vadd.f32 0.0, %v1908
        %v1910 = vpop.f32.mrf.mxu0
        %1911 = vdwg.mxu0
        %v1912 = vpack.c.bf16 %v1321, %v1321
        %v1913 = vpack.c.bf16 %v1575, %v1575
        %1914 = vmatpush.bf16.xpose.msra.mxu0 0
        %1915 = vmatpush.bf16.xpose.msra.mxu0 0
        %1916 = vmatpush.bf16.xpose.msra.mxu0 0
        %1917 = vmatpush.bf16.xpose.msra.mxu0 0
        %1918 = vmatpush.bf16.xpose.msra.mxu0 0
        %1919 = vmatpush.bf16.xpose.msra.mxu0 0
        %1920 = vmatpush.bf16.xpose.msra.mxu0 0
        %1921 = vmatpush.bf16.xpose.msra.mxu0 %v1913
        %1922 = vmatmul.bf16.gmra.mxu0 %v1912
        %v1923 = vpop.f32.mrf.mxu0
        %v1924 = vadd.f32 0.0, %v1923
        %v1925 = vpop.f32.mrf.mxu0
        %1926 = vdwg.mxu0
        %v1927 = vmul.f32 %v1924, 0.35355338
        %v1928 = vadd.f32 %v1927, %v1875
        %v1929 = vsel %vm1878, %v1928, -inf
        %1930 = vmax.xlane.f32.xlu0 %v1929
        %v1931 = vpop.xlane.xlu0 %1930
        %v1932 = vsub.f32 %v1928, %v1931
        %v1933 = vmul.f32 %v1932, 1.442695
        %v1934 = vpow.pop %v1933
        %v1935 = vsel %vm1878, %v1934, 0.0
        %1936 = vadd.xlane.f32.xlu0 %v1935
        %v1937 = vpop.xlane.xlu0 %1936
        %v1938 = vrcp.pop %v1937
        %v1939 = vmul.f32 %v1934, %v1938
        %v1940 = vpack.c.bf16 %v1939, %v1939
        %v1941 = vpack.c.bf16 %v1829, %v1829
        %v1943 = vsel %vm1878, %v1940, 0
        %v1946 = vsel %vm1895, %v1941, 0
        %1948 = vmatpush.bf16.msra.mxu0 0
        %1949 = vmatpush.bf16.msra.mxu0 0
        %1950 = vmatpush.bf16.msra.mxu0 0
        %1951 = vmatpush.bf16.msra.mxu0 0
        %1952 = vmatpush.bf16.msra.mxu0 0
        %1953 = vmatpush.bf16.msra.mxu0 0
        %1954 = vmatpush.bf16.msra.mxu0 0
        %1955 = vmatpush.bf16.msra.mxu0 %v1946
        %1956 = vmatmul.bf16.gmra.mxu0 %v1943
        %v1957 = vpop.f32.mrf.mxu0
        %v1958 = vadd.f32 0.0, %v1957
        %v1959 = vpop.f32.mrf.mxu0
        %1960 = vdwg.mxu0
        %v1961 = vpack.c.bf16 %v1334, %v1334
        %v1962 = vpack.c.bf16 %v1588, %v1588
        %1963 = vmatpush.bf16.xpose.msra.mxu0 0
        %1964 = vmatpush.bf16.xpose.msra.mxu0 0
        %1965 = vmatpush.bf16.xpose.msra.mxu0 0
        %1966 = vmatpush.bf16.xpose.msra.mxu0 0
        %1967 = vmatpush.bf16.xpose.msra.mxu0 0
        %1968 = vmatpush.bf16.xpose.msra.mxu0 0
        %1969 = vmatpush.bf16.xpose.msra.mxu0 0
        %1970 = vmatpush.bf16.xpose.msra.mxu0 %v1962
        %1971 = vmatmul.bf16.gmra.mxu0 %v1961
        %v1972 = vpop.f32.mrf.mxu0
        %v1973 = vadd.f32 0.0, %v1972
        %v1974 = vpop.f32.mrf.mxu0
        %1975 = vdwg.mxu0
        %v1976 = vmul.f32 %v1973, 0.35355338
        %v1977 = vadd.f32 %v1976, %v1875
        %v1978 = vsel %vm1878, %v1977, -inf
        %1979 = vmax.xlane.f32.xlu0 %v1978
        %v1980 = vpop.xlane.xlu0 %1979
        %v1981 = vsub.f32 %v1977, %v1980
        %v1982 = vmul.f32 %v1981, 1.442695
        %v1983 = vpow.pop %v1982
        %v1984 = vsel %vm1878, %v1983, 0.0
        %1985 = vadd.xlane.f32.xlu0 %v1984
        %v1986 = vpop.xlane.xlu0 %1985
        %v1987 = vrcp.pop %v1986
        %v1988 = vmul.f32 %v1983, %v1987
        %v1989 = vpack.c.bf16 %v1988, %v1988
        %v1990 = vpack.c.bf16 %v1842, %v1842
        %v1992 = vsel %vm1878, %v1989, 0
        %v1995 = vsel %vm1895, %v1990, 0
        %1997 = vmatpush.bf16.msra.mxu0 0
        %1998 = vmatpush.bf16.msra.mxu0 0
        %1999 = vmatpush.bf16.msra.mxu0 0
        %2000 = vmatpush.bf16.msra.mxu0 0
        %2001 = vmatpush.bf16.msra.mxu0 0
        %2002 = vmatpush.bf16.msra.mxu0 0
        %2003 = vmatpush.bf16.msra.mxu0 0
        %2004 = vmatpush.bf16.msra.mxu0 %v1995
        %2005 = vmatmul.bf16.gmra.mxu0 %v1992
        %v2006 = vpop.f32.mrf.mxu0
        %v2007 = vadd.f32 0.0, %v2006
        %v2008 = vpop.f32.mrf.mxu0
        %2009 = vdwg.mxu0
        %v2010 = vpack.c.bf16 %v1347, %v1347
        %v2011 = vpack.c.bf16 %v1601, %v1601
        %2012 = vmatpush.bf16.xpose.msra.mxu0 0
        %2013 = vmatpush.bf16.xpose.msra.mxu0 0
        %2014 = vmatpush.bf16.xpose.msra.mxu0 0
        %2015 = vmatpush.bf16.xpose.msra.mxu0 0
        %2016 = vmatpush.bf16.xpose.msra.mxu0 0
        %2017 = vmatpush.bf16.xpose.msra.mxu0 0
        %2018 = vmatpush.bf16.xpose.msra.mxu0 0
        %2019 = vmatpush.bf16.xpose.msra.mxu0 %v2011
        %2020 = vmatmul.bf16.gmra.mxu0 %v2010
        %v2021 = vpop.f32.mrf.mxu0
        %v2022 = vadd.f32 0.0, %v2021
        %v2023 = vpop.f32.mrf.mxu0
        %2024 = vdwg.mxu0
        %v2025 = vmul.f32 %v2022, 0.35355338
        %v2026 = vadd.f32 %v2025, %v1875
        %v2027 = vsel %vm1878, %v2026, -inf
        %2028 = vmax.xlane.f32.xlu0 %v2027
        %v2029 = vpop.xlane.xlu0 %2028
        %v2030 = vsub.f32 %v2026, %v2029
        %v2031 = vmul.f32 %v2030, 1.442695
        %v2032 = vpow.pop %v2031
        %v2033 = vsel %vm1878, %v2032, 0.0
        %2034 = vadd.xlane.f32.xlu0 %v2033
        %v2035 = vpop.xlane.xlu0 %2034
        %v2036 = vrcp.pop %v2035
        %v2037 = vmul.f32 %v2032, %v2036
        %v2038 = vpack.c.bf16 %v2037, %v2037
        %v2039 = vpack.c.bf16 %v1855, %v1855
        %v2041 = vsel %vm1878, %v2038, 0
        %v2044 = vsel %vm1895, %v2039, 0
        %2046 = vmatpush.bf16.msra.mxu0 0
        %2047 = vmatpush.bf16.msra.mxu0 0
        %2048 = vmatpush.bf16.msra.mxu0 0
        %2049 = vmatpush.bf16.msra.mxu0 0
        %2050 = vmatpush.bf16.msra.mxu0 0
        %2051 = vmatpush.bf16.msra.mxu0 0
        %2052 = vmatpush.bf16.msra.mxu0 0
        %2053 = vmatpush.bf16.msra.mxu0 %v2044
        %2054 = vmatmul.bf16.gmra.mxu0 %v2041
        %v2055 = vpop.f32.mrf.mxu0
        %v2056 = vadd.f32 0.0, %v2055
        %v2057 = vpop.f32.mrf.mxu0
        %2058 = vdwg.mxu0
        %v2059 = vld [vmem:[#allocation17] sm:$0xf]
        %v2060 = vld [vmem:[#allocation17 + $0x4] sm:$0xf]
        %v2061 = vld [vmem:[#allocation17 + $0x8] sm:$0xf]
        %v2062 = vld [vmem:[#allocation17 + $0xc] sm:$0xf]
        %v2063 = vld [vmem:[#allocation17 + $0x10] sm:$0xf]
        %v2064 = vld [vmem:[#allocation17 + $0x14] sm:$0xf]
        %v2065 = vld [vmem:[#allocation17 + $0x18] sm:$0xf]
        %v2066 = vld [vmem:[#allocation17 + $0x1c] sm:$0xf]
        %v2067 = vld [vmem:[#allocation17 + $0x20] sm:$0xf]
        %v2068 = vld [vmem:[#allocation17 + $0x24] sm:$0xf]
        %v2069 = vld [vmem:[#allocation17 + $0x28] sm:$0xf]
        %v2070 = vld [vmem:[#allocation17 + $0x2c] sm:$0xf]
        %v2071 = vld [vmem:[#allocation17 + $0x30] sm:$0xf]
        %v2072 = vld [vmem:[#allocation17 + $0x34] sm:$0xf]
        %v2073 = vld [vmem:[#allocation17 + $0x38] sm:$0xf]
        %v2074 = vld [vmem:[#allocation17 + $0x3c] sm:$0xf]
        %v2075 = vld [vmem:[#allocation17 + $0x40] sm:$0xf]
        %v2076 = vld [vmem:[#allocation17 + $0x44] sm:$0xf]
        %v2077 = vld [vmem:[#allocation17 + $0x48] sm:$0xf]
        %v2078 = vld [vmem:[#allocation17 + $0x4c] sm:$0xf]
        %v2079 = vld [vmem:[#allocation17 + $0x50] sm:$0xf]
        %v2080 = vld [vmem:[#allocation17 + $0x54] sm:$0xf]
        %v2081 = vld [vmem:[#allocation17 + $0x58] sm:$0xf]
        %v2082 = vld [vmem:[#allocation17 + $0x5c] sm:$0xf]
        %v2083 = vld [vmem:[#allocation17 + $0x60] sm:$0xf]
        %v2084 = vld [vmem:[#allocation17 + $0x64] sm:$0xf]
        %v2085 = vld [vmem:[#allocation17 + $0x68] sm:$0xf]
        %v2086 = vld [vmem:[#allocation17 + $0x6c] sm:$0xf]
        %v2087 = vld [vmem:[#allocation17 + $0x70] sm:$0xf]
        %v2088 = vld [vmem:[#allocation17 + $0x74] sm:$0xf]
        %v2089 = vld [vmem:[#allocation17 + $0x78] sm:$0xf]
        %v2090 = vld [vmem:[#allocation17 + $0x7c] sm:$0xf]
        %v2091 = vld [vmem:[#allocation17 + $0x80] sm:$0xf]
        %v2092 = vld [vmem:[#allocation17 + $0x84] sm:$0xf]
        %v2093 = vld [vmem:[#allocation17 + $0x88] sm:$0xf]
        %v2094 = vld [vmem:[#allocation17 + $0x8c] sm:$0xf]
        %v2095 = vld [vmem:[#allocation17 + $0x90] sm:$0xf]
        %v2096 = vld [vmem:[#allocation17 + $0x94] sm:$0xf]
        %v2097 = vld [vmem:[#allocation17 + $0x98] sm:$0xf]
        %v2098 = vld [vmem:[#allocation17 + $0x9c] sm:$0xf]
        %v2099 = vld [vmem:[#allocation17 + $0xa0] sm:$0xf]
        %v2100 = vld [vmem:[#allocation17 + $0xa4] sm:$0xf]
        %v2101 = vld [vmem:[#allocation17 + $0xa8] sm:$0xf]
        %v2102 = vld [vmem:[#allocation17 + $0xac] sm:$0xf]
        %v2103 = vld [vmem:[#allocation17 + $0xb0] sm:$0xf]
        %v2104 = vld [vmem:[#allocation17 + $0xb4] sm:$0xf]
        %v2105 = vld [vmem:[#allocation17 + $0xb8] sm:$0xf]
        %v2106 = vld [vmem:[#allocation17 + $0xbc] sm:$0xf]
        %v2107 = vld [vmem:[#allocation17 + $0xc0] sm:$0xf]
        %v2108 = vld [vmem:[#allocation17 + $0xc4] sm:$0xf]
        %v2109 = vld [vmem:[#allocation17 + $0xc8] sm:$0xf]
        %v2110 = vld [vmem:[#allocation17 + $0xcc] sm:$0xf]
        %v2111 = vld [vmem:[#allocation17 + $0xd0] sm:$0xf]
        %v2112 = vld [vmem:[#allocation17 + $0xd4] sm:$0xf]
        %v2113 = vld [vmem:[#allocation17 + $0xd8] sm:$0xf]
        %v2114 = vld [vmem:[#allocation17 + $0xdc] sm:$0xf]
        %v2115 = vld [vmem:[#allocation17 + $0xe0] sm:$0xf]
        %v2116 = vld [vmem:[#allocation17 + $0xe4] sm:$0xf]
        %v2117 = vld [vmem:[#allocation17 + $0xe8] sm:$0xf]
        %v2118 = vld [vmem:[#allocation17 + $0xec] sm:$0xf]
        %v2119 = vld [vmem:[#allocation17 + $0xf0] sm:$0xf]
        %v2120 = vld [vmem:[#allocation17 + $0xf4] sm:$0xf]
        %v2121 = vld [vmem:[#allocation17 + $0xf8] sm:$0xf]
        %v2122 = vld [vmem:[#allocation17 + $0xfc] sm:$0xf]
        %v2123 = vpack.c.bf16 %v1909, %v1909
        %v2124 = vpack.c.bf16 %v1958, %v1958
        %v2125 = vpack.c.bf16 %v2007, %v2007
        %v2126 = vpack.c.bf16 %v2056, %v2056
        %v2127 = vld [vmem:[%s11] sm:$0x1]
        %v2129 = vperm.slane %v2127, 0
        %v2195 = vunpack.c.l.b16 %v2059
        %v2196 = vunpack.c.l.b16 %v2060
        %v2197 = vunpack.c.l.b16 %v2061
        %v2198 = vunpack.c.l.b16 %v2062
        %v2199 = vunpack.c.l.b16 %v2063
        %v2200 = vunpack.c.l.b16 %v2064
        %v2201 = vunpack.c.l.b16 %v2065
        %v2202 = vunpack.c.l.b16 %v2066
        %v2203 = vunpack.c.l.b16 %v2067
        %v2204 = vunpack.c.l.b16 %v2068
        %v2205 = vunpack.c.l.b16 %v2069
        %v2206 = vunpack.c.l.b16 %v2070
        %v2207 = vunpack.c.l.b16 %v2071
        %v2208 = vunpack.c.l.b16 %v2072
        %v2209 = vunpack.c.l.b16 %v2073
        %v2210 = vunpack.c.l.b16 %v2074
        %v2211 = vunpack.c.l.b16 %v2075
        %v2212 = vunpack.c.l.b16 %v2076
        %v2213 = vunpack.c.l.b16 %v2077
        %v2214 = vunpack.c.l.b16 %v2078
        %v2215 = vunpack.c.l.b16 %v2079
        %v2216 = vunpack.c.l.b16 %v2080
        %v2217 = vunpack.c.l.b16 %v2081
        %v2218 = vunpack.c.l.b16 %v2082
        %v2219 = vunpack.c.l.b16 %v2083
        %v2220 = vunpack.c.l.b16 %v2084
        %v2221 = vunpack.c.l.b16 %v2085
        %v2222 = vunpack.c.l.b16 %v2086
        %v2223 = vunpack.c.l.b16 %v2087
        %v2224 = vunpack.c.l.b16 %v2088
        %v2225 = vunpack.c.l.b16 %v2089
        %v2226 = vunpack.c.l.b16 %v2090
        %v2227 = vunpack.c.l.b16 %v2091
        %v2228 = vunpack.c.l.b16 %v2092
        %v2229 = vunpack.c.l.b16 %v2093
        %v2230 = vunpack.c.l.b16 %v2094
        %v2231 = vunpack.c.l.b16 %v2095
        %v2232 = vunpack.c.l.b16 %v2096
        %v2233 = vunpack.c.l.b16 %v2097
        %v2234 = vunpack.c.l.b16 %v2098
        %v2235 = vunpack.c.l.b16 %v2099
        %v2236 = vunpack.c.l.b16 %v2100
        %v2237 = vunpack.c.l.b16 %v2101
        %v2238 = vunpack.c.l.b16 %v2102
        %v2239 = vunpack.c.l.b16 %v2103
        %v2240 = vunpack.c.l.b16 %v2104
        %v2241 = vunpack.c.l.b16 %v2105
        %v2242 = vunpack.c.l.b16 %v2106
        %v2243 = vunpack.c.l.b16 %v2107
        %v2244 = vunpack.c.l.b16 %v2108
        %v2245 = vunpack.c.l.b16 %v2109
        %v2246 = vunpack.c.l.b16 %v2110
        %v2247 = vunpack.c.l.b16 %v2111
        %v2248 = vunpack.c.l.b16 %v2112
        %v2249 = vunpack.c.l.b16 %v2113
        %v2250 = vunpack.c.l.b16 %v2114
        %v2251 = vunpack.c.l.b16 %v2115
        %v2252 = vunpack.c.l.b16 %v2116
        %v2253 = vunpack.c.l.b16 %v2117
        %v2254 = vunpack.c.l.b16 %v2118
        %v2255 = vunpack.c.l.b16 %v2119
        %v2256 = vunpack.c.l.b16 %v2120
        %v2257 = vunpack.c.l.b16 %v2121
        %v2258 = vunpack.c.l.b16 %v2122
        %v2259 = vpack.c.b16 %v2196, %v2195
        %v2260 = vpack.c.b16 %v2198, %v2197
        %v2261 = vpack.c.b16 %v2200, %v2199
        %v2262 = vpack.c.b16 %v2202, %v2201
        %v2263 = vpack.c.b16 %v2204, %v2203
        %v2264 = vpack.c.b16 %v2206, %v2205
        %v2265 = vpack.c.b16 %v2208, %v2207
        %v2266 = vpack.c.b16 %v2210, %v2209
        %v2267 = vpack.c.b16 %v2212, %v2211
        %v2268 = vpack.c.b16 %v2214, %v2213
        %v2269 = vpack.c.b16 %v2216, %v2215
        %v2270 = vpack.c.b16 %v2218, %v2217
        %v2271 = vpack.c.b16 %v2220, %v2219
        %v2272 = vpack.c.b16 %v2222, %v2221
        %v2273 = vpack.c.b16 %v2224, %v2223
        %v2274 = vpack.c.b16 %v2226, %v2225
        %v2275 = vpack.c.b16 %v2228, %v2227
        %v2276 = vpack.c.b16 %v2230, %v2229
        %v2277 = vpack.c.b16 %v2232, %v2231
        %v2278 = vpack.c.b16 %v2234, %v2233
        %v2279 = vpack.c.b16 %v2236, %v2235
        %v2280 = vpack.c.b16 %v2238, %v2237
        %v2281 = vpack.c.b16 %v2240, %v2239
        %v2282 = vpack.c.b16 %v2242, %v2241
        %v2283 = vpack.c.b16 %v2244, %v2243
        %v2284 = vpack.c.b16 %v2246, %v2245
        %v2285 = vpack.c.b16 %v2248, %v2247
        %v2286 = vpack.c.b16 %v2250, %v2249
        %v2287 = vpack.c.b16 %v2252, %v2251
        %v2288 = vpack.c.b16 %v2254, %v2253
        %v2289 = vpack.c.b16 %v2256, %v2255
        %v2290 = vpack.c.b16 %v2258, %v2257
        %2323 = vmatpush.bf16.msra.mxu0 %v2266
        %2324 = vmatpush.bf16.msra.mxu0 %v2265
        %2325 = vmatpush.bf16.msra.mxu0 %v2264
        %2326 = vmatpush.bf16.msra.mxu0 %v2263
        %2327 = vmatpush.bf16.msra.mxu0 %v2262
        %2328 = vmatpush.bf16.msra.mxu0 %v2261
        %2329 = vmatpush.bf16.msra.mxu0 %v2260
        %2330 = vmatpush.bf16.msra.mxu0 %v2259
        %2331 = vmatmul.bf16.gmra.mxu0 %v2123
        %v2332 = vpop.f32.mrf.mxu0
        %v2333 = vadd.f32 %v2129, %v2332
        %v2334 = vpop.f32.mrf.mxu0
        %2335 = vdwg.mxu0
        %2336 = vmatpush.bf16.msra.mxu0 %v2274
        %2337 = vmatpush.bf16.msra.mxu0 %v2273
        %2338 = vmatpush.bf16.msra.mxu0 %v2272
        %2339 = vmatpush.bf16.msra.mxu0 %v2271
        %2340 = vmatpush.bf16.msra.mxu0 %v2270
        %2341 = vmatpush.bf16.msra.mxu0 %v2269
        %2342 = vmatpush.bf16.msra.mxu0 %v2268
        %2343 = vmatpush.bf16.msra.mxu0 %v2267
        %2344 = vmatmul.bf16.gmra.mxu0 %v2124
        %v2345 = vpop.f32.mrf.mxu0
        %v2346 = vadd.f32 %v2333, %v2345
        %v2347 = vpop.f32.mrf.mxu0
        %2348 = vdwg.mxu0
        %2349 = vmatpush.bf16.msra.mxu0 %v2282
        %2350 = vmatpush.bf16.msra.mxu0 %v2281
        %2351 = vmatpush.bf16.msra.mxu0 %v2280
        %2352 = vmatpush.bf16.msra.mxu0 %v2279
        %2353 = vmatpush.bf16.msra.mxu0 %v2278
        %2354 = vmatpush.bf16.msra.mxu0 %v2277
        %2355 = vmatpush.bf16.msra.mxu0 %v2276
        %2356 = vmatpush.bf16.msra.mxu0 %v2275
        %2357 = vmatmul.bf16.gmra.mxu0 %v2125
        %v2358 = vpop.f32.mrf.mxu0
        %v2359 = vadd.f32 %v2346, %v2358
        %v2360 = vpop.f32.mrf.mxu0
        %2361 = vdwg.mxu0
        %2362 = vmatpush.bf16.msra.mxu0 %v2290
        %2363 = vmatpush.bf16.msra.mxu0 %v2289
        %2364 = vmatpush.bf16.msra.mxu0 %v2288
        %2365 = vmatpush.bf16.msra.mxu0 %v2287
        %2366 = vmatpush.bf16.msra.mxu0 %v2286
        %2367 = vmatpush.bf16.msra.mxu0 %v2285
        %2368 = vmatpush.bf16.msra.mxu0 %v2284
        %2369 = vmatpush.bf16.msra.mxu0 %v2283
        %2370 = vmatmul.bf16.gmra.mxu0 %v2126
        %v2371 = vpop.f32.mrf.mxu0
        %v2372 = vadd.f32 %v2359, %v2371
        %v2373 = vpop.f32.mrf.mxu0
        %2374 = vdwg.mxu0
        %v2375 = vadd.f32 %v2372, %v1093
        %v2376 = vld [vmem:[#allocation22] sm:$0x1]
        %v2377 = vld [vmem:[%s17] sm:$0x1]
        %v2378 = vmul.f32 %v2375, %v1060
        %2379 = vadd.xlane.f32.xlu0 %v2378
        %v2380 = vpop.xlane.xlu0 %2379
        %v2381 = vmul.f32 %v2380, 0.03125
        %v2382 = vsub.f32 %v2375, %v2381
        %v2383 = vmul.f32 %v2382, %v1060
        %v2384 = vmul.f32 %v2383, %v2383
        %2385 = vadd.xlane.f32.xlu0 %v2384
        %v2386 = vpop.xlane.xlu0 %2385
        %v2387 = vmul.f32 %v2386, 0.03125
        %v2388 = vadd.f32 %v2387, 1e-12
        %v2389 = vrsqrt.pop %v2388
        %v2390 = vmul.f32 %v2389, %v2388
        %v2391 = vmul.f32 %v2390, %v2389
        %v2392 = vmul.f32 0.5, %v2391
        %v2393 = vsub.f32 1.5, %v2392
        %v2394 = vmul.f32 %v2389, %v2393
        %vm2395 = vweird.f32 %v2388
        %vm2396 = vweird.f32 %v2389
        %vm2397 = vmor %vm2395, %vm2396
        %v2398 = vsel %vm2397, %v2389, %v2394
        %v2399 = vmul.f32 %v2383, %v2398
        %v2401 = vperm.slane %v2376, 0
        %v2403 = vmul.f32 %v2399, %v2401
        %v2405 = vperm.slane %v2377, 0
        %v2407 = vadd.f32 %v2403, %v2405
        %v2408 = vld [vmem:[#allocation19] sm:$0xf]
        %v2409 = vld [vmem:[#allocation19 + $0x4] sm:$0xf]
        %v2410 = vld [vmem:[#allocation19 + $0x8] sm:$0xf]
        %v2411 = vld [vmem:[#allocation19 + $0xc] sm:$0xf]
        %v2412 = vld [vmem:[#allocation19 + $0x10] sm:$0xf]
        %v2413 = vld [vmem:[#allocation19 + $0x14] sm:$0xf]
        %v2414 = vld [vmem:[#allocation19 + $0x18] sm:$0xf]
        %v2415 = vld [vmem:[#allocation19 + $0x1c] sm:$0xf]
        %v2416 = vld [vmem:[#allocation19 + $0x20] sm:$0xf]
        %v2417 = vld [vmem:[#allocation19 + $0x24] sm:$0xf]
        %v2418 = vld [vmem:[#allocation19 + $0x28] sm:$0xf]
        %v2419 = vld [vmem:[#allocation19 + $0x2c] sm:$0xf]
        %v2420 = vld [vmem:[#allocation19 + $0x30] sm:$0xf]
        %v2421 = vld [vmem:[#allocation19 + $0x34] sm:$0xf]
        %v2422 = vld [vmem:[#allocation19 + $0x38] sm:$0xf]
        %v2423 = vld [vmem:[#allocation19 + $0x3c] sm:$0xf]
        %v2424 = vpack.c.bf16 %v2407, %v2407
        %v2425 = vld [vmem:[%s13] sm:$0x1]
        %v2427 = vperm.slane %v2425, 0
        %v2445 = vunpack.c.l.b16 %v2408
        %v2446 = vunpack.c.l.b16 %v2409
        %v2447 = vunpack.c.l.b16 %v2410
        %v2448 = vunpack.c.l.b16 %v2411
        %v2449 = vunpack.c.l.b16 %v2412
        %v2450 = vunpack.c.l.b16 %v2413
        %v2451 = vunpack.c.l.b16 %v2414
        %v2452 = vunpack.c.l.b16 %v2415
        %v2453 = vunpack.c.l.b16 %v2416
        %v2454 = vunpack.c.l.b16 %v2417
        %v2455 = vunpack.c.l.b16 %v2418
        %v2456 = vunpack.c.l.b16 %v2419
        %v2457 = vunpack.c.l.b16 %v2420
        %v2458 = vunpack.c.l.b16 %v2421
        %v2459 = vunpack.c.l.b16 %v2422
        %v2460 = vunpack.c.l.b16 %v2423
        %v2461 = vpack.c.b16 %v2446, %v2445
        %v2462 = vpack.c.b16 %v2448, %v2447
        %v2463 = vpack.c.b16 %v2450, %v2449
        %v2464 = vpack.c.b16 %v2452, %v2451
        %v2465 = vpack.c.b16 %v2454, %v2453
        %v2466 = vpack.c.b16 %v2456, %v2455
        %v2467 = vpack.c.b16 %v2458, %v2457
        %v2468 = vpack.c.b16 %v2460, %v2459
        %2477 = vmatpush.bf16.msra.mxu0 %v2468
        %2478 = vmatpush.bf16.msra.mxu0 %v2467
        %2479 = vmatpush.bf16.msra.mxu0 %v2466
        %2480 = vmatpush.bf16.msra.mxu0 %v2465
        %2481 = vmatpush.bf16.msra.mxu0 %v2464
        %2482 = vmatpush.bf16.msra.mxu0 %v2463
        %2483 = vmatpush.bf16.msra.mxu0 %v2462
        %2484 = vmatpush.bf16.msra.mxu0 %v2461
        %2485 = vmatmul.bf16.gmra.mxu0 %v2424
        %v2486 = vpop.f32.mrf.mxu0
        %v2487 = vadd.f32 %v2427, %v2486
        %v2488 = vpop.f32.mrf.mxu0
        %2489 = vdwg.mxu0
        %v2490 = vmul.f32 %v2487, 0.5
        %v2491 = vmul.f32 %v2487, 0.044715
        %v2492 = vmul.f32 %v2491, %v2487
        %v2493 = vmul.f32 %v2492, %v2487
        %v2494 = vadd.f32 %v2487, %v2493
        %v2495 = vmul.f32 %v2494, 0.7978846
        %v2496 = vtanh.pop %v2495
        %v2497 = vadd.f32 %v2496, 1.0
        %v2498 = vmul.f32 %v2490, %v2497
        %v2499 = vld [vmem:[#allocation20] sm:$0xf]
        %v2500 = vld [vmem:[#allocation20 + $0x4] sm:$0xf]
        %v2501 = vld [vmem:[#allocation20 + $0x8] sm:$0xf]
        %v2502 = vld [vmem:[#allocation20 + $0xc] sm:$0xf]
        %v2503 = vld [vmem:[#allocation20 + $0x10] sm:$0xf]
        %v2504 = vld [vmem:[#allocation20 + $0x14] sm:$0xf]
        %v2505 = vld [vmem:[#allocation20 + $0x18] sm:$0xf]
        %v2506 = vld [vmem:[#allocation20 + $0x1c] sm:$0xf]
        %v2507 = vld [vmem:[#allocation20 + $0x20] sm:$0xf]
        %v2508 = vld [vmem:[#allocation20 + $0x24] sm:$0xf]
        %v2509 = vld [vmem:[#allocation20 + $0x28] sm:$0xf]
        %v2510 = vld [vmem:[#allocation20 + $0x2c] sm:$0xf]
        %v2511 = vld [vmem:[#allocation20 + $0x30] sm:$0xf]
        %v2512 = vld [vmem:[#allocation20 + $0x34] sm:$0xf]
        %v2513 = vld [vmem:[#allocation20 + $0x38] sm:$0xf]
        %v2514 = vld [vmem:[#allocation20 + $0x3c] sm:$0xf]
        %v2515 = vpack.c.bf16 %v2498, %v2498
        %v2516 = vld [vmem:[%s15] sm:$0x1]
        %v2518 = vperm.slane %v2516, 0
        %v2536 = vunpack.c.l.b16 %v2499
        %v2537 = vunpack.c.l.b16 %v2500
        %v2538 = vunpack.c.l.b16 %v2501
        %v2539 = vunpack.c.l.b16 %v2502
        %v2540 = vunpack.c.l.b16 %v2503
        %v2541 = vunpack.c.l.b16 %v2504
        %v2542 = vunpack.c.l.b16 %v2505
        %v2543 = vunpack.c.l.b16 %v2506
        %v2544 = vunpack.c.l.b16 %v2507
        %v2545 = vunpack.c.l.b16 %v2508
        %v2546 = vunpack.c.l.b16 %v2509
        %v2547 = vunpack.c.l.b16 %v2510
        %v2548 = vunpack.c.l.b16 %v2511
        %v2549 = vunpack.c.l.b16 %v2512
        %v2550 = vunpack.c.l.b16 %v2513
        %v2551 = vunpack.c.l.b16 %v2514
        %v2552 = vpack.c.b16 %v2537, %v2536
        %v2553 = vpack.c.b16 %v2539, %v2538
        %v2554 = vpack.c.b16 %v2541, %v2540
        %v2555 = vpack.c.b16 %v2543, %v2542
        %v2556 = vpack.c.b16 %v2545, %v2544
        %v2557 = vpack.c.b16 %v2547, %v2546
        %v2558 = vpack.c.b16 %v2549, %v2548
        %v2559 = vpack.c.b16 %v2551, %v2550
        %2568 = vmatpush.bf16.msra.mxu0 %v2559
        %2569 = vmatpush.bf16.msra.mxu0 %v2558
        %2570 = vmatpush.bf16.msra.mxu0 %v2557
        %2571 = vmatpush.bf16.msra.mxu0 %v2556
        %2572 = vmatpush.bf16.msra.mxu0 %v2555
        %2573 = vmatpush.bf16.msra.mxu0 %v2554
        %2574 = vmatpush.bf16.msra.mxu0 %v2553
        %2575 = vmatpush.bf16.msra.mxu0 %v2552
        %2576 = vmatmul.bf16.gmra.mxu0 %v2515
        %v2577 = vpop.f32.mrf.mxu0
        %v2578 = vadd.f32 %v2518, %v2577
        %v2579 = vpop.f32.mrf.mxu0
        %2580 = vdwg.mxu0
        %v2581 = vadd.f32 %v2578, %v2407
        %v2582 = vld [vmem:[#allocation23] sm:$0x1]
        %v2583 = vld [vmem:[%s19] sm:$0x1]
        %v2584 = vmul.f32 %v2581, %v1060
        %2585 = vadd.xlane.f32.xlu0 %v2584
        %v2586 = vpop.xlane.xlu0 %2585
        %v2587 = vmul.f32 %v2586, 0.03125
        %v2588 = vsub.f32 %v2581, %v2587
        %v2589 = vmul.f32 %v2588, %v1060
        %v2590 = vmul.f32 %v2589, %v2589
        %2591 = vadd.xlane.f32.xlu0 %v2590
        %v2592 = vpop.xlane.xlu0 %2591
        %v2593 = vmul.f32 %v2592, 0.03125
        %v2594 = vadd.f32 %v2593, 1e-12
        %v2595 = vrsqrt.pop %v2594
        %v2596 = vmul.f32 %v2595, %v2594
        %v2597 = vmul.f32 %v2596, %v2595
        %v2598 = vmul.f32 0.5, %v2597
        %v2599 = vsub.f32 1.5, %v2598
        %v2600 = vmul.f32 %v2595, %v2599
        %vm2601 = vweird.f32 %v2594
        %vm2602 = vweird.f32 %v2595
        %vm2603 = vmor %vm2601, %vm2602
        %v2604 = vsel %vm2603, %v2595, %v2600
        %v2605 = vmul.f32 %v2589, %v2604
        %v2607 = vperm.slane %v2582, 0
        %v2609 = vmul.f32 %v2605, %v2607
        %v2611 = vperm.slane %v2583, 0
        %v2613 = vadd.f32 %v2609, %v2611
        %v2614 = vpack.c.bf16 %v2613, %v2613
        %s2615 = scalar_lea.vmem [#allocation10], 256
        %v2616 = vld [vmem:[%s2615] sm:$0xff]
        %v2617 = vld [vmem:[%s2615 + $0x8] sm:$0xff]
        %v2618 = vld [vmem:[%s2615 + $0x10] sm:$0xff]
        %v2619 = vld [vmem:[%s2615 + $0x18] sm:$0xff]
        %v2620 = vld [vmem:[%s2615 + $0x20] sm:$0xff]
        %v2621 = vld [vmem:[%s2615 + $0x28] sm:$0xff]
        %v2622 = vld [vmem:[%s2615 + $0x30] sm:$0xff]
        %v2623 = vld [vmem:[%s2615 + $0x38] sm:$0xff]
        %v2624 = vld [vmem:[%s2615 + $0x40] sm:$0xff]
        %v2625 = vld [vmem:[%s2615 + $0x48] sm:$0xff]
        %v2626 = vld [vmem:[%s2615 + $0x50] sm:$0xff]
        %v2627 = vld [vmem:[%s2615 + $0x58] sm:$0xff]
        %v2628 = vld [vmem:[%s2615 + $0x60] sm:$0xff]
        %v2629 = vld [vmem:[%s2615 + $0x68] sm:$0xff]
        %v2630 = vld [vmem:[%s2615 + $0x70] sm:$0xff]
        %v2631 = vld [vmem:[%s2615 + $0x78] sm:$0xff]
        %v2632 = vld [vmem:[%s2615 + $0x80] sm:$0xff]
        %v2633 = vld [vmem:[%s2615 + $0x88] sm:$0xff]
        %v2634 = vld [vmem:[%s2615 + $0x90] sm:$0xff]
        %v2635 = vld [vmem:[%s2615 + $0x98] sm:$0xff]
        %v2636 = vld [vmem:[%s2615 + $0xa0] sm:$0xff]
        %v2637 = vld [vmem:[%s2615 + $0xa8] sm:$0xff]
        %v2638 = vld [vmem:[%s2615 + $0xb0] sm:$0xff]
        %v2639 = vld [vmem:[%s2615 + $0xb8] sm:$0xff]
        %v2640 = vld [vmem:[%s2615 + $0xc0] sm:$0xff]
        %v2641 = vld [vmem:[%s2615 + $0xc8] sm:$0xff]
        %v2642 = vld [vmem:[%s2615 + $0xd0] sm:$0xff]
        %v2643 = vld [vmem:[%s2615 + $0xd8] sm:$0xff]
        %v2644 = vld [vmem:[%s2615 + $0xe0] sm:$0xff]
        %v2645 = vld [vmem:[%s2615 + $0xe8] sm:$0xff]
        %v2646 = vld [vmem:[%s2615 + $0xf0] sm:$0xff]
        %v2647 = vld [vmem:[%s2615 + $0xf8] sm:$0xff]
        %s2648 = scalar_lea.vmem [#allocation11], 4
        %v2649 = vld [vmem:[%s2648] sm:$0xf]
        %v2651 = vperm.slane %v2649, 0
        %v2652 = vperm.slane %v2649, 1
        %v2653 = vperm.slane %v2649, 2
        %v2654 = vperm.slane %v2649, 3
        %v2691 = vunpack.c.l.b16 %v2616
        %v2692 = vunpack.c.h.b16 %v2616
        %v2693 = vunpack.c.l.b16 %v2617
        %v2694 = vunpack.c.h.b16 %v2617
        %v2695 = vunpack.c.l.b16 %v2618
        %v2696 = vunpack.c.h.b16 %v2618
        %v2697 = vunpack.c.l.b16 %v2619
        %v2698 = vunpack.c.h.b16 %v2619
        %v2699 = vunpack.c.l.b16 %v2620
        %v2700 = vunpack.c.h.b16 %v2620
        %v2701 = vunpack.c.l.b16 %v2621
        %v2702 = vunpack.c.h.b16 %v2621
        %v2703 = vunpack.c.l.b16 %v2622
        %v2704 = vunpack.c.h.b16 %v2622
        %v2705 = vunpack.c.l.b16 %v2623
        %v2706 = vunpack.c.h.b16 %v2623
        %v2707 = vunpack.c.l.b16 %v2624
        %v2708 = vunpack.c.h.b16 %v2624
        %v2709 = vunpack.c.l.b16 %v2625
        %v2710 = vunpack.c.h.b16 %v2625
        %v2711 = vunpack.c.l.b16 %v2626
        %v2712 = vunpack.c.h.b16 %v2626
        %v2713 = vunpack.c.l.b16 %v2627
        %v2714 = vunpack.c.h.b16 %v2627
        %v2715 = vunpack.c.l.b16 %v2628
        %v2716 = vunpack.c.h.b16 %v2628
        %v2717 = vunpack.c.l.b16 %v2629
        %v2718 = vunpack.c.h.b16 %v2629
        %v2719 = vunpack.c.l.b16 %v2630
        %v2720 = vunpack.c.h.b16 %v2630
        %v2721 = vunpack.c.l.b16 %v2631
        %v2722 = vunpack.c.h.b16 %v2631
        %v2723 = vunpack.c.l.b16 %v2632
        %v2724 = vunpack.c.h.b16 %v2632
        %v2725 = vunpack.c.l.b16 %v2633
        %v2726 = vunpack.c.h.b16 %v2633
        %v2727 = vunpack.c.l.b16 %v2634
        %v2728 = vunpack.c.h.b16 %v2634
        %v2729 = vunpack.c.l.b16 %v2635
        %v2730 = vunpack.c.h.b16 %v2635
        %v2731 = vunpack.c.l.b16 %v2636
        %v2732 = vunpack.c.h.b16 %v2636
        %v2733 = vunpack.c.l.b16 %v2637
        %v2734 = vunpack.c.h.b16 %v2637
        %v2735 = vunpack.c.l.b16 %v2638
        %v2736 = vunpack.c.h.b16 %v2638
        %v2737 = vunpack.c.l.b16 %v2639
        %v2738 = vunpack.c.h.b16 %v2639
        %v2739 = vunpack.c.l.b16 %v2640
        %v2740 = vunpack.c.h.b16 %v2640
        %v2741 = vunpack.c.l.b16 %v2641
        %v2742 = vunpack.c.h.b16 %v2641
        %v2743 = vunpack.c.l.b16 %v2642
        %v2744 = vunpack.c.h.b16 %v2642
        %v2745 = vunpack.c.l.b16 %v2643
        %v2746 = vunpack.c.h.b16 %v2643
        %v2747 = vunpack.c.l.b16 %v2644
        %v2748 = vunpack.c.h.b16 %v2644
        %v2749 = vunpack.c.l.b16 %v2645
        %v2750 = vunpack.c.h.b16 %v2645
        %v2751 = vunpack.c.l.b16 %v2646
        %v2752 = vunpack.c.h.b16 %v2646
        %v2753 = vunpack.c.l.b16 %v2647
        %v2754 = vunpack.c.h.b16 %v2647
        %v2755 = vpack.c.b16 %v2695, %v2691
        %v2756 = vpack.c.b16 %v2696, %v2692
        %v2757 = vpack.c.b16 %v2697, %v2693
        %v2758 = vpack.c.b16 %v2698, %v2694
        %v2759 = vpack.c.b16 %v2703, %v2699
        %v2760 = vpack.c.b16 %v2704, %v2700
        %v2761 = vpack.c.b16 %v2705, %v2701
        %v2762 = vpack.c.b16 %v2706, %v2702
        %v2763 = vpack.c.b16 %v2711, %v2707
        %v2764 = vpack.c.b16 %v2712, %v2708
        %v2765 = vpack.c.b16 %v2713, %v2709
        %v2766 = vpack.c.b16 %v2714, %v2710
        %v2767 = vpack.c.b16 %v2719, %v2715
        %v2768 = vpack.c.b16 %v2720, %v2716
        %v2769 = vpack.c.b16 %v2721, %v2717
        %v2770 = vpack.c.b16 %v2722, %v2718
        %v2771 = vpack.c.b16 %v2727, %v2723
        %v2772 = vpack.c.b16 %v2728, %v2724
        %v2773 = vpack.c.b16 %v2729, %v2725
        %v2774 = vpack.c.b16 %v2730, %v2726
        %v2775 = vpack.c.b16 %v2735, %v2731
        %v2776 = vpack.c.b16 %v2736, %v2732
        %v2777 = vpack.c.b16 %v2737, %v2733
        %v2778 = vpack.c.b16 %v2738, %v2734
        %v2779 = vpack.c.b16 %v2743, %v2739
        %v2780 = vpack.c.b16 %v2744, %v2740
        %v2781 = vpack.c.b16 %v2745, %v2741
        %v2782 = vpack.c.b16 %v2746, %v2742
        %v2783 = vpack.c.b16 %v2751, %v2747
        %v2784 = vpack.c.b16 %v2752, %v2748
        %v2785 = vpack.c.b16 %v2753, %v2749
        %v2786 = vpack.c.b16 %v2754, %v2750
        %2819 = vmatpush.bf16.msra.mxu0 %v2783
        %2820 = vmatpush.bf16.msra.mxu0 %v2779
        %2821 = vmatpush.bf16.msra.mxu0 %v2775
        %2822 = vmatpush.bf16.msra.mxu0 %v2771
        %2823 = vmatpush.bf16.msra.mxu0 %v2767
        %2824 = vmatpush.bf16.msra.mxu0 %v2763
        %2825 = vmatpush.bf16.msra.mxu0 %v2759
        %2826 = vmatpush.bf16.msra.mxu0 %v2755
        %2827 = vmatmul.bf16.gmra.mxu0 %v2614
        %v2828 = vpop.f32.mrf.mxu0
        %v2829 = vadd.f32 %v2651, %v2828
        %v2830 = vpop.f32.mrf.mxu0
        %2831 = vdwg.mxu0
        %2832 = vmatpush.bf16.msra.mxu0 %v2784
        %2833 = vmatpush.bf16.msra.mxu0 %v2780
        %2834 = vmatpush.bf16.msra.mxu0 %v2776
        %2835 = vmatpush.bf16.msra.mxu0 %v2772
        %2836 = vmatpush.bf16.msra.mxu0 %v2768
        %2837 = vmatpush.bf16.msra.mxu0 %v2764
        %2838 = vmatpush.bf16.msra.mxu0 %v2760
        %2839 = vmatpush.bf16.msra.mxu0 %v2756
        %2840 = vmatmul.bf16.gmra.mxu0 %v2614
        %v2841 = vpop.f32.mrf.mxu0
        %v2842 = vadd.f32 %v2652, %v2841
        %v2843 = vpop.f32.mrf.mxu0
        %2844 = vdwg.mxu0
        %2845 = vmatpush.bf16.msra.mxu0 %v2785
        %2846 = vmatpush.bf16.msra.mxu0 %v2781
        %2847 = vmatpush.bf16.msra.mxu0 %v2777
        %2848 = vmatpush.bf16.msra.mxu0 %v2773
        %2849 = vmatpush.bf16.msra.mxu0 %v2769
        %2850 = vmatpush.bf16.msra.mxu0 %v2765
        %2851 = vmatpush.bf16.msra.mxu0 %v2761
        %2852 = vmatpush.bf16.msra.mxu0 %v2757
        %2853 = vmatmul.bf16.gmra.mxu0 %v2614
        %v2854 = vpop.f32.mrf.mxu0
        %v2855 = vadd.f32 %v2653, %v2854
        %v2856 = vpop.f32.mrf.mxu0
        %2857 = vdwg.mxu0
        %2858 = vmatpush.bf16.msra.mxu0 %v2786
        %2859 = vmatpush.bf16.msra.mxu0 %v2782
        %2860 = vmatpush.bf16.msra.mxu0 %v2778
        %2861 = vmatpush.bf16.msra.mxu0 %v2774
        %2862 = vmatpush.bf16.msra.mxu0 %v2770
        %2863 = vmatpush.bf16.msra.mxu0 %v2766
        %2864 = vmatpush.bf16.msra.mxu0 %v2762
        %2865 = vmatpush.bf16.msra.mxu0 %v2758
        %2866 = vmatmul.bf16.gmra.mxu0 %v2614
        %v2867 = vpop.f32.mrf.mxu0
        %v2868 = vadd.f32 %v2654, %v2867
        %v2869 = vpop.f32.mrf.mxu0
        %2870 = vdwg.mxu0
        %s2871 = scalar_lea.vmem [#allocation13], 256
        %v2872 = vld [vmem:[%s2871] sm:$0xff]
        %v2873 = vld [vmem:[%s2871 + $0x8] sm:$0xff]
        %v2874 = vld [vmem:[%s2871 + $0x10] sm:$0xff]
        %v2875 = vld [vmem:[%s2871 + $0x18] sm:$0xff]
        %v2876 = vld [vmem:[%s2871 + $0x20] sm:$0xff]
        %v2877 = vld [vmem:[%s2871 + $0x28] sm:$0xff]
        %v2878 = vld [vmem:[%s2871 + $0x30] sm:$0xff]
        %v2879 = vld [vmem:[%s2871 + $0x38] sm:$0xff]
        %v2880 = vld [vmem:[%s2871 + $0x40] sm:$0xff]
        %v2881 = vld [vmem:[%s2871 + $0x48] sm:$0xff]
        %v2882 = vld [vmem:[%s2871 + $0x50] sm:$0xff]
        %v2883 = vld [vmem:[%s2871 + $0x58] sm:$0xff]
        %v2884 = vld [vmem:[%s2871 + $0x60] sm:$0xff]
        %v2885 = vld [vmem:[%s2871 + $0x68] sm:$0xff]
        %v2886 = vld [vmem:[%s2871 + $0x70] sm:$0xff]
        %v2887 = vld [vmem:[%s2871 + $0x78] sm:$0xff]
        %v2888 = vld [vmem:[%s2871 + $0x80] sm:$0xff]
        %v2889 = vld [vmem:[%s2871 + $0x88] sm:$0xff]
        %v2890 = vld [vmem:[%s2871 + $0x90] sm:$0xff]
        %v2891 = vld [vmem:[%s2871 + $0x98] sm:$0xff]
        %v2892 = vld [vmem:[%s2871 + $0xa0] sm:$0xff]
        %v2893 = vld [vmem:[%s2871 + $0xa8] sm:$0xff]
        %v2894 = vld [vmem:[%s2871 + $0xb0] sm:$0xff]
        %v2895 = vld [vmem:[%s2871 + $0xb8] sm:$0xff]
        %v2896 = vld [vmem:[%s2871 + $0xc0] sm:$0xff]
        %v2897 = vld [vmem:[%s2871 + $0xc8] sm:$0xff]
        %v2898 = vld [vmem:[%s2871 + $0xd0] sm:$0xff]
        %v2899 = vld [vmem:[%s2871 + $0xd8] sm:$0xff]
        %v2900 = vld [vmem:[%s2871 + $0xe0] sm:$0xff]
        %v2901 = vld [vmem:[%s2871 + $0xe8] sm:$0xff]
        %v2902 = vld [vmem:[%s2871 + $0xf0] sm:$0xff]
        %v2903 = vld [vmem:[%s2871 + $0xf8] sm:$0xff]
        %s2904 = scalar_lea.vmem [#allocation14], 4
        %v2905 = vld [vmem:[%s2904] sm:$0xf]
        %v2907 = vperm.slane %v2905, 0
        %v2908 = vperm.slane %v2905, 1
        %v2909 = vperm.slane %v2905, 2
        %v2910 = vperm.slane %v2905, 3
        %v2947 = vunpack.c.l.b16 %v2872
        %v2948 = vunpack.c.h.b16 %v2872
        %v2949 = vunpack.c.l.b16 %v2873
        %v2950 = vunpack.c.h.b16 %v2873
        %v2951 = vunpack.c.l.b16 %v2874
        %v2952 = vunpack.c.h.b16 %v2874
        %v2953 = vunpack.c.l.b16 %v2875
        %v2954 = vunpack.c.h.b16 %v2875
        %v2955 = vunpack.c.l.b16 %v2876
        %v2956 = vunpack.c.h.b16 %v2876
        %v2957 = vunpack.c.l.b16 %v2877
        %v2958 = vunpack.c.h.b16 %v2877
        %v2959 = vunpack.c.l.b16 %v2878
        %v2960 = vunpack.c.h.b16 %v2878
        %v2961 = vunpack.c.l.b16 %v2879
        %v2962 = vunpack.c.h.b16 %v2879
        %v2963 = vunpack.c.l.b16 %v2880
        %v2964 = vunpack.c.h.b16 %v2880
        %v2965 = vunpack.c.l.b16 %v2881
        %v2966 = vunpack.c.h.b16 %v2881
        %v2967 = vunpack.c.l.b16 %v2882
        %v2968 = vunpack.c.h.b16 %v2882
        %v2969 = vunpack.c.l.b16 %v2883
        %v2970 = vunpack.c.h.b16 %v2883
        %v2971 = vunpack.c.l.b16 %v2884
        %v2972 = vunpack.c.h.b16 %v2884
        %v2973 = vunpack.c.l.b16 %v2885
        %v2974 = vunpack.c.h.b16 %v2885
        %v2975 = vunpack.c.l.b16 %v2886
        %v2976 = vunpack.c.h.b16 %v2886
        %v2977 = vunpack.c.l.b16 %v2887
        %v2978 = vunpack.c.h.b16 %v2887
        %v2979 = vunpack.c.l.b16 %v2888
        %v2980 = vunpack.c.h.b16 %v2888
        %v2981 = vunpack.c.l.b16 %v2889
        %v2982 = vunpack.c.h.b16 %v2889
        %v2983 = vunpack.c.l.b16 %v2890
        %v2984 = vunpack.c.h.b16 %v2890
        %v2985 = vunpack.c.l.b16 %v2891
        %v2986 = vunpack.c.h.b16 %v2891
        %v2987 = vunpack.c.l.b16 %v2892
        %v2988 = vunpack.c.h.b16 %v2892
        %v2989 = vunpack.c.l.b16 %v2893
        %v2990 = vunpack.c.h.b16 %v2893
        %v2991 = vunpack.c.l.b16 %v2894
        %v2992 = vunpack.c.h.b16 %v2894
        %v2993 = vunpack.c.l.b16 %v2895
        %v2994 = vunpack.c.h.b16 %v2895
        %v2995 = vunpack.c.l.b16 %v2896
        %v2996 = vunpack.c.h.b16 %v2896
        %v2997 = vunpack.c.l.b16 %v2897
        %v2998 = vunpack.c.h.b16 %v2897
        %v2999 = vunpack.c.l.b16 %v2898
        %v3000 = vunpack.c.h.b16 %v2898
        %v3001 = vunpack.c.l.b16 %v2899
        %v3002 = vunpack.c.h.b16 %v2899
        %v3003 = vunpack.c.l.b16 %v2900
        %v3004 = vunpack.c.h.b16 %v2900
        %v3005 = vunpack.c.l.b16 %v2901
        %v3006 = vunpack.c.h.b16 %v2901
        %v3007 = vunpack.c.l.b16 %v2902
        %v3008 = vunpack.c.h.b16 %v2902
        %v3009 = vunpack.c.l.b16 %v2903
        %v3010 = vunpack.c.h.b16 %v2903
        %v3011 = vpack.c.b16 %v2951, %v2947
        %v3012 = vpack.c.b16 %v2952, %v2948
        %v3013 = vpack.c.b16 %v2953, %v2949
        %v3014 = vpack.c.b16 %v2954, %v2950
        %v3015 = vpack.c.b16 %v2959, %v2955
        %v3016 = vpack.c.b16 %v2960, %v2956
        %v3017 = vpack.c.b16 %v2961, %v2957
        %v3018 = vpack.c.b16 %v2962, %v2958
        %v3019 = vpack.c.b16 %v2967, %v2963
        %v3020 = vpack.c.b16 %v2968, %v2964
        %v3021 = vpack.c.b16 %v2969, %v2965
        %v3022 = vpack.c.b16 %v2970, %v2966
        %v3023 = vpack.c.b16 %v2975, %v2971
        %v3024 = vpack.c.b16 %v2976, %v2972
        %v3025 = vpack.c.b16 %v2977, %v2973
        %v3026 = vpack.c.b16 %v2978, %v2974
        %v3027 = vpack.c.b16 %v2983, %v2979
        %v3028 = vpack.c.b16 %v2984, %v2980
        %v3029 = vpack.c.b16 %v2985, %v2981
        %v3030 = vpack.c.b16 %v2986, %v2982
        %v3031 = vpack.c.b16 %v2991, %v2987
        %v3032 = vpack.c.b16 %v2992, %v2988
        %v3033 = vpack.c.b16 %v2993, %v2989
        %v3034 = vpack.c.b16 %v2994, %v2990
        %v3035 = vpack.c.b16 %v2999, %v2995
        %v3036 = vpack.c.b16 %v3000, %v2996
        %v3037 = vpack.c.b16 %v3001, %v2997
        %v3038 = vpack.c.b16 %v3002, %v2998
        %v3039 = vpack.c.b16 %v3007, %v3003
        %v3040 = vpack.c.b16 %v3008, %v3004
        %v3041 = vpack.c.b16 %v3009, %v3005
        %v3042 = vpack.c.b16 %v3010, %v3006
        %3075 = vmatpush.bf16.msra.mxu0 %v3039
        %3076 = vmatpush.bf16.msra.mxu0 %v3035
        %3077 = vmatpush.bf16.msra.mxu0 %v3031
        %3078 = vmatpush.bf16.msra.mxu0 %v3027
        %3079 = vmatpush.bf16.msra.mxu0 %v3023
        %3080 = vmatpush.bf16.msra.mxu0 %v3019
        %3081 = vmatpush.bf16.msra.mxu0 %v3015
        %3082 = vmatpush.bf16.msra.mxu0 %v3011
        %3083 = vmatmul.bf16.gmra.mxu0 %v2614
        %v3084 = vpop.f32.mrf.mxu0
        %v3085 = vadd.f32 %v2907, %v3084
        %v3086 = vpop.f32.mrf.mxu0
        %3087 = vdwg.mxu0
        %3088 = vmatpush.bf16.msra.mxu0 %v3040
        %3089 = vmatpush.bf16.msra.mxu0 %v3036
        %3090 = vmatpush.bf16.msra.mxu0 %v3032
        %3091 = vmatpush.bf16.msra.mxu0 %v3028
        %3092 = vmatpush.bf16.msra.mxu0 %v3024
        %3093 = vmatpush.bf16.msra.mxu0 %v3020
        %3094 = vmatpush.bf16.msra.mxu0 %v3016
        %3095 = vmatpush.bf16.msra.mxu0 %v3012
        %3096 = vmatmul.bf16.gmra.mxu0 %v2614
        %v3097 = vpop.f32.mrf.mxu0
        %v3098 = vadd.f32 %v2908, %v3097
        %v3099 = vpop.f32.mrf.mxu0
        %3100 = vdwg.mxu0
        %3101 = vmatpush.bf16.msra.mxu0 %v3041
        %3102 = vmatpush.bf16.msra.mxu0 %v3037
        %3103 = vmatpush.bf16.msra.mxu0 %v3033
        %3104 = vmatpush.bf16.msra.mxu0 %v3029
        %3105 = vmatpush.bf16.msra.mxu0 %v3025
        %3106 = vmatpush.bf16.msra.mxu0 %v3021
        %3107 = vmatpush.bf16.msra.mxu0 %v3017
        %3108 = vmatpush.bf16.msra.mxu0 %v3013
        %3109 = vmatmul.bf16.gmra.mxu0 %v2614
        %v3110 = vpop.f32.mrf.mxu0
        %v3111 = vadd.f32 %v2909, %v3110
        %v3112 = vpop.f32.mrf.mxu0
        %3113 = vdwg.mxu0
        %3114 = vmatpush.bf16.msra.mxu0 %v3042
        %3115 = vmatpush.bf16.msra.mxu0 %v3038
        %3116 = vmatpush.bf16.msra.mxu0 %v3034
        %3117 = vmatpush.bf16.msra.mxu0 %v3030
        %3118 = vmatpush.bf16.msra.mxu0 %v3026
        %3119 = vmatpush.bf16.msra.mxu0 %v3022
        %3120 = vmatpush.bf16.msra.mxu0 %v3018
        %3121 = vmatpush.bf16.msra.mxu0 %v3014
        %3122 = vmatmul.bf16.gmra.mxu0 %v2614
        %v3123 = vpop.f32.mrf.mxu0
        %v3124 = vadd.f32 %v2910, %v3123
        %v3125 = vpop.f32.mrf.mxu0
        %3126 = vdwg.mxu0
        %s3127 = scalar_lea.vmem [#allocation16], 256
        %v3128 = vld [vmem:[%s3127] sm:$0xff]
        %v3129 = vld [vmem:[%s3127 + $0x8] sm:$0xff]
        %v3130 = vld [vmem:[%s3127 + $0x10] sm:$0xff]
        %v3131 = vld [vmem:[%s3127 + $0x18] sm:$0xff]
        %v3132 = vld [vmem:[%s3127 + $0x20] sm:$0xff]
        %v3133 = vld [vmem:[%s3127 + $0x28] sm:$0xff]
        %v3134 = vld [vmem:[%s3127 + $0x30] sm:$0xff]
        %v3135 = vld [vmem:[%s3127 + $0x38] sm:$0xff]
        %v3136 = vld [vmem:[%s3127 + $0x40] sm:$0xff]
        %v3137 = vld [vmem:[%s3127 + $0x48] sm:$0xff]
        %v3138 = vld [vmem:[%s3127 + $0x50] sm:$0xff]
        %v3139 = vld [vmem:[%s3127 + $0x58] sm:$0xff]
        %v3140 = vld [vmem:[%s3127 + $0x60] sm:$0xff]
        %v3141 = vld [vmem:[%s3127 + $0x68] sm:$0xff]
        %v3142 = vld [vmem:[%s3127 + $0x70] sm:$0xff]
        %v3143 = vld [vmem:[%s3127 + $0x78] sm:$0xff]
        %v3144 = vld [vmem:[%s3127 + $0x80] sm:$0xff]
        %v3145 = vld [vmem:[%s3127 + $0x88] sm:$0xff]
        %v3146 = vld [vmem:[%s3127 + $0x90] sm:$0xff]
        %v3147 = vld [vmem:[%s3127 + $0x98] sm:$0xff]
        %v3148 = vld [vmem:[%s3127 + $0xa0] sm:$0xff]
        %v3149 = vld [vmem:[%s3127 + $0xa8] sm:$0xff]
        %v3150 = vld [vmem:[%s3127 + $0xb0] sm:$0xff]
        %v3151 = vld [vmem:[%s3127 + $0xb8] sm:$0xff]
        %v3152 = vld [vmem:[%s3127 + $0xc0] sm:$0xff]
        %v3153 = vld [vmem:[%s3127 + $0xc8] sm:$0xff]
        %v3154 = vld [vmem:[%s3127 + $0xd0] sm:$0xff]
        %v3155 = vld [vmem:[%s3127 + $0xd8] sm:$0xff]
        %v3156 = vld [vmem:[%s3127 + $0xe0] sm:$0xff]
        %v3157 = vld [vmem:[%s3127 + $0xe8] sm:$0xff]
        %v3158 = vld [vmem:[%s3127 + $0xf0] sm:$0xff]
        %v3159 = vld [vmem:[%s3127 + $0xf8] sm:$0xff]
        %s3160 = scalar_lea.vmem %s9, 4
        %v3161 = vld [vmem:[%s3160] sm:$0xf]
        %v3163 = vperm.slane %v3161, 0
        %v3164 = vperm.slane %v3161, 1
        %v3165 = vperm.slane %v3161, 2
        %v3166 = vperm.slane %v3161, 3
        %v3203 = vunpack.c.l.b16 %v3128
        %v3204 = vunpack.c.h.b16 %v3128
        %v3205 = vunpack.c.l.b16 %v3129
        %v3206 = vunpack.c.h.b16 %v3129
        %v3207 = vunpack.c.l.b16 %v3130
        %v3208 = vunpack.c.h.b16 %v3130
        %v3209 = vunpack.c.l.b16 %v3131
        %v3210 = vunpack.c.h.b16 %v3131
        %v3211 = vunpack.c.l.b16 %v3132
        %v3212 = vunpack.c.h.b16 %v3132
        %v3213 = vunpack.c.l.b16 %v3133
        %v3214 = vunpack.c.h.b16 %v3133
        %v3215 = vunpack.c.l.b16 %v3134
        %v3216 = vunpack.c.h.b16 %v3134
        %v3217 = vunpack.c.l.b16 %v3135
        %v3218 = vunpack.c.h.b16 %v3135
        %v3219 = vunpack.c.l.b16 %v3136
        %v3220 = vunpack.c.h.b16 %v3136
        %v3221 = vunpack.c.l.b16 %v3137
        %v3222 = vunpack.c.h.b16 %v3137
        %v3223 = vunpack.c.l.b16 %v3138
        %v3224 = vunpack.c.h.b16 %v3138
        %v3225 = vunpack.c.l.b16 %v3139
        %v3226 = vunpack.c.h.b16 %v3139
        %v3227 = vunpack.c.l.b16 %v3140
        %v3228 = vunpack.c.h.b16 %v3140
        %v3229 = vunpack.c.l.b16 %v3141
        %v3230 = vunpack.c.h.b16 %v3141
        %v3231 = vunpack.c.l.b16 %v3142
        %v3232 = vunpack.c.h.b16 %v3142
        %v3233 = vunpack.c.l.b16 %v3143
        %v3234 = vunpack.c.h.b16 %v3143
        %v3235 = vunpack.c.l.b16 %v3144
        %v3236 = vunpack.c.h.b16 %v3144
        %v3237 = vunpack.c.l.b16 %v3145
        %v3238 = vunpack.c.h.b16 %v3145
        %v3239 = vunpack.c.l.b16 %v3146
        %v3240 = vunpack.c.h.b16 %v3146
        %v3241 = vunpack.c.l.b16 %v3147
        %v3242 = vunpack.c.h.b16 %v3147
        %v3243 = vunpack.c.l.b16 %v3148
        %v3244 = vunpack.c.h.b16 %v3148
        %v3245 = vunpack.c.l.b16 %v3149
        %v3246 = vunpack.c.h.b16 %v3149
        %v3247 = vunpack.c.l.b16 %v3150
        %v3248 = vunpack.c.h.b16 %v3150
        %v3249 = vunpack.c.l.b16 %v3151
        %v3250 = vunpack.c.h.b16 %v3151
        %v3251 = vunpack.c.l.b16 %v3152
        %v3252 = vunpack.c.h.b16 %v3152
        %v3253 = vunpack.c.l.b16 %v3153
        %v3254 = vunpack.c.h.b16 %v3153
        %v3255 = vunpack.c.l.b16 %v3154
        %v3256 = vunpack.c.h.b16 %v3154
        %v3257 = vunpack.c.l.b16 %v3155
        %v3258 = vunpack.c.h.b16 %v3155
        %v3259 = vunpack.c.l.b16 %v3156
        %v3260 = vunpack.c.h.b16 %v3156
        %v3261 = vunpack.c.l.b16 %v3157
        %v3262 = vunpack.c.h.b16 %v3157
        %v3263 = vunpack.c.l.b16 %v3158
        %v3264 = vunpack.c.h.b16 %v3158
        %v3265 = vunpack.c.l.b16 %v3159
        %v3266 = vunpack.c.h.b16 %v3159
        %v3267 = vpack.c.b16 %v3207, %v3203
        %v3268 = vpack.c.b16 %v3208, %v3204
        %v3269 = vpack.c.b16 %v3209, %v3205
        %v3270 = vpack.c.b16 %v3210, %v3206
        %v3271 = vpack.c.b16 %v3215, %v3211
        %v3272 = vpack.c.b16 %v3216, %v3212
        %v3273 = vpack.c.b16 %v3217, %v3213
        %v3274 = vpack.c.b16 %v3218, %v3214
        %v3275 = vpack.c.b16 %v3223, %v3219
        %v3276 = vpack.c.b16 %v3224, %v3220
        %v3277 = vpack.c.b16 %v3225, %v3221
        %v3278 = vpack.c.b16 %v3226, %v3222
        %v3279 = vpack.c.b16 %v3231, %v3227
        %v3280 = vpack.c.b16 %v3232, %v3228
        %v3281 = vpack.c.b16 %v3233, %v3229
        %v3282 = vpack.c.b16 %v3234, %v3230
        %v3283 = vpack.c.b16 %v3239, %v3235
        %v3284 = vpack.c.b16 %v3240, %v3236
        %v3285 = vpack.c.b16 %v3241, %v3237
        %v3286 = vpack.c.b16 %v3242, %v3238
        %v3287 = vpack.c.b16 %v3247, %v3243
        %v3288 = vpack.c.b16 %v3248, %v3244
        %v3289 = vpack.c.b16 %v3249, %v3245
        %v3290 = vpack.c.b16 %v3250, %v3246
        %v3291 = vpack.c.b16 %v3255, %v3251
        %v3292 = vpack.c.b16 %v3256, %v3252
        %v3293 = vpack.c.b16 %v3257, %v3253
        %v3294 = vpack.c.b16 %v3258, %v3254
        %v3295 = vpack.c.b16 %v3263, %v3259
        %v3296 = vpack.c.b16 %v3264, %v3260
        %v3297 = vpack.c.b16 %v3265, %v3261
        %v3298 = vpack.c.b16 %v3266, %v3262
        %3331 = vmatpush.bf16.msra.mxu0 %v3295
        %3332 = vmatpush.bf16.msra.mxu0 %v3291
        %3333 = vmatpush.bf16.msra.mxu0 %v3287
        %3334 = vmatpush.bf16.msra.mxu0 %v3283
        %3335 = vmatpush.bf16.msra.mxu0 %v3279
        %3336 = vmatpush.bf16.msra.mxu0 %v3275
        %3337 = vmatpush.bf16.msra.mxu0 %v3271
        %3338 = vmatpush.bf16.msra.mxu0 %v3267
        %3339 = vmatmul.bf16.gmra.mxu0 %v2614
        %v3340 = vpop.f32.mrf.mxu0
        %v3341 = vadd.f32 %v3163, %v3340
        %v3342 = vpop.f32.mrf.mxu0
        %3343 = vdwg.mxu0
        %3344 = vmatpush.bf16.msra.mxu0 %v3296
        %3345 = vmatpush.bf16.msra.mxu0 %v3292
        %3346 = vmatpush.bf16.msra.mxu0 %v3288
        %3347 = vmatpush.bf16.msra.mxu0 %v3284
        %3348 = vmatpush.bf16.msra.mxu0 %v3280
        %3349 = vmatpush.bf16.msra.mxu0 %v3276
        %3350 = vmatpush.bf16.msra.mxu0 %v3272
        %3351 = vmatpush.bf16.msra.mxu0 %v3268
        %3352 = vmatmul.bf16.gmra.mxu0 %v2614
        %v3353 = vpop.f32.mrf.mxu0
        %v3354 = vadd.f32 %v3164, %v3353
        %v3355 = vpop.f32.mrf.mxu0
        %3356 = vdwg.mxu0
        %3357 = vmatpush.bf16.msra.mxu0 %v3297
        %3358 = vmatpush.bf16.msra.mxu0 %v3293
        %3359 = vmatpush.bf16.msra.mxu0 %v3289
        %3360 = vmatpush.bf16.msra.mxu0 %v3285
        %3361 = vmatpush.bf16.msra.mxu0 %v3281
        %3362 = vmatpush.bf16.msra.mxu0 %v3277
        %3363 = vmatpush.bf16.msra.mxu0 %v3273
        %3364 = vmatpush.bf16.msra.mxu0 %v3269
        %3365 = vmatmul.bf16.gmra.mxu0 %v2614
        %v3366 = vpop.f32.mrf.mxu0
        %v3367 = vadd.f32 %v3165, %v3366
        %v3368 = vpop.f32.mrf.mxu0
        %3369 = vdwg.mxu0
        %3370 = vmatpush.bf16.msra.mxu0 %v3298
        %3371 = vmatpush.bf16.msra.mxu0 %v3294
        %3372 = vmatpush.bf16.msra.mxu0 %v3290
        %3373 = vmatpush.bf16.msra.mxu0 %v3286
        %3374 = vmatpush.bf16.msra.mxu0 %v3282
        %3375 = vmatpush.bf16.msra.mxu0 %v3278
        %3376 = vmatpush.bf16.msra.mxu0 %v3274
        %3377 = vmatpush.bf16.msra.mxu0 %v3270
        %3378 = vmatmul.bf16.gmra.mxu0 %v2614
        %v3379 = vpop.f32.mrf.mxu0
        %v3380 = vadd.f32 %v3166, %v3379
        %v3381 = vpop.f32.mrf.mxu0
        %3382 = vdwg.mxu0
        %v3383 = vpack.c.bf16 %v2829, %v2829
        %v3384 = vpack.c.bf16 %v3085, %v3085
        %3385 = vmatpush.bf16.xpose.msra.mxu0 0
        %3386 = vmatpush.bf16.xpose.msra.mxu0 0
        %3387 = vmatpush.bf16.xpose.msra.mxu0 0
        %3388 = vmatpush.bf16.xpose.msra.mxu0 0
        %3389 = vmatpush.bf16.xpose.msra.mxu0 0
        %3390 = vmatpush.bf16.xpose.msra.mxu0 0
        %3391 = vmatpush.bf16.xpose.msra.mxu0 0
        %3392 = vmatpush.bf16.xpose.msra.mxu0 %v3384
        %3393 = vmatmul.bf16.gmra.mxu0 %v3383
        %v3394 = vpop.f32.mrf.mxu0
        %v3395 = vadd.f32 0.0, %v3394
        %v3396 = vpop.f32.mrf.mxu0
        %3397 = vdwg.mxu0
        %v3398 = vmul.f32 %v3395, 0.35355338
        %v3399 = vadd.f32 %v3398, %v1875
        %v3400 = vsel %vm1878, %v3399, -inf
        %3401 = vmax.xlane.f32.xlu0 %v3400
        %v3402 = vpop.xlane.xlu0 %3401
        %v3403 = vsub.f32 %v3399, %v3402
        %v3404 = vmul.f32 %v3403, 1.442695
        %v3405 = vpow.pop %v3404
        %v3406 = vsel %vm1878, %v3405, 0.0
        %3407 = vadd.xlane.f32.xlu0 %v3406
        %v3408 = vpop.xlane.xlu0 %3407
        %v3409 = vrcp.pop %v3408
        %v3410 = vmul.f32 %v3405, %v3409
        %v3411 = vpack.c.bf16 %v3410, %v3410
        %v3412 = vpack.c.bf16 %v3341, %v3341
        %v3414 = vsel %vm1878, %v3411, 0
        %v3417 = vsel %vm1895, %v3412, 0
        %3419 = vmatpush.bf16.msra.mxu0 0
        %3420 = vmatpush.bf16.msra.mxu0 0
        %3421 = vmatpush.bf16.msra.mxu0 0
        %3422 = vmatpush.bf16.msra.mxu0 0
        %3423 = vmatpush.bf16.msra.mxu0 0
        %3424 = vmatpush.bf16.msra.mxu0 0
        %3425 = vmatpush.bf16.msra.mxu0 0
        %3426 = vmatpush.bf16.msra.mxu0 %v3417
        %3427 = vmatmul.bf16.gmra.mxu0 %v3414
        %v3428 = vpop.f32.mrf.mxu0
        %v3429 = vadd.f32 0.0, %v3428
        %v3430 = vpop.f32.mrf.mxu0
        %3431 = vdwg.mxu0
        %v3432 = vpack.c.bf16 %v2842, %v2842
        %v3433 = vpack.c.bf16 %v3098, %v3098
        %3434 = vmatpush.bf16.xpose.msra.mxu0 0
        %3435 = vmatpush.bf16.xpose.msra.mxu0 0
        %3436 = vmatpush.bf16.xpose.msra.mxu0 0
        %3437 = vmatpush.bf16.xpose.msra.mxu0 0
        %3438 = vmatpush.bf16.xpose.msra.mxu0 0
        %3439 = vmatpush.bf16.xpose.msra.mxu0 0
        %3440 = vmatpush.bf16.xpose.msra.mxu0 0
        %3441 = vmatpush.bf16.xpose.msra.mxu0 %v3433
        %3442 = vmatmul.bf16.gmra.mxu0 %v3432
        %v3443 = vpop.f32.mrf.mxu0
        %v3444 = vadd.f32 0.0, %v3443
        %v3445 = vpop.f32.mrf.mxu0
        %3446 = vdwg.mxu0
        %v3447 = vmul.f32 %v3444, 0.35355338
        %v3448 = vadd.f32 %v3447, %v1875
        %v3449 = vsel %vm1878, %v3448, -inf
        %3450 = vmax.xlane.f32.xlu0 %v3449
        %v3451 = vpop.xlane.xlu0 %3450
        %v3452 = vsub.f32 %v3448, %v3451
        %v3453 = vmul.f32 %v3452, 1.442695
        %v3454 = vpow.pop %v3453
        %v3455 = vsel %vm1878, %v3454, 0.0
        %3456 = vadd.xlane.f32.xlu0 %v3455
        %v3457 = vpop.xlane.xlu0 %3456
        %v3458 = vrcp.pop %v3457
        %v3459 = vmul.f32 %v3454, %v3458
        %v3460 = vpack.c.bf16 %v3459, %v3459
        %v3461 = vpack.c.bf16 %v3354, %v3354
        %v3463 = vsel %vm1878, %v3460, 0
        %v3466 = vsel %vm1895, %v3461, 0
        %3468 = vmatpush.bf16.msra.mxu0 0
        %3469 = vmatpush.bf16.msra.mxu0 0
        %3470 = vmatpush.bf16.msra.mxu0 0
        %3471 = vmatpush.bf16.msra.mxu0 0
        %3472 = vmatpush.bf16.msra.mxu0 0
        %3473 = vmatpush.bf16.msra.mxu0 0
        %3474 = vmatpush.bf16.msra.mxu0 0
        %3475 = vmatpush.bf16.msra.mxu0 %v3466
        %3476 = vmatmul.bf16.gmra.mxu0 %v3463
        %v3477 = vpop.f32.mrf.mxu0
        %v3478 = vadd.f32 0.0, %v3477
        %v3479 = vpop.f32.mrf.mxu0
        %3480 = vdwg.mxu0
        %v3481 = vpack.c.bf16 %v2855, %v2855
        %v3482 = vpack.c.bf16 %v3111, %v3111
        %3483 = vmatpush.bf16.xpose.msra.mxu0 0
        %3484 = vmatpush.bf16.xpose.msra.mxu0 0
        %3485 = vmatpush.bf16.xpose.msra.mxu0 0
        %3486 = vmatpush.bf16.xpose.msra.mxu0 0
        %3487 = vmatpush.bf16.xpose.msra.mxu0 0
        %3488 = vmatpush.bf16.xpose.msra.mxu0 0
        %3489 = vmatpush.bf16.xpose.msra.mxu0 0
        %3490 = vmatpush.bf16.xpose.msra.mxu0 %v3482
        %3491 = vmatmul.bf16.gmra.mxu0 %v3481
        %v3492 = vpop.f32.mrf.mxu0
        %v3493 = vadd.f32 0.0, %v3492
        %v3494 = vpop.f32.mrf.mxu0
        %3495 = vdwg.mxu0
        %v3496 = vmul.f32 %v3493, 0.35355338
        %v3497 = vadd.f32 %v3496, %v1875
        %v3498 = vsel %vm1878, %v3497, -inf
        %3499 = vmax.xlane.f32.xlu0 %v3498
        %v3500 = vpop.xlane.xlu0 %3499
        %v3501 = vsub.f32 %v3497, %v3500
        %v3502 = vmul.f32 %v3501, 1.442695
        %v3503 = vpow.pop %v3502
        %v3504 = vsel %vm1878, %v3503, 0.0
        %3505 = vadd.xlane.f32.xlu0 %v3504
        %v3506 = vpop.xlane.xlu0 %3505
        %v3507 = vrcp.pop %v3506
        %v3508 = vmul.f32 %v3503, %v3507
        %v3509 = vpack.c.bf16 %v3508, %v3508
        %v3510 = vpack.c.bf16 %v3367, %v3367
        %v3512 = vsel %vm1878, %v3509, 0
        %v3515 = vsel %vm1895, %v3510, 0
        %3517 = vmatpush.bf16.msra.mxu0 0
        %3518 = vmatpush.bf16.msra.mxu0 0
        %3519 = vmatpush.bf16.msra.mxu0 0
        %3520 = vmatpush.bf16.msra.mxu0 0
        %3521 = vmatpush.bf16.msra.mxu0 0
        %3522 = vmatpush.bf16.msra.mxu0 0
        %3523 = vmatpush.bf16.msra.mxu0 0
        %3524 = vmatpush.bf16.msra.mxu0 %v3515
        %3525 = vmatmul.bf16.gmra.mxu0 %v3512
        %v3526 = vpop.f32.mrf.mxu0
        %v3527 = vadd.f32 0.0, %v3526
        %v3528 = vpop.f32.mrf.mxu0
        %3529 = vdwg.mxu0
        %v3530 = vpack.c.bf16 %v2868, %v2868
        %v3531 = vpack.c.bf16 %v3124, %v3124
        %3532 = vmatpush.bf16.xpose.msra.mxu0 0
        %3533 = vmatpush.bf16.xpose.msra.mxu0 0
        %3534 = vmatpush.bf16.xpose.msra.mxu0 0
        %3535 = vmatpush.bf16.xpose.msra.mxu0 0
        %3536 = vmatpush.bf16.xpose.msra.mxu0 0
        %3537 = vmatpush.bf16.xpose.msra.mxu0 0
        %3538 = vmatpush.bf16.xpose.msra.mxu0 0
        %3539 = vmatpush.bf16.xpose.msra.mxu0 %v3531
        %3540 = vmatmul.bf16.gmra.mxu0 %v3530
        %v3541 = vpop.f32.mrf.mxu0
        %v3542 = vadd.f32 0.0, %v3541
        %v3543 = vpop.f32.mrf.mxu0
        %3544 = vdwg.mxu0
        %v3545 = vmul.f32 %v3542, 0.35355338
        %v3546 = vadd.f32 %v3545, %v1875
        %v3547 = vsel %vm1878, %v3546, -inf
        %3548 = vmax.xlane.f32.xlu0 %v3547
        %v3549 = vpop.xlane.xlu0 %3548
        %v3550 = vsub.f32 %v3546, %v3549
        %v3551 = vmul.f32 %v3550, 1.442695
        %v3552 = vpow.pop %v3551
        %v3553 = vsel %vm1878, %v3552, 0.0
        %3554 = vadd.xlane.f32.xlu0 %v3553
        %v3555 = vpop.xlane.xlu0 %3554
        %v3556 = vrcp.pop %v3555
        %v3557 = vmul.f32 %v3552, %v3556
        %v3558 = vpack.c.bf16 %v3557, %v3557
        %v3559 = vpack.c.bf16 %v3380, %v3380
        %v3561 = vsel %vm1878, %v3558, 0
        %v3564 = vsel %vm1895, %v3559, 0
        %3566 = vmatpush.bf16.msra.mxu0 0
        %3567 = vmatpush.bf16.msra.mxu0 0
        %3568 = vmatpush.bf16.msra.mxu0 0
        %3569 = vmatpush.bf16.msra.mxu0 0
        %3570 = vmatpush.bf16.msra.mxu0 0
        %3571 = vmatpush.bf16.msra.mxu0 0
        %3572 = vmatpush.bf16.msra.mxu0 0
        %3573 = vmatpush.bf16.msra.mxu0 %v3564
        %3574 = vmatmul.bf16.gmra.mxu0 %v3561
        %v3575 = vpop.f32.mrf.mxu0
        %v3576 = vadd.f32 0.0, %v3575
        %v3577 = vpop.f32.mrf.mxu0
        %3578 = vdwg.mxu0
        %s3579 = scalar_lea.vmem [#allocation17], 256
        %v3580 = vld [vmem:[%s3579] sm:$0xf]
        %v3581 = vld [vmem:[%s3579 + $0x4] sm:$0xf]
        %v3582 = vld [vmem:[%s3579 + $0x8] sm:$0xf]
        %v3583 = vld [vmem:[%s3579 + $0xc] sm:$0xf]
        %v3584 = vld [vmem:[%s3579 + $0x10] sm:$0xf]
        %v3585 = vld [vmem:[%s3579 + $0x14] sm:$0xf]
        %v3586 = vld [vmem:[%s3579 + $0x18] sm:$0xf]
        %v3587 = vld [vmem:[%s3579 + $0x1c] sm:$0xf]
        %v3588 = vld [vmem:[%s3579 + $0x20] sm:$0xf]
        %v3589 = vld [vmem:[%s3579 + $0x24] sm:$0xf]
        %v3590 = vld [vmem:[%s3579 + $0x28] sm:$0xf]
        %v3591 = vld [vmem:[%s3579 + $0x2c] sm:$0xf]
        %v3592 = vld [vmem:[%s3579 + $0x30] sm:$0xf]
        %v3593 = vld [vmem:[%s3579 + $0x34] sm:$0xf]
        %v3594 = vld [vmem:[%s3579 + $0x38] sm:$0xf]
        %v3595 = vld [vmem:[%s3579 + $0x3c] sm:$0xf]
        %v3596 = vld [vmem:[%s3579 + $0x40] sm:$0xf]
        %v3597 = vld [vmem:[%s3579 + $0x44] sm:$0xf]
        %v3598 = vld [vmem:[%s3579 + $0x48] sm:$0xf]
        %v3599 = vld [vmem:[%s3579 + $0x4c] sm:$0xf]
        %v3600 = vld [vmem:[%s3579 + $0x50] sm:$0xf]
        %v3601 = vld [vmem:[%s3579 + $0x54] sm:$0xf]
        %v3602 = vld [vmem:[%s3579 + $0x58] sm:$0xf]
        %v3603 = vld [vmem:[%s3579 + $0x5c] sm:$0xf]
        %v3604 = vld [vmem:[%s3579 + $0x60] sm:$0xf]
        %v3605 = vld [vmem:[%s3579 + $0x64] sm:$0xf]
        %v3606 = vld [vmem:[%s3579 + $0x68] sm:$0xf]
        %v3607 = vld [vmem:[%s3579 + $0x6c] sm:$0xf]
        %v3608 = vld [vmem:[%s3579 + $0x70] sm:$0xf]
        %v3609 = vld [vmem:[%s3579 + $0x74] sm:$0xf]
        %v3610 = vld [vmem:[%s3579 + $0x78] sm:$0xf]
        %v3611 = vld [vmem:[%s3579 + $0x7c] sm:$0xf]
        %v3612 = vld [vmem:[%s3579 + $0x80] sm:$0xf]
        %v3613 = vld [vmem:[%s3579 + $0x84] sm:$0xf]
        %v3614 = vld [vmem:[%s3579 + $0x88] sm:$0xf]
        %v3615 = vld [vmem:[%s3579 + $0x8c] sm:$0xf]
        %v3616 = vld [vmem:[%s3579 + $0x90] sm:$0xf]
        %v3617 = vld [vmem:[%s3579 + $0x94] sm:$0xf]
        %v3618 = vld [vmem:[%s3579 + $0x98] sm:$0xf]
        %v3619 = vld [vmem:[%s3579 + $0x9c] sm:$0xf]
        %v3620 = vld [vmem:[%s3579 + $0xa0] sm:$0xf]
        %v3621 = vld [vmem:[%s3579 + $0xa4] sm:$0xf]
        %v3622 = vld [vmem:[%s3579 + $0xa8] sm:$0xf]
        %v3623 = vld [vmem:[%s3579 + $0xac] sm:$0xf]
        %v3624 = vld [vmem:[%s3579 + $0xb0] sm:$0xf]
        %v3625 = vld [vmem:[%s3579 + $0xb4] sm:$0xf]
        %v3626 = vld [vmem:[%s3579 + $0xb8] sm:$0xf]
        %v3627 = vld [vmem:[%s3579 + $0xbc] sm:$0xf]
        %v3628 = vld [vmem:[%s3579 + $0xc0] sm:$0xf]
        %v3629 = vld [vmem:[%s3579 + $0xc4] sm:$0xf]
        %v3630 = vld [vmem:[%s3579 + $0xc8] sm:$0xf]
        %v3631 = vld [vmem:[%s3579 + $0xcc] sm:$0xf]
        %v3632 = vld [vmem:[%s3579 + $0xd0] sm:$0xf]
        %v3633 = vld [vmem:[%s3579 + $0xd4] sm:$0xf]
        %v3634 = vld [vmem:[%s3579 + $0xd8] sm:$0xf]
        %v3635 = vld [vmem:[%s3579 + $0xdc] sm:$0xf]
        %v3636 = vld [vmem:[%s3579 + $0xe0] sm:$0xf]
        %v3637 = vld [vmem:[%s3579 + $0xe4] sm:$0xf]
        %v3638 = vld [vmem:[%s3579 + $0xe8] sm:$0xf]
        %v3639 = vld [vmem:[%s3579 + $0xec] sm:$0xf]
        %v3640 = vld [vmem:[%s3579 + $0xf0] sm:$0xf]
        %v3641 = vld [vmem:[%s3579 + $0xf4] sm:$0xf]
        %v3642 = vld [vmem:[%s3579 + $0xf8] sm:$0xf]
        %v3643 = vld [vmem:[%s3579 + $0xfc] sm:$0xf]
        %v3644 = vpack.c.bf16 %v3429, %v3429
        %v3645 = vpack.c.bf16 %v3478, %v3478
        %v3646 = vpack.c.bf16 %v3527, %v3527
        %v3647 = vpack.c.bf16 %v3576, %v3576
        %s3648 = scalar_lea.vmem %s11, 1
        %v3649 = vld [vmem:[%s3648] sm:$0x1]
        %v3651 = vperm.slane %v3649, 0
        %v3717 = vunpack.c.l.b16 %v3580
        %v3718 = vunpack.c.l.b16 %v3581
        %v3719 = vunpack.c.l.b16 %v3582
        %v3720 = vunpack.c.l.b16 %v3583
        %v3721 = vunpack.c.l.b16 %v3584
        %v3722 = vunpack.c.l.b16 %v3585
        %v3723 = vunpack.c.l.b16 %v3586
        %v3724 = vunpack.c.l.b16 %v3587
        %v3725 = vunpack.c.l.b16 %v3588
        %v3726 = vunpack.c.l.b16 %v3589
        %v3727 = vunpack.c.l.b16 %v3590
        %v3728 = vunpack.c.l.b16 %v3591
        %v3729 = vunpack.c.l.b16 %v3592
        %v3730 = vunpack.c.l.b16 %v3593
        %v3731 = vunpack.c.l.b16 %v3594
        %v3732 = vunpack.c.l.b16 %v3595
        %v3733 = vunpack.c.l.b16 %v3596
        %v3734 = vunpack.c.l.b16 %v3597
        %v3735 = vunpack.c.l.b16 %v3598
        %v3736 = vunpack.c.l.b16 %v3599
        %v3737 = vunpack.c.l.b16 %v3600
        %v3738 = vunpack.c.l.b16 %v3601
        %v3739 = vunpack.c.l.b16 %v3602
        %v3740 = vunpack.c.l.b16 %v3603
        %v3741 = vunpack.c.l.b16 %v3604
        %v3742 = vunpack.c.l.b16 %v3605
        %v3743 = vunpack.c.l.b16 %v3606
        %v3744 = vunpack.c.l.b16 %v3607
        %v3745 = vunpack.c.l.b16 %v3608
        %v3746 = vunpack.c.l.b16 %v3609
        %v3747 = vunpack.c.l.b16 %v3610
        %v3748 = vunpack.c.l.b16 %v3611
        %v3749 = vunpack.c.l.b16 %v3612
        %v3750 = vunpack.c.l.b16 %v3613
        %v3751 = vunpack.c.l.b16 %v3614
        %v3752 = vunpack.c.l.b16 %v3615
        %v3753 = vunpack.c.l.b16 %v3616
        %v3754 = vunpack.c.l.b16 %v3617
        %v3755 = vunpack.c.l.b16 %v3618
        %v3756 = vunpack.c.l.b16 %v3619
        %v3757 = vunpack.c.l.b16 %v3620
        %v3758 = vunpack.c.l.b16 %v3621
        %v3759 = vunpack.c.l.b16 %v3622
        %v3760 = vunpack.c.l.b16 %v3623
        %v3761 = vunpack.c.l.b16 %v3624
        %v3762 = vunpack.c.l.b16 %v3625
        %v3763 = vunpack.c.l.b16 %v3626
        %v3764 = vunpack.c.l.b16 %v3627
        %v3765 = vunpack.c.l.b16 %v3628
        %v3766 = vunpack.c.l.b16 %v3629
        %v3767 = vunpack.c.l.b16 %v3630
        %v3768 = vunpack.c.l.b16 %v3631
        %v3769 = vunpack.c.l.b16 %v3632
        %v3770 = vunpack.c.l.b16 %v3633
        %v3771 = vunpack.c.l.b16 %v3634
        %v3772 = vunpack.c.l.b16 %v3635
        %v3773 = vunpack.c.l.b16 %v3636
        %v3774 = vunpack.c.l.b16 %v3637
        %v3775 = vunpack.c.l.b16 %v3638
        %v3776 = vunpack.c.l.b16 %v3639
        %v3777 = vunpack.c.l.b16 %v3640
        %v3778 = vunpack.c.l.b16 %v3641
        %v3779 = vunpack.c.l.b16 %v3642
        %v3780 = vunpack.c.l.b16 %v3643
        %v3781 = vpack.c.b16 %v3718, %v3717
        %v3782 = vpack.c.b16 %v3720, %v3719
        %v3783 = vpack.c.b16 %v3722, %v3721
        %v3784 = vpack.c.b16 %v3724, %v3723
        %v3785 = vpack.c.b16 %v3726, %v3725
        %v3786 = vpack.c.b16 %v3728, %v3727
        %v3787 = vpack.c.b16 %v3730, %v3729
        %v3788 = vpack.c.b16 %v3732, %v3731
        %v3789 = vpack.c.b16 %v3734, %v3733
        %v3790 = vpack.c.b16 %v3736, %v3735
        %v3791 = vpack.c.b16 %v3738, %v3737
        %v3792 = vpack.c.b16 %v3740, %v3739
        %v3793 = vpack.c.b16 %v3742, %v3741
        %v3794 = vpack.c.b16 %v3744, %v3743
        %v3795 = vpack.c.b16 %v3746, %v3745
        %v3796 = vpack.c.b16 %v3748, %v3747
        %v3797 = vpack.c.b16 %v3750, %v3749
        %v3798 = vpack.c.b16 %v3752, %v3751
        %v3799 = vpack.c.b16 %v3754, %v3753
        %v3800 = vpack.c.b16 %v3756, %v3755
        %v3801 = vpack.c.b16 %v3758, %v3757
        %v3802 = vpack.c.b16 %v3760, %v3759
        %v3803 = vpack.c.b16 %v3762, %v3761
        %v3804 = vpack.c.b16 %v3764, %v3763
        %v3805 = vpack.c.b16 %v3766, %v3765
        %v3806 = vpack.c.b16 %v3768, %v3767
        %v3807 = vpack.c.b16 %v3770, %v3769
        %v3808 = vpack.c.b16 %v3772, %v3771
        %v3809 = vpack.c.b16 %v3774, %v3773
        %v3810 = vpack.c.b16 %v3776, %v3775
        %v3811 = vpack.c.b16 %v3778, %v3777
        %v3812 = vpack.c.b16 %v3780, %v3779
        %3845 = vmatpush.bf16.msra.mxu0 %v3788
        %3846 = vmatpush.bf16.msra.mxu0 %v3787
        %3847 = vmatpush.bf16.msra.mxu0 %v3786
        %3848 = vmatpush.bf16.msra.mxu0 %v3785
        %3849 = vmatpush.bf16.msra.mxu0 %v3784
        %3850 = vmatpush.bf16.msra.mxu0 %v3783
        %3851 = vmatpush.bf16.msra.mxu0 %v3782
        %3852 = vmatpush.bf16.msra.mxu0 %v3781
        %3853 = vmatmul.bf16.gmra.mxu0 %v3644
        %v3854 = vpop.f32.mrf.mxu0
        %v3855 = vadd.f32 %v3651, %v3854
        %v3856 = vpop.f32.mrf.mxu0
        %3857 = vdwg.mxu0
        %3858 = vmatpush.bf16.msra.mxu0 %v3796
        %3859 = vmatpush.bf16.msra.mxu0 %v3795
        %3860 = vmatpush.bf16.msra.mxu0 %v3794
        %3861 = vmatpush.bf16.msra.mxu0 %v3793
        %3862 = vmatpush.bf16.msra.mxu0 %v3792
        %3863 = vmatpush.bf16.msra.mxu0 %v3791
        %3864 = vmatpush.bf16.msra.mxu0 %v3790
        %3865 = vmatpush.bf16.msra.mxu0 %v3789
        %3866 = vmatmul.bf16.gmra.mxu0 %v3645
        %v3867 = vpop.f32.mrf.mxu0
        %v3868 = vadd.f32 %v3855, %v3867
        %v3869 = vpop.f32.mrf.mxu0
        %3870 = vdwg.mxu0
        %3871 = vmatpush.bf16.msra.mxu0 %v3804
        %3872 = vmatpush.bf16.msra.mxu0 %v3803
        %3873 = vmatpush.bf16.msra.mxu0 %v3802
        %3874 = vmatpush.bf16.msra.mxu0 %v3801
        %3875 = vmatpush.bf16.msra.mxu0 %v3800
        %3876 = vmatpush.bf16.msra.mxu0 %v3799
        %3877 = vmatpush.bf16.msra.mxu0 %v3798
        %3878 = vmatpush.bf16.msra.mxu0 %v3797
        %3879 = vmatmul.bf16.gmra.mxu0 %v3646
        %v3880 = vpop.f32.mrf.mxu0
        %v3881 = vadd.f32 %v3868, %v3880
        %v3882 = vpop.f32.mrf.mxu0
        %3883 = vdwg.mxu0
        %3884 = vmatpush.bf16.msra.mxu0 %v3812
        %3885 = vmatpush.bf16.msra.mxu0 %v3811
        %3886 = vmatpush.bf16.msra.mxu0 %v3810
        %3887 = vmatpush.bf16.msra.mxu0 %v3809
        %3888 = vmatpush.bf16.msra.mxu0 %v3808
        %3889 = vmatpush.bf16.msra.mxu0 %v3807
        %3890 = vmatpush.bf16.msra.mxu0 %v3806
        %3891 = vmatpush.bf16.msra.mxu0 %v3805
        %3892 = vmatmul.bf16.gmra.mxu0 %v3647
        %v3893 = vpop.f32.mrf.mxu0
        %v3894 = vadd.f32 %v3881, %v3893
        %v3895 = vpop.f32.mrf.mxu0
        %3896 = vdwg.mxu0
        %v3897 = vadd.f32 %v3894, %v2613
        %s3898 = scalar_lea.vmem [#allocation22], 1
        %v3899 = vld [vmem:[%s3898] sm:$0x1]
        %s3900 = scalar_lea.vmem %s17, 1
        %v3901 = vld [vmem:[%s3900] sm:$0x1]
        %v3902 = vmul.f32 %v3897, %v1060
        %3903 = vadd.xlane.f32.xlu0 %v3902
        %v3904 = vpop.xlane.xlu0 %3903
        %v3905 = vmul.f32 %v3904, 0.03125
        %v3906 = vsub.f32 %v3897, %v3905
        %v3907 = vmul.f32 %v3906, %v1060
        %v3908 = vmul.f32 %v3907, %v3907
        %3909 = vadd.xlane.f32.xlu0 %v3908
        %v3910 = vpop.xlane.xlu0 %3909
        %v3911 = vmul.f32 %v3910, 0.03125
        %v3912 = vadd.f32 %v3911, 1e-12
        %v3913 = vrsqrt.pop %v3912
        %v3914 = vmul.f32 %v3913, %v3912
        %v3915 = vmul.f32 %v3914, %v3913
        %v3916 = vmul.f32 0.5, %v3915
        %v3917 = vsub.f32 1.5, %v3916
        %v3918 = vmul.f32 %v3913, %v3917
        %vm3919 = vweird.f32 %v3912
        %vm3920 = vweird.f32 %v3913
        %vm3921 = vmor %vm3919, %vm3920
        %v3922 = vsel %vm3921, %v3913, %v3918
        %v3923 = vmul.f32 %v3907, %v3922
        %v3925 = vperm.slane %v3899, 0
        %v3927 = vmul.f32 %v3923, %v3925
        %v3929 = vperm.slane %v3901, 0
        %v3931 = vadd.f32 %v3927, %v3929
        %s3932 = scalar_lea.vmem [#allocation19], 64
        %v3933 = vld [vmem:[%s3932] sm:$0xf]
        %v3934 = vld [vmem:[%s3932 + $0x4] sm:$0xf]
        %v3935 = vld [vmem:[%s3932 + $0x8] sm:$0xf]
        %v3936 = vld [vmem:[%s3932 + $0xc] sm:$0xf]
        %v3937 = vld [vmem:[%s3932 + $0x10] sm:$0xf]
        %v3938 = vld [vmem:[%s3932 + $0x14] sm:$0xf]
        %v3939 = vld [vmem:[%s3932 + $0x18] sm:$0xf]
        %v3940 = vld [vmem:[%s3932 + $0x1c] sm:$0xf]
        %v3941 = vld [vmem:[%s3932 + $0x20] sm:$0xf]
        %v3942 = vld [vmem:[%s3932 + $0x24] sm:$0xf]
        %v3943 = vld [vmem:[%s3932 + $0x28] sm:$0xf]
        %v3944 = vld [vmem:[%s3932 + $0x2c] sm:$0xf]
        %v3945 = vld [vmem:[%s3932 + $0x30] sm:$0xf]
        %v3946 = vld [vmem:[%s3932 + $0x34] sm:$0xf]
        %v3947 = vld [vmem:[%s3932 + $0x38] sm:$0xf]
        %v3948 = vld [vmem:[%s3932 + $0x3c] sm:$0xf]
        %v3949 = vpack.c.bf16 %v3931, %v3931
        %s3950 = scalar_lea.vmem %s13, 1
        %v3951 = vld [vmem:[%s3950] sm:$0x1]
        %v3953 = vperm.slane %v3951, 0
        %v3971 = vunpack.c.l.b16 %v3933
        %v3972 = vunpack.c.l.b16 %v3934
        %v3973 = vunpack.c.l.b16 %v3935
        %v3974 = vunpack.c.l.b16 %v3936
        %v3975 = vunpack.c.l.b16 %v3937
        %v3976 = vunpack.c.l.b16 %v3938
        %v3977 = vunpack.c.l.b16 %v3939
        %v3978 = vunpack.c.l.b16 %v3940
        %v3979 = vunpack.c.l.b16 %v3941
        %v3980 = vunpack.c.l.b16 %v3942
        %v3981 = vunpack.c.l.b16 %v3943
        %v3982 = vunpack.c.l.b16 %v3944
        %v3983 = vunpack.c.l.b16 %v3945
        %v3984 = vunpack.c.l.b16 %v3946
        %v3985 = vunpack.c.l.b16 %v3947
        %v3986 = vunpack.c.l.b16 %v3948
        %v3987 = vpack.c.b16 %v3972, %v3971
        %v3988 = vpack.c.b16 %v3974, %v3973
        %v3989 = vpack.c.b16 %v3976, %v3975
        %v3990 = vpack.c.b16 %v3978, %v3977
        %v3991 = vpack.c.b16 %v3980, %v3979
        %v3992 = vpack.c.b16 %v3982, %v3981
        %v3993 = vpack.c.b16 %v3984, %v3983
        %v3994 = vpack.c.b16 %v3986, %v3985
        %4003 = vmatpush.bf16.msra.mxu0 %v3994
        %4004 = vmatpush.bf16.msra.mxu0 %v3993
        %4005 = vmatpush.bf16.msra.mxu0 %v3992
        %4006 = vmatpush.bf16.msra.mxu0 %v3991
        %4007 = vmatpush.bf16.msra.mxu0 %v3990
        %4008 = vmatpush.bf16.msra.mxu0 %v3989
        %4009 = vmatpush.bf16.msra.mxu0 %v3988
        %4010 = vmatpush.bf16.msra.mxu0 %v3987
        %4011 = vmatmul.bf16.gmra.mxu0 %v3949
        %v4012 = vpop.f32.mrf.mxu0
        %v4013 = vadd.f32 %v3953, %v4012
        %v4014 = vpop.f32.mrf.mxu0
        %4015 = vdwg.mxu0
        %v4016 = vmul.f32 %v4013, 0.5
        %v4017 = vmul.f32 %v4013, 0.044715
        %v4018 = vmul.f32 %v4017, %v4013
        %v4019 = vmul.f32 %v4018, %v4013
        %v4020 = vadd.f32 %v4013, %v4019
        %v4021 = vmul.f32 %v4020, 0.7978846
        %v4022 = vtanh.pop %v4021
        %v4023 = vadd.f32 %v4022, 1.0
        %v4024 = vmul.f32 %v4016, %v4023
        %s4025 = scalar_lea.vmem [#allocation20], 64
        %v4026 = vld [vmem:[%s4025] sm:$0xf]
        %v4027 = vld [vmem:[%s4025 + $0x4] sm:$0xf]
        %v4028 = vld [vmem:[%s4025 + $0x8] sm:$0xf]
        %v4029 = vld [vmem:[%s4025 + $0xc] sm:$0xf]
        %v4030 = vld [vmem:[%s4025 + $0x10] sm:$0xf]
        %v4031 = vld [vmem:[%s4025 + $0x14] sm:$0xf]
        %v4032 = vld [vmem:[%s4025 + $0x18] sm:$0xf]
        %v4033 = vld [vmem:[%s4025 + $0x1c] sm:$0xf]
        %v4034 = vld [vmem:[%s4025 + $0x20] sm:$0xf]
        %v4035 = vld [vmem:[%s4025 + $0x24] sm:$0xf]
        %v4036 = vld [vmem:[%s4025 + $0x28] sm:$0xf]
        %v4037 = vld [vmem:[%s4025 + $0x2c] sm:$0xf]
        %v4038 = vld [vmem:[%s4025 + $0x30] sm:$0xf]
        %v4039 = vld [vmem:[%s4025 + $0x34] sm:$0xf]
        %v4040 = vld [vmem:[%s4025 + $0x38] sm:$0xf]
        %v4041 = vld [vmem:[%s4025 + $0x3c] sm:$0xf]
        %v4042 = vpack.c.bf16 %v4024, %v4024
        %s4043 = scalar_lea.vmem %s15, 1
        %v4044 = vld [vmem:[%s4043] sm:$0x1]
        %v4046 = vperm.slane %v4044, 0
        %v4064 = vunpack.c.l.b16 %v4026
        %v4065 = vunpack.c.l.b16 %v4027
        %v4066 = vunpack.c.l.b16 %v4028
        %v4067 = vunpack.c.l.b16 %v4029
        %v4068 = vunpack.c.l.b16 %v4030
        %v4069 = vunpack.c.l.b16 %v4031
        %v4070 = vunpack.c.l.b16 %v4032
        %v4071 = vunpack.c.l.b16 %v4033
        %v4072 = vunpack.c.l.b16 %v4034
        %v4073 = vunpack.c.l.b16 %v4035
        %v4074 = vunpack.c.l.b16 %v4036
        %v4075 = vunpack.c.l.b16 %v4037
        %v4076 = vunpack.c.l.b16 %v4038
        %v4077 = vunpack.c.l.b16 %v4039
        %v4078 = vunpack.c.l.b16 %v4040
        %v4079 = vunpack.c.l.b16 %v4041
        %v4080 = vpack.c.b16 %v4065, %v4064
        %v4081 = vpack.c.b16 %v4067, %v4066
        %v4082 = vpack.c.b16 %v4069, %v4068
        %v4083 = vpack.c.b16 %v4071, %v4070
        %v4084 = vpack.c.b16 %v4073, %v4072
        %v4085 = vpack.c.b16 %v4075, %v4074
        %v4086 = vpack.c.b16 %v4077, %v4076
        %v4087 = vpack.c.b16 %v4079, %v4078
        %4096 = vmatpush.bf16.msra.mxu0 %v4087
        %4097 = vmatpush.bf16.msra.mxu0 %v4086
        %4098 = vmatpush.bf16.msra.mxu0 %v4085
        %4099 = vmatpush.bf16.msra.mxu0 %v4084
        %4100 = vmatpush.bf16.msra.mxu0 %v4083
        %4101 = vmatpush.bf16.msra.mxu0 %v4082
        %4102 = vmatpush.bf16.msra.mxu0 %v4081
        %4103 = vmatpush.bf16.msra.mxu0 %v4080
        %4104 = vmatmul.bf16.gmra.mxu0 %v4042
        %v4105 = vpop.f32.mrf.mxu0
        %v4106 = vadd.f32 %v4046, %v4105
        %v4107 = vpop.f32.mrf.mxu0
        %4108 = vdwg.mxu0
        %v4109 = vadd.f32 %v4106, %v3931
        %s4110 = scalar_lea.vmem [#allocation23], 1
        %v4111 = vld [vmem:[%s4110] sm:$0x1]
        %s4112 = scalar_lea.vmem %s19, 1
        %v4113 = vld [vmem:[%s4112] sm:$0x1]
        %v4114 = vmul.f32 %v4109, %v1060
        %4115 = vadd.xlane.f32.xlu0 %v4114
        %v4116 = vpop.xlane.xlu0 %4115
        %v4117 = vmul.f32 %v4116, 0.03125
        %v4118 = vsub.f32 %v4109, %v4117
        %v4119 = vmul.f32 %v4118, %v1060
        %v4120 = vmul.f32 %v4119, %v4119
        %4121 = vadd.xlane.f32.xlu0 %v4120
        %v4122 = vpop.xlane.xlu0 %4121
        %v4123 = vmul.f32 %v4122, 0.03125
        %v4124 = vadd.f32 %v4123, 1e-12
        %v4125 = vrsqrt.pop %v4124
        %v4126 = vmul.f32 %v4125, %v4124
        %v4127 = vmul.f32 %v4126, %v4125
        %v4128 = vmul.f32 0.5, %v4127
        %v4129 = vsub.f32 1.5, %v4128
        %v4130 = vmul.f32 %v4125, %v4129
        %vm4131 = vweird.f32 %v4124
        %vm4132 = vweird.f32 %v4125
        %vm4133 = vmor %vm4131, %vm4132
        %v4134 = vsel %vm4133, %v4125, %v4130
        %v4135 = vmul.f32 %v4119, %v4134
        %v4137 = vperm.slane %v4111, 0
        %v4139 = vmul.f32 %v4135, %v4137
        %v4141 = vperm.slane %v4113, 0
        %v4143 = vadd.f32 %v4139, %v4141
        %4144 = vst [vmem:[%s1047] sm:$0xff] %v4143
        %v4145 = vld [vmem:[#allocation25] sm:$0xf]
        %v4146 = vld [vmem:[#allocation25 + $0x4] sm:$0xf]
        %v4147 = vld [vmem:[#allocation25 + $0x8] sm:$0xf]
        %v4148 = vld [vmem:[#allocation25 + $0xc] sm:$0xf]
        %v4149 = vld [vmem:[#allocation25 + $0x10] sm:$0xf]
        %v4150 = vld [vmem:[#allocation25 + $0x14] sm:$0xf]
        %v4151 = vld [vmem:[#allocation25 + $0x18] sm:$0xf]
        %v4152 = vld [vmem:[#allocation25 + $0x1c] sm:$0xf]
        %v4153 = vld [vmem:[#allocation25 + $0x20] sm:$0xf]
        %v4154 = vld [vmem:[#allocation25 + $0x24] sm:$0xf]
        %v4155 = vld [vmem:[#allocation25 + $0x28] sm:$0xf]
        %v4156 = vld [vmem:[#allocation25 + $0x2c] sm:$0xf]
        %v4157 = vld [vmem:[#allocation25 + $0x30] sm:$0xf]
        %v4158 = vld [vmem:[#allocation25 + $0x34] sm:$0xf]
        %v4159 = vld [vmem:[#allocation25 + $0x38] sm:$0xf]
        %v4160 = vld [vmem:[#allocation25 + $0x3c] sm:$0xf]
        %v4161 = vpack.c.bf16 %v4143, %v4143
        %v4162 = vld [vmem:[%s21] sm:$0x1]
        %v4164 = vperm.slane %v4162, 0
        %v4182 = vunpack.c.l.b16 %v4145
        %v4183 = vunpack.c.l.b16 %v4146
        %v4184 = vunpack.c.l.b16 %v4147
        %v4185 = vunpack.c.l.b16 %v4148
        %v4186 = vunpack.c.l.b16 %v4149
        %v4187 = vunpack.c.l.b16 %v4150
        %v4188 = vunpack.c.l.b16 %v4151
        %v4189 = vunpack.c.l.b16 %v4152
        %v4190 = vunpack.c.l.b16 %v4153
        %v4191 = vunpack.c.l.b16 %v4154
        %v4192 = vunpack.c.l.b16 %v4155
        %v4193 = vunpack.c.l.b16 %v4156
        %v4194 = vunpack.c.l.b16 %v4157
        %v4195 = vunpack.c.l.b16 %v4158
        %v4196 = vunpack.c.l.b16 %v4159
        %v4197 = vunpack.c.l.b16 %v4160
        %v4198 = vpack.c.b16 %v4183, %v4182
        %v4199 = vpack.c.b16 %v4185, %v4184
        %v4200 = vpack.c.b16 %v4187, %v4186
        %v4201 = vpack.c.b16 %v4189, %v4188
        %v4202 = vpack.c.b16 %v4191, %v4190
        %v4203 = vpack.c.b16 %v4193, %v4192
        %v4204 = vpack.c.b16 %v4195, %v4194
        %v4205 = vpack.c.b16 %v4197, %v4196
        %4214 = vmatpush.bf16.msra.mxu0 %v4205
        %4215 = vmatpush.bf16.msra.mxu0 %v4204
        %4216 = vmatpush.bf16.msra.mxu0 %v4203
        %4217 = vmatpush.bf16.msra.mxu0 %v4202
        %4218 = vmatpush.bf16.msra.mxu0 %v4201
        %4219 = vmatpush.bf16.msra.mxu0 %v4200
        %4220 = vmatpush.bf16.msra.mxu0 %v4199
        %4221 = vmatpush.bf16.msra.mxu0 %v4198
        %4222 = vmatmul.bf16.gmra.mxu0 %v4161
        %v4223 = vpop.f32.mrf.mxu0
        %v4224 = vadd.f32 %v4164, %v4223
        %v4225 = vpop.f32.mrf.mxu0
        %4226 = vdwg.mxu0
        %v4227 = vtanh.pop %v4224
        %v4228 = vld [vmem:[#allocation26] sm:$0xf]
        %v4229 = vld [vmem:[#allocation26 + $0x4] sm:$0xf]
        %v4230 = vld [vmem:[#allocation26 + $0x8] sm:$0xf]
        %v4231 = vld [vmem:[#allocation26 + $0xc] sm:$0xf]
        %v4232 = vld [vmem:[#allocation26 + $0x10] sm:$0xf]
        %v4233 = vld [vmem:[#allocation26 + $0x14] sm:$0xf]
        %v4234 = vld [vmem:[#allocation26 + $0x18] sm:$0xf]
        %v4235 = vld [vmem:[#allocation26 + $0x1c] sm:$0xf]
        %v4236 = vld [vmem:[#allocation26 + $0x20] sm:$0xf]
        %v4237 = vld [vmem:[#allocation26 + $0x24] sm:$0xf]
        %v4238 = vld [vmem:[#allocation26 + $0x28] sm:$0xf]
        %v4239 = vld [vmem:[#allocation26 + $0x2c] sm:$0xf]
        %v4240 = vld [vmem:[#allocation26 + $0x30] sm:$0xf]
        %v4241 = vld [vmem:[#allocation26 + $0x34] sm:$0xf]
        %v4242 = vld [vmem:[#allocation26 + $0x38] sm:$0xf]
        %v4243 = vld [vmem:[#allocation26 + $0x3c] sm:$0xf]
        %v4244 = vpack.c.bf16 %v4227, %v4227
        %v4245 = vld [vmem:[%s23] sm:$0x1]
        %v4247 = vperm.slane %v4245, 0
        %v4265 = vunpack.c.l.b16 %v4228
        %v4266 = vunpack.c.l.b16 %v4229
        %v4267 = vunpack.c.l.b16 %v4230
        %v4268 = vunpack.c.l.b16 %v4231
        %v4269 = vunpack.c.l.b16 %v4232
        %v4270 = vunpack.c.l.b16 %v4233
        %v4271 = vunpack.c.l.b16 %v4234
        %v4272 = vunpack.c.l.b16 %v4235
        %v4273 = vunpack.c.l.b16 %v4236
        %v4274 = vunpack.c.l.b16 %v4237
        %v4275 = vunpack.c.l.b16 %v4238
        %v4276 = vunpack.c.l.b16 %v4239
        %v4277 = vunpack.c.l.b16 %v4240
        %v4278 = vunpack.c.l.b16 %v4241
        %v4279 = vunpack.c.l.b16 %v4242
        %v4280 = vunpack.c.l.b16 %v4243
        %v4281 = vpack.c.b16 %v4266, %v4265
        %v4282 = vpack.c.b16 %v4268, %v4267
        %v4283 = vpack.c.b16 %v4270, %v4269
        %v4284 = vpack.c.b16 %v4272, %v4271
        %v4285 = vpack.c.b16 %v4274, %v4273
        %v4286 = vpack.c.b16 %v4276, %v4275
        %v4287 = vpack.c.b16 %v4278, %v4277
        %v4288 = vpack.c.b16 %v4280, %v4279
        %4297 = vmatpush.bf16.msra.mxu0 %v4288
        %4298 = vmatpush.bf16.msra.mxu0 %v4287
        %4299 = vmatpush.bf16.msra.mxu0 %v4286
        %4300 = vmatpush.bf16.msra.mxu0 %v4285
        %4301 = vmatpush.bf16.msra.mxu0 %v4284
        %4302 = vmatpush.bf16.msra.mxu0 %v4283
        %4303 = vmatpush.bf16.msra.mxu0 %v4282
        %4304 = vmatpush.bf16.msra.mxu0 %v4281
        %4305 = vmatmul.bf16.gmra.mxu0 %v4244
        %v4306 = vpop.f32.mrf.mxu0
        %v4307 = vadd.f32 %v4247, %v4306
        %v4308 = vpop.f32.mrf.mxu0
        %4309 = vdwg.mxu0
        %4310 = vst [vmem:[%s1054] sm:$0xff] %v4307
        %s4311 = sand.u32 %s578, 1
        %s4312 = scalar_lea.sflag [#allocation4], %s4311
        %s4313 = sand.u32 %s578, 1
        %s4314 = smul.addr %s4313, 8
        %s4315 = scalar_lea.vmem [#allocation28], %s4314
        %s4316 = sand.u32 %s604, 1
        %s4317 = scalar_lea.sflag [#allocation30], %s4316
        %s4318 = sand.u32 %s604, 1
        %s4319 = smul.addr %s4318, 8
        %s4320 = scalar_lea.vmem [#allocation29], %s4319
        // Predicated region
        $region181: #{tpu_custom_call.1} parent=115 // pred_check
          %p4321 = pneg %p588
        $region182: #{tpu_custom_call.1} parent=115 // pred_check_branch
          %4323 = sbr.rel (%p4321) target = $region184
        $region183: #{tpu_custom_call.1} parent=115 // pred_region
          %4325 = vsyncadd %s4312, 0
          %s4326 = smul.addr %s56, 8
          %s4327 = scalar_lea.hbm %s24, %s4326
          %s4329 = sshll.u32 %s4315, 4
          %s4330 = int_to_ptr.vmem [resolvable:$true] %s4329
          %s4331 = sshll.u32 %s4327, 4
          %s4332 = int_to_ptr.hbm [resolvable:$true] %s4331
          %4334 = dma.vmem_to_hbm [thread:$0]  %s4330, 128, %s4332, %s4312
        $region184: #{tpu_custom_call.1} parent=115 // pred_fallthru
          _
        // Predicated region
        $region185: #{tpu_custom_call.1} parent=115 // pred_check
          %p4335 = pneg %p614
        $region186: #{tpu_custom_call.1} parent=115 // pred_check_branch
          %4337 = sbr.rel (%p4335) target = $region188
        $region187: #{tpu_custom_call.1} parent=115 // pred_region
          %4339 = vsyncadd %s4317, 0
          %s4340 = smul.addr %s56, 8
          %s4341 = scalar_lea.hbm %s25, %s4340
          %s4343 = sshll.u32 %s4320, 4
          %s4344 = int_to_ptr.vmem [resolvable:$true] %s4343
          %s4345 = sshll.u32 %s4341, 4
          %s4346 = int_to_ptr.hbm [resolvable:$true] %s4345
          %4348 = dma.vmem_to_hbm [thread:$0]  %s4344, 128, %s4346, %s4317
        $region188: #{tpu_custom_call.1} parent=115 // pred_fallthru
          _
      $region116: #{tpu_custom_call.1} parent=5 // pred_fallthru
        _
      %p4349 = scmp.le.s32.totalorder 2, %s51
      // Predicated region
      $region189: #{tpu_custom_call.1} parent=5 // pred_check
        %p4350 = pneg %p4349
      $region190: #{tpu_custom_call.1} parent=5 // pred_check_branch
        %4352 = sbr.rel (%p4350) target = $region192
      $region191: #{tpu_custom_call.1} parent=5 // pred_region
        %s4353 = ssub.s32 %s51, 2
        // Predicated region
        $region193: #{tpu_custom_call.1} parent=191 // pred_check
          %p4354 = pneg %p594
        $region194: #{tpu_custom_call.1} parent=191 // pred_check_branch
          %4356 = sbr.rel (%p4354) target = $region196
        $region195: #{tpu_custom_call.1} parent=191 // pred_region
          %s4357 = sand.u32 %s579, 1
          %s4358 = scalar_lea.sflag [#allocation4], %s4357
          %s4359 = sand.u32 %s579, 1
          %s4360 = smul.addr %s4359, 8
          %s4361 = scalar_lea.vmem [#allocation28], %s4360
          %4363 = dma.done %s4358, 128
        $region196: #{tpu_custom_call.1} parent=191 // pred_fallthru
          _
        // Predicated region
        $region197: #{tpu_custom_call.1} parent=191 // pred_check
          %p4364 = pneg %p620
        $region198: #{tpu_custom_call.1} parent=191 // pred_check_branch
          %4366 = sbr.rel (%p4364) target = $region200
        $region199: #{tpu_custom_call.1} parent=191 // pred_region
          %s4367 = sand.u32 %s605, 1
          %s4368 = scalar_lea.sflag [#allocation30], %s4367
          %s4369 = sand.u32 %s605, 1
          %s4370 = smul.addr %s4369, 8
          %s4371 = scalar_lea.vmem [#allocation29], %s4370
          %4373 = dma.done %s4368, 128
        $region200: #{tpu_custom_call.1} parent=191 // pred_fallthru
          _
      $region192: #{tpu_custom_call.1} parent=5 // pred_fallthru
        _
    $region6: #{tpu_custom_call.1} parent=1 // loop_footer
      %s55 = sadd.s32 1, %s51
    $region7: #{tpu_custom_call.1} parent=1 // loop_footer_branch
      %50 = sbr.rel target = $region3
    $region8: #{tpu_custom_call.1} parent=1 // loop_exit
      _
    %4374 = vsyncpa [#allocation3], 1
    %s4375 = scalar_lea.sflag [#allocation3], 1
    %4376 = vsyncpa %s4375, 1
    %4377 = vsyncpa [#allocation6], 1
    %s4378 = scalar_lea.sflag [#allocation6], 1
    %4379 = vsyncpa %s4378, 1
    %4380 = vsyncpa [#allocation9], 1
    %4381 = vsyncpa [#allocation12], 1
    %4382 = vsyncpa [#allocation15], 1
    %4383 = vsyncpa [#allocation18], 1
    %4384 = vsyncpa [#allocation21], 1
    %4385 = vsyncpa [#allocation24], 1
    %4386 = vsyncpa [#allocation27], 1
    %4387 = vsyncpa [#allocation4], 1
    %s4388 = scalar_lea.sflag [#allocation4], 1
    %4389 = vsyncpa %s4388, 1
    %4390 = vsyncpa [#allocation30], 1
    %s4391 = scalar_lea.sflag [#allocation30], 1
    %4392 = vsyncpa %s4391, 1

</llo_original>
